<compile_context>
chip_gen: v7x
topology: tpu7x:2x2x1
jax: 0.10.0
libtpu: 0.0.40
codegen_flags: <defaults>
</compile_context>

<pallas_src>
import functools

import jax
import jax.numpy as jnp
from jax.experimental import pallas as pl
from jax.experimental.pallas import tpu as pltpu


OUT_PAD = 128                      # lane-dense padding of the 1-wide output
VMEM_LIMIT_BYTES = 32 * 1024 * 1024  # fits v7x (64 MiB phys) and v5e/v6e


def _round_up(x, m):
    return (x + m - 1) // m * m


def _pad2d(x, rows, cols):
    return jnp.pad(x, ((0, rows - x.shape[0]), (0, cols - x.shape[1])))


# ----------------------------- Pallas kernels ------------------------------

def xw_kernel(x_ref, w_ref, o_ref):
    # Hoisted X @ W (bf16 MXU inputs, f32 accumulation), tiled over rows.
    o_ref[...] = jnp.dot(
        x_ref[...], w_ref[...], preferred_element_type=jnp.float32
    ).astype(o_ref.dtype)


def agg_kernel(a_ref, xw_ref, b_ref, o_ref, acc_ref, *, apply_relu):
    # out[row_tile] = sum_k A_hat[row_tile, k_tile] @ XW[k_tile, :]  (+b, ReLU)
    k = pl.program_id(1)

    @pl.when(k == 0)
    def _():
        acc_ref[...] = jnp.zeros_like(acc_ref)

    acc_ref[...] += jnp.dot(
        a_ref[...], xw_ref[...], preferred_element_type=jnp.float32
    )

    @pl.when(k == pl.num_programs(1) - 1)
    def _():
        h = acc_ref[...] + b_ref[...]
        if apply_relu:
            h = jnp.maximum(h, 0.0)
        o_ref[...] = h.astype(o_ref.dtype)


def tail_kernel(sel_ref, h_ref, ea_ref, we_ref, be_ref,
                wln_ref, wle_ref, bl_ref, o_ref):
    # Fused tail: gather source-node embeddings via one-hot selection matmul,
    # edge MLP, and the concat-linear as a split matmul with lane-dense out.
    x_src = jnp.dot(sel_ref[...], h_ref[...],
                    preferred_element_type=jnp.float32)      # exact bf16 gather
    node_part = jnp.dot(x_src.astype(jnp.bfloat16), wln_ref[...],
                        preferred_element_type=jnp.float32)
    ef = jnp.dot(ea_ref[...], we_ref[...],
                 preferred_element_type=jnp.float32) + be_ref[...]
    edge_part = jnp.dot(ef.astype(jnp.bfloat16), wle_ref[...],
                        preferred_element_type=jnp.float32)
    o_ref[...] = (node_part + edge_part + bl_ref[...]).astype(o_ref.dtype)


# ------------------------------ pallas_call wrappers ------------------------

def xw_matmul(x, w, *, tile_m):
    m, k = x.shape
    h = w.shape[1]
    return pl.pallas_call(
        xw_kernel,
        out_shape=jax.ShapeDtypeStruct((m, h), jnp.bfloat16),
        grid_spec=pltpu.PrefetchScalarGridSpec(
            num_scalar_prefetch=0,
            grid=(m // tile_m,),
            in_specs=[pl.BlockSpec((tile_m, k), lambda i: (i, 0)),
                      pl.BlockSpec((k, h), lambda i: (0, 0))],
            out_specs=pl.BlockSpec((tile_m, h), lambda i: (i, 0)),
        ),
        compiler_params=pltpu.CompilerParams(
            dimension_semantics=("parallel",),
            vmem_limit_bytes=VMEM_LIMIT_BYTES),
        cost_estimate=pl.CostEstimate(
            flops=2 * m * k * h, transcendentals=0,
            bytes_accessed=2 * (m * k + k * h + m * h)),
    )(x, w)


def gcn_aggregate(a_hat, xw, b, *, tile_m, tile_k, apply_relu):
    n = a_hat.shape[0]
    h = xw.shape[1]
    return pl.pallas_call(
        functools.partial(agg_kernel, apply_relu=apply_relu),
        out_shape=jax.ShapeDtypeStruct((n, h), jnp.bfloat16),
        grid_spec=pltpu.PrefetchScalarGridSpec(
            num_scalar_prefetch=0,
            grid=(n // tile_m, n // tile_k),
            in_specs=[pl.BlockSpec((tile_m, tile_k), lambda i, k: (i, k)),
                      pl.BlockSpec((tile_k, h), lambda i, k: (k, 0)),
                      pl.BlockSpec((1, h), lambda i, k: (0, 0))],
            out_specs=pl.BlockSpec((tile_m, h), lambda i, k: (i, 0)),
            scratch_shapes=[pltpu.VMEM((tile_m, h), jnp.float32)],
        ),
        compiler_params=pltpu.CompilerParams(
            dimension_semantics=("parallel", "arbitrary"),
            vmem_limit_bytes=VMEM_LIMIT_BYTES),
        cost_estimate=pl.CostEstimate(
            flops=2 * n * n * h, transcendentals=0,
            bytes_accessed=2 * n * n + 2 * n * h + 4 * h + 2 * n * h),
    )(a_hat, xw, b)


def fused_tail(sel, h, edge_attr, we, be, wln, wle, bl, *, tile_e):
    e_pad, n_pad = sel.shape
    hp = h.shape[1]
    fep = edge_attr.shape[1]
    # TODO(synk): for very large graphs the (tile_e, N) selection block and the
    # full (N, H) h block should get their own K-tiling / DMA-gather.
    return pl.pallas_call(
        tail_kernel,
        out_shape=jax.ShapeDtypeStruct((e_pad, OUT_PAD), jnp.float32),
        grid_spec=pltpu.PrefetchScalarGridSpec(
            num_scalar_prefetch=0,
            grid=(e_pad // tile_e,),
            in_specs=[pl.BlockSpec((tile_e, n_pad), lambda e: (e, 0)),
                      pl.BlockSpec((n_pad, hp), lambda e: (0, 0)),
                      pl.BlockSpec((tile_e, fep), lambda e: (e, 0)),
                      pl.BlockSpec((fep, hp), lambda e: (0, 0)),
                      pl.BlockSpec((1, hp), lambda e: (0, 0)),
                      pl.BlockSpec((hp, OUT_PAD), lambda e: (0, 0)),
                      pl.BlockSpec((hp, OUT_PAD), lambda e: (0, 0)),
                      pl.BlockSpec((1, OUT_PAD), lambda e: (0, 0))],
            out_specs=pl.BlockSpec((tile_e, OUT_PAD), lambda e: (e, 0)),
        ),
        compiler_params=pltpu.CompilerParams(
            dimension_semantics=("parallel",),
            vmem_limit_bytes=VMEM_LIMIT_BYTES),
        cost_estimate=pl.CostEstimate(
            flops=2 * e_pad * (n_pad * hp + fep * hp + 2 * hp * OUT_PAD),
            transcendentals=0,
            bytes_accessed=2 * (e_pad * n_pad + n_pad * hp + e_pad * fep
                                + fep * hp + 2 * hp * OUT_PAD)
                           + 4 * e_pad * OUT_PAD),
    )(sel, h, edge_attr, we, be, wln, wle, bl)


# ------------------------------ Glue (JAX) ---------------------------------

def build_normalized_adj(edge_index, num_nodes):
    """Dense D^-1/2 (A + I) D^-1/2 with PyG GCNConv conventions."""
    self_loops = jnp.stack([jnp.arange(num_nodes), jnp.arange(num_nodes)])
    ei = jnp.concatenate([edge_index, self_loops], axis=1)
    row, col = ei[0], ei[1]
    deg = jnp.zeros((num_nodes,), jnp.float32).at[col].add(1.0)
    dinv = jnp.where(deg > 0, 1.0 / jnp.sqrt(deg), 0.0)
    norm = dinv[row] * dinv[col]
    a_hat = jnp.zeros((num_nodes, num_nodes), jnp.float32).at[col, row].add(norm)
    return a_hat


def custom_gcn_forward(params, x, edge_index, edge_attr, *,
                       tile_nodes=128, tile_edges=128):
    # NOTE: on v6e/v5e (128 MiB VMEM) larger tiles (512-1024) amortize the
    # per-grid-step overhead better; on v7x (64 MiB) keep ~half the footprint.
    n, f = x.shape
    e, fe = edge_attr.shape
    hidden = params["w1"].shape[1]

    n_pad = _round_up(max(n, tile_nodes), tile_nodes)
    e_pad = _round_up(max(e, tile_edges), tile_edges)
    fp = _round_up(f, 128)
    fep = _round_up(fe, 128)
    hp = _round_up(hidden, 128)

    # Dense normalized adjacency (JAX glue), zero-padded; bf16 for the MXU.
    a_hat = _pad2d(build_normalized_adj(edge_index, n), n_pad, n_pad)
    a_hat = a_hat.astype(jnp.bfloat16)

    x_p = _pad2d(x, n_pad, fp).astype(jnp.bfloat16)
    ea_p = _pad2d(edge_attr, e_pad, fep).astype(jnp.bfloat16)

    w1 = _pad2d(params["w1"], fp, hp).astype(jnp.bfloat16)
    w2 = _pad2d(params["w2"], hp, hp).astype(jnp.bfloat16)
    we = _pad2d(params["we"], fep, hp).astype(jnp.bfloat16)
    b1 = _pad2d(params["b1"], 1, hp).astype(jnp.float32)
    b2 = _pad2d(params["b2"], 1, hp).astype(jnp.float32)
    be = _pad2d(params["be"], 1, hp).astype(jnp.float32)

    # Split the concat-linear: wl[:H] hits gathered node features, wl[H:] hits
    # the edge-MLP output; output dim padded to a lane-dense 128.
    wln = _pad2d(params["wl"][:hidden], hp, OUT_PAD).astype(jnp.bfloat16)
    wle = _pad2d(params["wl"][hidden:], hp, OUT_PAD).astype(jnp.bfloat16)
    bl = _pad2d(params["bl"], 1, OUT_PAD).astype(jnp.float32)

    # One-hot selection matrix for the per-edge source-node gather.
    src = jnp.pad(edge_index[0], (0, e_pad - e))
    sel = jax.nn.one_hot(src, n_pad, dtype=jnp.bfloat16)

    tm = min(tile_nodes, n_pad)
    tk = min(tile_nodes, n_pad)
    te = min(tile_edges, e_pad)

    # conv1: hoisted X@W, then tiled A_hat aggregation (+bias, ReLU fused)
    xw1 = xw_matmul(x_p, w1, tile_m=tm)
    h1 = gcn_aggregate(a_hat, xw1, b1, tile_m=tm, tile_k=tk, apply_relu=True)
    # F.dropout(p=0.5): eval-mode semantics (identity).
    # TODO(synk): training-mode dropout RNG (torch) not reproduced.
    xw2 = xw_matmul(h1, w2, tile_m=tm)
    h2 = gcn_aggregate(a_hat, xw2, b2, tile_m=tm, tile_k=tk, apply_relu=False)

    # Fused tail: gather + edge MLP + split concat-linear, lane-dense output.
    out_pad = fused_tail(sel, h2, ea_p, we, be, wln, wle, bl, tile_e=te)
    return out_pad[:e, :1]


def reference_forward(params, x, edge_index, edge_attr):
    """Pure-JAX reference emulating the kernel's bf16-input / f32-acc dots."""
    n = x.shape[0]
    hidden = params["w1"].shape[1]
    bf = jnp.bfloat16

    def mm(a, b):
        return jnp.dot(a.astype(bf), b.astype(bf),
                       preferred_element_type=jnp.float32)

    a_hat = build_normalized_adj(edge_index, n).astype(bf)
    xw1 = mm(x, params["w1"]).astype(bf)
    h1 = jnp.maximum(mm(a_hat, xw1) + params["b1"], 0.0).astype(bf)
    xw2 = mm(h1, params["w2"]).astype(bf)
    h2 = (mm(a_hat, xw2) + params["b2"]).astype(bf)

    ef = (mm(edge_attr, params["we"]) + params["be"]).astype(bf)
    x_src = jnp.take(h2, edge_index[0], axis=0)
    node_part = mm(x_src, params["wl"][:hidden])
    edge_part = mm(ef, params["wl"][hidden:])
    return node_part + edge_part + params["bl"]


# --------------------------------- Main -------------------------------------

if __name__ == "__main__":
    num_nodes = 200          # pads to 256 -> 2x2 aggregation grid (128 tiles)
    num_edges = 400          # pads to 512 -> 4 edge tiles in the fused tail
    num_node_features = 8
    num_edge_features = 4
    hidden = 32

    key = jax.random.PRNGKey(0)
    keys = jax.random.split(key, 12)

    x = jax.random.normal(keys[0], (num_nodes, num_node_features), jnp.float32)
    edge_index = jax.random.randint(keys[1], (2, num_edges), 0, num_nodes)
    edge_attr = jax.random.normal(keys[2], (num_edges, num_edge_features),
                                  jnp.float32)

    params = {
        "w1": 0.1 * jax.random.normal(keys[3], (num_node_features, hidden)),
        "b1": 0.1 * jax.random.normal(keys[4], (1, hidden)),
        "w2": 0.1 * jax.random.normal(keys[5], (hidden, hidden)),
        "b2": 0.1 * jax.random.normal(keys[6], (1, hidden)),
        "we": 0.1 * jax.random.normal(keys[7], (num_edge_features, hidden)),
        "be": 0.1 * jax.random.normal(keys[8], (1, hidden)),
        "wl": 0.1 * jax.random.normal(keys[9], (2 * hidden, 1)),
        "bl": 0.1 * jax.random.normal(keys[10], (1, 1)),
    }
    params = {k: v.astype(jnp.float32) for k, v in params.items()}

    fwd = jax.jit(custom_gcn_forward)
    out = jax.block_until_ready(fwd(params, x, edge_index, edge_attr))

    ref = reference_forward(params, x, edge_index, edge_attr)
    assert out.shape == (num_edges, 1), out.shape
    max_err = float(jnp.max(jnp.abs(out - ref)))
    assert jnp.allclose(out, ref, atol=2e-3, rtol=2e-3), \
        f"mismatch vs reference (max err {max_err})"

    print("KERNEL_OK")
</pallas_src>

<mosaic_0001>
module attributes {stable_mosaic.version = 11 : i64} {
  func.func @xw_kernel(%arg0: i32, %arg1: memref<128x128xbf16, #tpu.memory_space<vmem>>, %arg2: memref<128x128xbf16, #tpu.memory_space<vmem>>, %arg3: memref<128x128xbf16, #tpu.memory_space<vmem>>) attributes {dimension_semantics = [#tpu.dimension_semantics<parallel>], iteration_bounds = array<i64: 2>, scalar_prefetch = 0 : i64, scratch_operands = 0 : i64, tpu.core_type = #tpu.core_type<tc>, window_params = [{transform_indices = @transform_0, window_bounds = array<i64: 128, 128>}, {pipeline_mode = #tpu.pipeline_mode<synchronous>, transform_indices = @transform_1, window_bounds = array<i64: 128, 128>}, {transform_indices = @transform_2, window_bounds = array<i64: 128, 128>}]} {
    %c0 = arith.constant 0 : index
    %c0_0 = arith.constant 0 : index
    %0 = vector.load %arg1[%c0, %c0_0] : memref<128x128xbf16, #tpu.memory_space<vmem>>, vector<128x128xbf16>
    %c0_1 = arith.constant 0 : index
    %c0_2 = arith.constant 0 : index
    %1 = vector.load %arg2[%c0_1, %c0_2] : memref<128x128xbf16, #tpu.memory_space<vmem>>, vector<128x128xbf16>
    %cst = arith.constant dense<0.000000e+00> : vector<128x128xf32>
    %2 = tpu.matmul %0, %1, %cst {dimension_numbers = #tpu.dot_dimension_numbers<[1], [0], [0], [1], [0, 0, 1, 1], [], []>} : vector<128x128xbf16>, vector<128x128xbf16>, vector<128x128xf32> -> vector<128x128xf32>
    %3 = arith.truncf %2 : vector<128x128xf32> to vector<128x128xbf16>
    %c0_3 = arith.constant 0 : index
    %c0_4 = arith.constant 0 : index
    %4 = vector.load %arg3[%c0_3, %c0_4] : memref<128x128xbf16, #tpu.memory_space<vmem>>, vector<128x128xbf16>
    tpu.vector_store %arg3[%c0_3, %c0_4], %3 {strides = array<i32>} : memref<128x128xbf16, #tpu.memory_space<vmem>>, vector<128x128xbf16>,
    return
  }
  func.func @transform_0(%arg0: i32) -> (i32, i32) {
    %c0_i32 = arith.constant 0 : i32
    %c0_i32_0 = arith.constant 0 : i32
    return %arg0, %c0_i32 : i32, i32
  }
  func.func @transform_1(%arg0: i32) -> (i32, i32) {
    %c0_i32 = arith.constant 0 : i32
    %c0_i32_0 = arith.constant 0 : i32
    %c0_i32_1 = arith.constant 0 : i32
    return %c0_i32, %c0_i32_0 : i32, i32
  }
  func.func @transform_2(%arg0: i32) -> (i32, i32) {
    %c0_i32 = arith.constant 0 : i32
    %c0_i32_0 = arith.constant 0 : i32
    return %arg0, %c0_i32 : i32, i32
  }
}

module attributes {stable_mosaic.version = 11 : i64} {
  func.func @agg_kernel(%arg0: i32, %arg1: i32, %arg2: memref<128x128xbf16, #tpu.memory_space<vmem>>, %arg3: memref<128x128xbf16, #tpu.memory_space<vmem>>, %arg4: memref<1x128xf32, #tpu.memory_space<vmem>>, %arg5: memref<128x128xbf16, #tpu.memory_space<vmem>>, %arg6: memref<128x128xf32, #tpu.memory_space<vmem>>) attributes {dimension_semantics = [#tpu.dimension_semantics<parallel>, #tpu.dimension_semantics<arbitrary>], iteration_bounds = array<i64: 2, 2>, scalar_prefetch = 0 : i64, scratch_operands = 1 : i64, tpu.core_type = #tpu.core_type<tc>, window_params = [{transform_indices = @transform_0, window_bounds = array<i64: 128, 128>}, {transform_indices = @transform_1, window_bounds = array<i64: 128, 128>}, {pipeline_mode = #tpu.pipeline_mode<synchronous>, transform_indices = @transform_2, window_bounds = array<i64: 1, 128>}, {transform_indices = @transform_3, window_bounds = array<i64: 128, 128>}]} {
    %c0_i32 = arith.constant 0 : i32
    %0 = arith.cmpi eq, %arg1, %c0_i32 : i32
    %1 = arith.extui %0 : i1 to i32
    %c0_i32_0 = arith.constant 0 : i32
    %2 = arith.cmpi ne, %1, %c0_i32_0 : i32
    scf.if %2 {
      %cst_9 = arith.constant 0.000000e+00 : f32
      %12 = vector.broadcast %cst_9 : f32 to vector<128x128xf32>
      %c0_10 = arith.constant 0 : index
      %c0_11 = arith.constant 0 : index
      %13 = vector.load %arg6[%c0_10, %c0_11] : memref<128x128xf32, #tpu.memory_space<vmem>>, vector<128x128xf32>
      tpu.vector_store %arg6[%c0_10, %c0_11], %12 {strides = array<i32>} : memref<128x128xf32, #tpu.memory_space<vmem>>, vector<128x128xf32>,
    } else {
    }
    %c0 = arith.constant 0 : index
    %c0_1 = arith.constant 0 : index
    %3 = vector.load %arg6[%c0, %c0_1] : memref<128x128xf32, #tpu.memory_space<vmem>>, vector<128x128xf32>
    %c0_2 = arith.constant 0 : index
    %c0_3 = arith.constant 0 : index
    %4 = vector.load %arg2[%c0_2, %c0_3] : memref<128x128xbf16, #tpu.memory_space<vmem>>, vector<128x128xbf16>
    %c0_4 = arith.constant 0 : index
    %c0_5 = arith.constant 0 : index
    %5 = vector.load %arg3[%c0_4, %c0_5] : memref<128x128xbf16, #tpu.memory_space<vmem>>, vector<128x128xbf16>
    %cst = arith.constant dense<0.000000e+00> : vector<128x128xf32>
    %6 = tpu.matmul %4, %5, %cst {dimension_numbers = #tpu.dot_dimension_numbers<[1], [0], [0], [1], [0, 0, 1, 1], [], []>} : vector<128x128xbf16>, vector<128x128xbf16>, vector<128x128xf32> -> vector<128x128xf32>
    %7 = arith.addf %3, %6 : vector<128x128xf32>
    %c0_6 = arith.constant 0 : index
    %c0_7 = arith.constant 0 : index
    %8 = vector.load %arg6[%c0_6, %c0_7] : memref<128x128xf32, #tpu.memory_space<vmem>>, vector<128x128xf32>
    tpu.vector_store %arg6[%c0_6, %c0_7], %7 {strides = array<i32>} : memref<128x128xf32, #tpu.memory_space<vmem>>, vector<128x128xf32>,
    %c1_i32 = arith.constant 1 : i32
    %9 = arith.cmpi eq, %arg1, %c1_i32 : i32
    %10 = arith.extui %9 : i1 to i32
    %c0_i32_8 = arith.constant 0 : i32
    %11 = arith.cmpi ne, %10, %c0_i32_8 : i32
    scf.if %11 {
      %c0_9 = arith.constant 0 : index
      %c0_10 = arith.constant 0 : index
      %12 = vector.load %arg6[%c0_9, %c0_10] : memref<128x128xf32, #tpu.memory_space<vmem>>, vector<128x128xf32>
      %c0_11 = arith.constant 0 : index
      %c0_12 = arith.constant 0 : index
      %13 = vector.load %arg4[%c0_11, %c0_12] : memref<1x128xf32, #tpu.memory_space<vmem>>, vector<1x128xf32>
      %14 = vector.broadcast %13 : vector<1x128xf32> to vector<128x128xf32>
      %15 = arith.addf %12, %14 : vector<128x128xf32>
      %cst_13 = arith.constant 0.000000e+00 : f32
      %16 = vector.broadcast %cst_13 : f32 to vector<128x128xf32>
      %17 = arith.maximumf %15, %16 : vector<128x128xf32>
      %18 = arith.truncf %17 : vector<128x128xf32> to vector<128x128xbf16>
      %c0_14 = arith.constant 0 : index
      %c0_15 = arith.constant 0 : index
      %19 = vector.load %arg5[%c0_14, %c0_15] : memref<128x128xbf16, #tpu.memory_space<vmem>>, vector<128x128xbf16>
      tpu.vector_store %arg5[%c0_14, %c0_15], %18 {strides = array<i32>} : memref<128x128xbf16, #tpu.memory_space<vmem>>, vector<128x128xbf16>,
    } else {
    }
    return
  }
  func.func @transform_0(%arg0: i32, %arg1: i32) -> (i32, i32) {
    %c0_i32 = arith.constant 0 : i32
    return %arg0, %arg1 : i32, i32
  }
  func.func @transform_1(%arg0: i32, %arg1: i32) -> (i32, i32) {
    %c0_i32 = arith.constant 0 : i32
    %c0_i32_0 = arith.constant 0 : i32
    return %arg1, %c0_i32 : i32, i32
  }
  func.func @transform_2(%arg0: i32, %arg1: i32) -> (i32, i32) {
    %c0_i32 = arith.constant 0 : i32
    %c0_i32_0 = arith.constant 0 : i32
    %c0_i32_1 = arith.constant 0 : i32
    return %c0_i32, %c0_i32_0 : i32, i32
  }
  func.func @transform_3(%arg0: i32, %arg1: i32) -> (i32, i32) {
    %c0_i32 = arith.constant 0 : i32
    %c0_i32_0 = arith.constant 0 : i32
    return %arg0, %c0_i32 : i32, i32
  }
}

module attributes {stable_mosaic.version = 11 : i64} {
  func.func @agg_kernel(%arg0: i32, %arg1: i32, %arg2: memref<128x128xbf16, #tpu.memory_space<vmem>>, %arg3: memref<128x128xbf16, #tpu.memory_space<vmem>>, %arg4: memref<1x128xf32, #tpu.memory_space<vmem>>, %arg5: memref<128x128xbf16, #tpu.memory_space<vmem>>, %arg6: memref<128x128xf32, #tpu.memory_space<vmem>>) attributes {dimension_semantics = [#tpu.dimension_semantics<parallel>, #tpu.dimension_semantics<arbitrary>], iteration_bounds = array<i64: 2, 2>, scalar_prefetch = 0 : i64, scratch_operands = 1 : i64, tpu.core_type = #tpu.core_type<tc>, window_params = [{transform_indices = @transform_0, window_bounds = array<i64: 128, 128>}, {transform_indices = @transform_1, window_bounds = array<i64: 128, 128>}, {pipeline_mode = #tpu.pipeline_mode<synchronous>, transform_indices = @transform_2, window_bounds = array<i64: 1, 128>}, {transform_indices = @transform_3, window_bounds = array<i64: 128, 128>}]} {
    %c0_i32 = arith.constant 0 : i32
    %0 = arith.cmpi eq, %arg1, %c0_i32 : i32
    %1 = arith.extui %0 : i1 to i32
    %c0_i32_0 = arith.constant 0 : i32
    %2 = arith.cmpi ne, %1, %c0_i32_0 : i32
    scf.if %2 {
      %cst_9 = arith.constant 0.000000e+00 : f32
      %12 = vector.broadcast %cst_9 : f32 to vector<128x128xf32>
      %c0_10 = arith.constant 0 : index
      %c0_11 = arith.constant 0 : index
      %13 = vector.load %arg6[%c0_10, %c0_11] : memref<128x128xf32, #tpu.memory_space<vmem>>, vector<128x128xf32>
      tpu.vector_store %arg6[%c0_10, %c0_11], %12 {strides = array<i32>} : memref<128x128xf32, #tpu.memory_space<vmem>>, vector<128x128xf32>,
    } else {
    }
    %c0 = arith.constant 0 : index
    %c0_1 = arith.constant 0 : index
    %3 = vector.load %arg6[%c0, %c0_1] : memref<128x128xf32, #tpu.memory_space<vmem>>, vector<128x128xf32>
    %c0_2 = arith.constant 0 : index
    %c0_3 = arith.constant 0 : index
    %4 = vector.load %arg2[%c0_2, %c0_3] : memref<128x128xbf16, #tpu.memory_space<vmem>>, vector<128x128xbf16>
    %c0_4 = arith.constant 0 : index
    %c0_5 = arith.constant 0 : index
    %5 = vector.load %arg3[%c0_4, %c0_5] : memref<128x128xbf16, #tpu.memory_space<vmem>>, vector<128x128xbf16>
    %cst = arith.constant dense<0.000000e+00> : vector<128x128xf32>
    %6 = tpu.matmul %4, %5, %cst {dimension_numbers = #tpu.dot_dimension_numbers<[1], [0], [0], [1], [0, 0, 1, 1], [], []>} : vector<128x128xbf16>, vector<128x128xbf16>, vector<128x128xf32> -> vector<128x128xf32>
    %7 = arith.addf %3, %6 : vector<128x128xf32>
    %c0_6 = arith.constant 0 : index
    %c0_7 = arith.constant 0 : index
    %8 = vector.load %arg6[%c0_6, %c0_7] : memref<128x128xf32, #tpu.memory_space<vmem>>, vector<128x128xf32>
    tpu.vector_store %arg6[%c0_6, %c0_7], %7 {strides = array<i32>} : memref<128x128xf32, #tpu.memory_space<vmem>>, vector<128x128xf32>,
    %c1_i32 = arith.constant 1 : i32
    %9 = arith.cmpi eq, %arg1, %c1_i32 : i32
    %10 = arith.extui %9 : i1 to i32
    %c0_i32_8 = arith.constant 0 : i32
    %11 = arith.cmpi ne, %10, %c0_i32_8 : i32
    scf.if %11 {
      %c0_9 = arith.constant 0 : index
      %c0_10 = arith.constant 0 : index
      %12 = vector.load %arg6[%c0_9, %c0_10] : memref<128x128xf32, #tpu.memory_space<vmem>>, vector<128x128xf32>
      %c0_11 = arith.constant 0 : index
      %c0_12 = arith.constant 0 : index
      %13 = vector.load %arg4[%c0_11, %c0_12] : memref<1x128xf32, #tpu.memory_space<vmem>>, vector<1x128xf32>
      %14 = vector.broadcast %13 : vector<1x128xf32> to vector<128x128xf32>
      %15 = arith.addf %12, %14 : vector<128x128xf32>
      %16 = arith.truncf %15 : vector<128x128xf32> to vector<128x128xbf16>
      %c0_13 = arith.constant 0 : index
      %c0_14 = arith.constant 0 : index
      %17 = vector.load %arg5[%c0_13, %c0_14] : memref<128x128xbf16, #tpu.memory_space<vmem>>, vector<128x128xbf16>
      tpu.vector_store %arg5[%c0_13, %c0_14], %16 {strides = array<i32>} : memref<128x128xbf16, #tpu.memory_space<vmem>>, vector<128x128xbf16>,
    } else {
    }
    return
  }
  func.func @transform_0(%arg0: i32, %arg1: i32) -> (i32, i32) {
    %c0_i32 = arith.constant 0 : i32
    return %arg0, %arg1 : i32, i32
  }
  func.func @transform_1(%arg0: i32, %arg1: i32) -> (i32, i32) {
    %c0_i32 = arith.constant 0 : i32
    %c0_i32_0 = arith.constant 0 : i32
    return %arg1, %c0_i32 : i32, i32
  }
  func.func @transform_2(%arg0: i32, %arg1: i32) -> (i32, i32) {
    %c0_i32 = arith.constant 0 : i32
    %c0_i32_0 = arith.constant 0 : i32
    %c0_i32_1 = arith.constant 0 : i32
    return %c0_i32, %c0_i32_0 : i32, i32
  }
  func.func @transform_3(%arg0: i32, %arg1: i32) -> (i32, i32) {
    %c0_i32 = arith.constant 0 : i32
    %c0_i32_0 = arith.constant 0 : i32
    return %arg0, %c0_i32 : i32, i32
  }
}

module attributes {stable_mosaic.version = 11 : i64} {
  func.func @tail_kernel(%arg0: i32, %arg1: memref<128x256xbf16, #tpu.memory_space<vmem>>, %arg2: memref<256x128xbf16, #tpu.memory_space<vmem>>, %arg3: memref<128x128xbf16, #tpu.memory_space<vmem>>, %arg4: memref<128x128xbf16, #tpu.memory_space<vmem>>, %arg5: memref<1x128xf32, #tpu.memory_space<vmem>>, %arg6: memref<128x128xbf16, #tpu.memory_space<vmem>>, %arg7: memref<128x128xbf16, #tpu.memory_space<vmem>>, %arg8: memref<1x128xf32, #tpu.memory_space<vmem>>, %arg9: memref<128x128xf32, #tpu.memory_space<vmem>>) attributes {dimension_semantics = [#tpu.dimension_semantics<parallel>], iteration_bounds = array<i64: 4>, scalar_prefetch = 0 : i64, scratch_operands = 0 : i64, tpu.core_type = #tpu.core_type<tc>, window_params = [{transform_indices = @transform_0, window_bounds = array<i64: 128, 256>}, {pipeline_mode = #tpu.pipeline_mode<synchronous>, transform_indices = @transform_1, window_bounds = array<i64: 256, 128>}, {transform_indices = @transform_2, window_bounds = array<i64: 128, 128>}, {pipeline_mode = #tpu.pipeline_mode<synchronous>, transform_indices = @transform_3, window_bounds = array<i64: 128, 128>}, {pipeline_mode = #tpu.pipeline_mode<synchronous>, transform_indices = @transform_4, window_bounds = array<i64: 1, 128>}, {pipeline_mode = #tpu.pipeline_mode<synchronous>, transform_indices = @transform_5, window_bounds = array<i64: 128, 128>}, {pipeline_mode = #tpu.pipeline_mode<synchronous>, transform_indices = @transform_6, window_bounds = array<i64: 128, 128>}, {pipeline_mode = #tpu.pipeline_mode<synchronous>, transform_indices = @transform_7, window_bounds = array<i64: 1, 128>}, {transform_indices = @transform_8, window_bounds = array<i64: 128, 128>}]} {
    %c0 = arith.constant 0 : index
    %c0_0 = arith.constant 0 : index
    %0 = vector.load %arg1[%c0, %c0_0] : memref<128x256xbf16, #tpu.memory_space<vmem>>, vector<128x256xbf16>
    %c0_1 = arith.constant 0 : index
    %c0_2 = arith.constant 0 : index
    %1 = vector.load %arg2[%c0_1, %c0_2] : memref<256x128xbf16, #tpu.memory_space<vmem>>, vector<256x128xbf16>
    %cst = arith.constant dense<0.000000e+00> : vector<128x128xf32>
    %2 = tpu.matmul %0, %1, %cst {dimension_numbers = #tpu.dot_dimension_numbers<[1], [0], [0], [1], [0, 0, 1, 1], [], []>} : vector<128x256xbf16>, vector<256x128xbf16>, vector<128x128xf32> -> vector<128x128xf32>
    %3 = arith.truncf %2 : vector<128x128xf32> to vector<128x128xbf16>
    %c0_3 = arith.constant 0 : index
    %c0_4 = arith.constant 0 : index
    %4 = vector.load %arg6[%c0_3, %c0_4] : memref<128x128xbf16, #tpu.memory_space<vmem>>, vector<128x128xbf16>
    %cst_5 = arith.constant dense<0.000000e+00> : vector<128x128xf32>
    %5 = tpu.matmul %3, %4, %cst_5 {dimension_numbers = #tpu.dot_dimension_numbers<[1], [0], [0], [1], [0, 0, 1, 1], [], []>} : vector<128x128xbf16>, vector<128x128xbf16>, vector<128x128xf32> -> vector<128x128xf32>
    %c0_6 = arith.constant 0 : index
    %c0_7 = arith.constant 0 : index
    %6 = vector.load %arg3[%c0_6, %c0_7] : memref<128x128xbf16, #tpu.memory_space<vmem>>, vector<128x128xbf16>
    %c0_8 = arith.constant 0 : index
    %c0_9 = arith.constant 0 : index
    %7 = vector.load %arg4[%c0_8, %c0_9] : memref<128x128xbf16, #tpu.memory_space<vmem>>, vector<128x128xbf16>
    %cst_10 = arith.constant dense<0.000000e+00> : vector<128x128xf32>
    %8 = tpu.matmul %6, %7, %cst_10 {dimension_numbers = #tpu.dot_dimension_numbers<[1], [0], [0], [1], [0, 0, 1, 1], [], []>} : vector<128x128xbf16>, vector<128x128xbf16>, vector<128x128xf32> -> vector<128x128xf32>
    %c0_11 = arith.constant 0 : index
    %c0_12 = arith.constant 0 : index
    %9 = vector.load %arg5[%c0_11, %c0_12] : memref<1x128xf32, #tpu.memory_space<vmem>>, vector<1x128xf32>
    %10 = vector.broadcast %9 : vector<1x128xf32> to vector<128x128xf32>
    %11 = arith.addf %8, %10 : vector<128x128xf32>
    %12 = arith.truncf %11 : vector<128x128xf32> to vector<128x128xbf16>
    %c0_13 = arith.constant 0 : index
    %c0_14 = arith.constant 0 : index
    %13 = vector.load %arg7[%c0_13, %c0_14] : memref<128x128xbf16, #tpu.memory_space<vmem>>, vector<128x128xbf16>
    %cst_15 = arith.constant dense<0.000000e+00> : vector<128x128xf32>
    %14 = tpu.matmul %12, %13, %cst_15 {dimension_numbers = #tpu.dot_dimension_numbers<[1], [0], [0], [1], [0, 0, 1, 1], [], []>} : vector<128x128xbf16>, vector<128x128xbf16>, vector<128x128xf32> -> vector<128x128xf32>
    %15 = arith.addf %5, %14 : vector<128x128xf32>
    %c0_16 = arith.constant 0 : index
    %c0_17 = arith.constant 0 : index
    %16 = vector.load %arg8[%c0_16, %c0_17] : memref<1x128xf32, #tpu.memory_space<vmem>>, vector<1x128xf32>
    %17 = vector.broadcast %16 : vector<1x128xf32> to vector<128x128xf32>
    %18 = arith.addf %15, %17 : vector<128x128xf32>
    %c0_18 = arith.constant 0 : index
    %c0_19 = arith.constant 0 : index
    %19 = vector.load %arg9[%c0_18, %c0_19] : memref<128x128xf32, #tpu.memory_space<vmem>>, vector<128x128xf32>
    tpu.vector_store %arg9[%c0_18, %c0_19], %18 {strides = array<i32>} : memref<128x128xf32, #tpu.memory_space<vmem>>, vector<128x128xf32>,
    return
  }
  func.func @transform_0(%arg0: i32) -> (i32, i32) {
    %c0_i32 = arith.constant 0 : i32
    %c0_i32_0 = arith.constant 0 : i32
    return %arg0, %c0_i32 : i32, i32
  }
  func.func @transform_1(%arg0: i32) -> (i32, i32) {
    %c0_i32 = arith.constant 0 : i32
    %c0_i32_0 = arith.constant 0 : i32
    %c0_i32_1 = arith.constant 0 : i32
    return %c0_i32, %c0_i32_0 : i32, i32
  }
  func.func @transform_2(%arg0: i32) -> (i32, i32) {
    %c0_i32 = arith.constant 0 : i32
    %c0_i32_0 = arith.constant 0 : i32
    return %arg0, %c0_i32 : i32, i32
  }
  func.func @transform_3(%arg0: i32) -> (i32, i32) {
    %c0_i32 = arith.constant 0 : i32
    %c0_i32_0 = arith.constant 0 : i32
    %c0_i32_1 = arith.constant 0 : i32
    return %c0_i32, %c0_i32_0 : i32, i32
  }
  func.func @transform_4(%arg0: i32) -> (i32, i32) {
    %c0_i32 = arith.constant 0 : i32
    %c0_i32_0 = arith.constant 0 : i32
    %c0_i32_1 = arith.constant 0 : i32
    return %c0_i32, %c0_i32_0 : i32, i32
  }
  func.func @transform_5(%arg0: i32) -> (i32, i32) {
    %c0_i32 = arith.constant 0 : i32
    %c0_i32_0 = arith.constant 0 : i32
    %c0_i32_1 = arith.constant 0 : i32
    return %c0_i32, %c0_i32_0 : i32, i32
  }
  func.func @transform_6(%arg0: i32) -> (i32, i32) {
    %c0_i32 = arith.constant 0 : i32
    %c0_i32_0 = arith.constant 0 : i32
    %c0_i32_1 = arith.constant 0 : i32
    return %c0_i32, %c0_i32_0 : i32, i32
  }
  func.func @transform_7(%arg0: i32) -> (i32, i32) {
    %c0_i32 = arith.constant 0 : i32
    %c0_i32_0 = arith.constant 0 : i32
    %c0_i32_1 = arith.constant 0 : i32
    return %c0_i32, %c0_i32_0 : i32, i32
  }
  func.func @transform_8(%arg0: i32) -> (i32, i32) {
    %c0_i32 = arith.constant 0 : i32
    %c0_i32_0 = arith.constant 0 : i32
    return %arg0, %c0_i32 : i32, i32
  }
}

</mosaic_0001>

<llo_original>
// kernel: mul.1
$region0: #{mul.1}
  #allocation0 [shape = 's32[1]{0}', space=sflag, size = 0x4, scoped, tag = 'scoped memory for mul.1']
  %s0 = inlined_call_operand.vmem [shape: f32[600], index: 0, kind: input, shape index: {}]
  %s1 = inlined_call_operand.vmem [shape: f32[600], index: 1, kind: input, shape index: {}]
  %s2 = inlined_call_operand.vmem [shape: f32[600], index: 2, kind: output, shape index: {}]
  %v3 = vld [vmem:[%s0] sm:$0x1f]
  %v4 = vld [vmem:[%s1] sm:$0x1f]
  %5 = xla_tuple %v3, %v4
  %6 = xla_tuple %5
  %v7 = vmul.f32 %v3, %v4
  %8 = xla_tuple %v7
  %9 = vst [vmem:[%s2] sm:$0xff] %v7

// kernel: custom_gcn_forward.5
$region0: #{custom_gcn_forward.5}
  #allocation0 [shape = 'u32[]', space=smem, size = 0x4, offset = 0x4, fixed_abs, tag = 'smem constant byte address 0x4 - core index']
  #allocation1 [shape = 'u32[144,128]{1,0:T(1,128)}', space=vmem, size = 0x12000, scoped, tag = 'internal scratch']
  %s0 = inlined_call_operand.vmem [shape: bf16[256,128], index: 0, kind: input, shape index: {}]
  %s1 = inlined_call_operand.vmem [shape: bf16[128,128], index: 1, kind: input, shape index: {}]
  %s2 = inlined_call_operand.vmem [shape: bf16[256,128], index: 2, kind: output, shape index: {}]
  %s3 = sld [smem:[#allocation0]]
  $region41: #{custom_gcn_forward.5} parent=0
    _
  %s5 = ssub.s32 1, %s3
  %s6 = scalar_select 0, %s5, %s3
  loop: start=0, step=1, limit=4
  $region2: #{custom_gcn_forward.5} parent=0 // loop_pre_header
    _
  $region3: #{custom_gcn_forward.5} parent=0 // loop_header
    %s8 = sphi 0, %s12
    %p9 = scmp.ge.s32.totalorder %s8, 4
    %s18 = sphi 0, %s20
    %s21 = sphi 0, %s18
    %s22 = sphi 0, %s21
    %s38 = sphi 0, %s22
    %s42 = sphi 0, %s42
    %s44 = sphi 0, %s42
    %s45 = sphi 0, %s44
    %s59 = sphi 0, %s45
    %s65 = sphi 0, %s67
    %s68 = sphi 0, %s65
    %s69 = sphi 0, %s68
    %s85 = sphi 0, %s69
  $region4: #{custom_gcn_forward.5} parent=0 // loop_header_branch
    %11 = sbr.rel (%p9) target = $region8
  $region5: #{custom_gcn_forward.5} parent=0 // loop_body
    %s13 = ssub.s32 %s8, 1
    %s14 = ssub.s32 %s8, 2
    %s15 = sadd.s32 %s8, 1
    %s16 = ssub.s32 %s8, %s15
    %p17 = scmp.eq.s32.totalorder %s16, 0
    %s19 = sadd.s32 %s18, 1
    %s20 = scalar_select %p17, %s18, %s19
    %p23 = pneg %p17
    %p24 = scmp.eq.s32.totalorder %s8, 1
    %p25 = por %p23, %p24
    %p26 = scmp.ne.s32.totalorder %s18, %s21
    %p27 = scmp.eq.s32.totalorder %s8, 0
    %p28 = por %p26, %p27
    %p29 = scmp.ne.s32.totalorder %s18, %s21
    %p30 = scmp.eq.s32.totalorder %s13, 1
    %p31 = por %p29, %p30
    %p32 = scmp.ne.s32.totalorder %s21, %s22
    %p33 = scmp.eq.s32.totalorder %s13, 0
    %p34 = por %p32, %p33
    %p35 = scmp.ne.s32.totalorder %s21, %s22
    %p36 = scmp.eq.s32.totalorder %s14, 1
    %p37 = por %p35, %p36
    %p39 = scmp.ne.s32.totalorder %s22, %s38
    %p40 = scmp.eq.s32.totalorder %s14, 0
    %p41 = por %p39, %p40
    %s43 = sadd.s32 %s42, 1
    %p46 = scmp.eq.s32.totalorder %s8, 1
    %p47 = scmp.ne.s32.totalorder %s42, %s44
    %p48 = scmp.eq.s32.totalorder %s8, 0
    %p49 = por %p47, %p48
    %p50 = scmp.ne.s32.totalorder %s42, %s44
    %p51 = scmp.eq.s32.totalorder %s13, 1
    %p52 = por %p50, %p51
    %p53 = scmp.ne.s32.totalorder %s44, %s45
    %p54 = scmp.eq.s32.totalorder %s13, 0
    %p55 = por %p53, %p54
    %p56 = scmp.ne.s32.totalorder %s44, %s45
    %p57 = scmp.eq.s32.totalorder %s14, 1
    %p58 = por %p56, %p57
    %p60 = scmp.ne.s32.totalorder %s45, %s59
    %p61 = scmp.eq.s32.totalorder %s14, 0
    %p62 = por %p60, %p61
    %s63 = ssub.s32 %s8, %s15
    %p64 = scmp.eq.s32.totalorder %s63, 0
    %s66 = sadd.s32 %s65, 1
    %s67 = scalar_select %p64, %s65, %s66
    %p70 = pneg %p64
    %p71 = scmp.eq.s32.totalorder %s8, 1
    %p72 = por %p70, %p71
    %p73 = scmp.ne.s32.totalorder %s65, %s68
    %p74 = scmp.eq.s32.totalorder %s8, 0
    %p75 = por %p73, %p74
    %p76 = scmp.ne.s32.totalorder %s65, %s68
    %p77 = scmp.eq.s32.totalorder %s13, 1
    %p78 = por %p76, %p77
    %p79 = scmp.ne.s32.totalorder %s68, %s69
    %p80 = scmp.eq.s32.totalorder %s13, 0
    %p81 = por %p79, %p80
    %p82 = scmp.ne.s32.totalorder %s68, %s69
    %p83 = scmp.eq.s32.totalorder %s14, 1
    %p84 = por %p82, %p83
    %p86 = scmp.ne.s32.totalorder %s69, %s85
    %p87 = scmp.eq.s32.totalorder %s14, 0
    %p88 = por %p86, %p87
    %p89 = scmp.le.s32.totalorder 1, %s8
    %p90 = scmp.lt.s32.totalorder %s8, 3
    %p91 = pnand %p89, %p90
    %p92 = pneg %p91
    // Predicated region
    $region9: #{custom_gcn_forward.5} parent=5 // pred_check
      _
    $region10: #{custom_gcn_forward.5} parent=5 // pred_check_branch
      %94 = sbr.rel (%p91) target = $region12
    $region11: #{custom_gcn_forward.5} parent=5 // pred_region
      %s95 = ssub.s32 %s8, 1
      // Predicated region
      $region13: #{custom_gcn_forward.5} parent=11 // pred_check
        %p96 = pneg %p55
      $region14: #{custom_gcn_forward.5} parent=11 // pred_check_branch
        %98 = sbr.rel (%p96) target = $region16
      $region15: #{custom_gcn_forward.5} parent=11 // pred_region
        _
      $region16: #{custom_gcn_forward.5} parent=11 // pred_fallthru
        _
    $region12: #{custom_gcn_forward.5} parent=5 // pred_fallthru
      _
    %p99 = scmp.lt.s32.totalorder %s8, 2
    // Predicated region
    $region17: #{custom_gcn_forward.5} parent=5 // pred_check
      %p100 = pneg %p99
    $region18: #{custom_gcn_forward.5} parent=5 // pred_check_branch
      %102 = sbr.rel (%p100) target = $region20
    $region19: #{custom_gcn_forward.5} parent=5 // pred_region
      // Predicated region
      $region21: #{custom_gcn_forward.5} parent=19 // pred_check
        %p103 = pneg %p28
      $region22: #{custom_gcn_forward.5} parent=19 // pred_check_branch
        %105 = sbr.rel (%p103) target = $region24
      $region23: #{custom_gcn_forward.5} parent=19 // pred_region
        %s106 = smul.u32 16, %s8
        %p107 = scmp.lt.s32.totalorder %s106, 31
        %s108 = scalar_select %p107, %s106, 31
        %s109 = smul.addr %s108, 4
        %s110 = scalar_lea.vmem %s0, %s109
        %s111 = smul.u32 16, %s8
      $region24: #{custom_gcn_forward.5} parent=19 // pred_fallthru
        _
    $region20: #{custom_gcn_forward.5} parent=5 // pred_fallthru
      _
    %p112 = scmp.le.s32.totalorder 1, %s8
    %p113 = scmp.lt.s32.totalorder %s8, 3
    %p114 = pnand %p112, %p113
    %p115 = pneg %p114
    // Predicated region
    $region25: #{custom_gcn_forward.5} parent=5 // pred_check
      _
    $region26: #{custom_gcn_forward.5} parent=5 // pred_check_branch
      %117 = sbr.rel (%p114) target = $region28
    $region27: #{custom_gcn_forward.5} parent=5 // pred_region
      %s118 = ssub.s32 %s8, 1
      %s119 = smul.u32 16, %s13
      %p120 = scmp.lt.s32.totalorder %s119, 31
      %s121 = scalar_select %p120, %s119, 31
      %s122 = smul.addr %s121, 4
      %s123 = scalar_lea.vmem %s0, %s122
      %p124 = pneg %p34
      %p125 = pneg %p31
      %p126 = pneg %p55
      %p127 = pneg %p52
      %p128 = pneg %p81
      %p129 = pneg %p78
      %s130 = smul.u32 16, %s13
      %p131 = scmp.lt.s32.totalorder %s130, 31
      %s132 = scalar_select %p131, %s130, 31
      %s133 = smul.addr %s132, 4
      %s134 = scalar_lea.vmem %s2, %s133
      %s135 = smul.u32 16, %s13
      %p136 = scmp.lt.s32.totalorder %s135, 31
      %s137 = scalar_select %p136, %s135, 31
      %s138 = smul.addr %s137, 4
      %s139 = scalar_lea.vmem %s0, %s138
      %s140 = smul.u32 16, %s13
      %s141 = smul.u32 16, %s13
      %p142 = scmp.lt.s32.totalorder %s141, 31
      %s143 = scalar_select %p142, %s141, 31
      %s144 = smul.addr %s143, 4
      %s145 = scalar_lea.vmem %s2, %s144
      %s146 = smul.u32 16, %s13
      %v148 = vld [vmem:[%s139] sm:$0xf]
      %v149 = vld [vmem:[%s139 + $0x4] sm:$0xf]
      %v150 = vld [vmem:[%s139 + $0x8] sm:$0xf]
      %v151 = vld [vmem:[%s139 + $0xc] sm:$0xf]
      %v152 = vld [vmem:[%s139 + $0x10] sm:$0xf]
      %v153 = vld [vmem:[%s139 + $0x14] sm:$0xf]
      %v154 = vld [vmem:[%s139 + $0x18] sm:$0xf]
      %v155 = vld [vmem:[%s139 + $0x1c] sm:$0xf]
      %v156 = vld [vmem:[%s139 + $0x20] sm:$0xf]
      %v157 = vld [vmem:[%s139 + $0x24] sm:$0xf]
      %v158 = vld [vmem:[%s139 + $0x28] sm:$0xf]
      %v159 = vld [vmem:[%s139 + $0x2c] sm:$0xf]
      %v160 = vld [vmem:[%s139 + $0x30] sm:$0xf]
      %v161 = vld [vmem:[%s139 + $0x34] sm:$0xf]
      %v162 = vld [vmem:[%s139 + $0x38] sm:$0xf]
      %v163 = vld [vmem:[%s139 + $0x3c] sm:$0xf]
      %v164 = vld [vmem:[%s1] sm:$0xf]
      %v165 = vld [vmem:[%s1 + $0x4] sm:$0xf]
      %v166 = vld [vmem:[%s1 + $0x8] sm:$0xf]
      %v167 = vld [vmem:[%s1 + $0xc] sm:$0xf]
      %v168 = vld [vmem:[%s1 + $0x10] sm:$0xf]
      %v169 = vld [vmem:[%s1 + $0x14] sm:$0xf]
      %v170 = vld [vmem:[%s1 + $0x18] sm:$0xf]
      %v171 = vld [vmem:[%s1 + $0x1c] sm:$0xf]
      %v172 = vld [vmem:[%s1 + $0x20] sm:$0xf]
      %v173 = vld [vmem:[%s1 + $0x24] sm:$0xf]
      %v174 = vld [vmem:[%s1 + $0x28] sm:$0xf]
      %v175 = vld [vmem:[%s1 + $0x2c] sm:$0xf]
      %v176 = vld [vmem:[%s1 + $0x30] sm:$0xf]
      %v177 = vld [vmem:[%s1 + $0x34] sm:$0xf]
      %v178 = vld [vmem:[%s1 + $0x38] sm:$0xf]
      %v179 = vld [vmem:[%s1 + $0x3c] sm:$0xf]
      %v196 = vunpack.c.l.b16 %v148
      %v197 = vunpack.c.l.b16 %v149
      %v198 = vunpack.c.l.b16 %v150
      %v199 = vunpack.c.l.b16 %v151
      %v200 = vunpack.c.l.b16 %v152
      %v201 = vunpack.c.l.b16 %v153
      %v202 = vunpack.c.l.b16 %v154
      %v203 = vunpack.c.l.b16 %v155
      %v204 = vunpack.c.l.b16 %v156
      %v205 = vunpack.c.l.b16 %v157
      %v206 = vunpack.c.l.b16 %v158
      %v207 = vunpack.c.l.b16 %v159
      %v208 = vunpack.c.l.b16 %v160
      %v209 = vunpack.c.l.b16 %v161
      %v210 = vunpack.c.l.b16 %v162
      %v211 = vunpack.c.l.b16 %v163
      %v212 = vpack.c.b16 %v197, %v196
      %v213 = vpack.c.b16 %v199, %v198
      %v214 = vpack.c.b16 %v201, %v200
      %v215 = vpack.c.b16 %v203, %v202
      %v216 = vpack.c.b16 %v205, %v204
      %v217 = vpack.c.b16 %v207, %v206
      %v218 = vpack.c.b16 %v209, %v208
      %v219 = vpack.c.b16 %v211, %v210
      %v244 = vunpack.c.l.b16 %v164
      %v245 = vunpack.c.l.b16 %v165
      %v246 = vunpack.c.l.b16 %v166
      %v247 = vunpack.c.l.b16 %v167
      %v248 = vunpack.c.l.b16 %v168
      %v249 = vunpack.c.l.b16 %v169
      %v250 = vunpack.c.l.b16 %v170
      %v251 = vunpack.c.l.b16 %v171
      %v252 = vunpack.c.l.b16 %v172
      %v253 = vunpack.c.l.b16 %v173
      %v254 = vunpack.c.l.b16 %v174
      %v255 = vunpack.c.l.b16 %v175
      %v256 = vunpack.c.l.b16 %v176
      %v257 = vunpack.c.l.b16 %v177
      %v258 = vunpack.c.l.b16 %v178
      %v259 = vunpack.c.l.b16 %v179
      %v260 = vpack.c.b16 %v245, %v244
      %v261 = vpack.c.b16 %v247, %v246
      %v262 = vpack.c.b16 %v249, %v248
      %v263 = vpack.c.b16 %v251, %v250
      %v264 = vpack.c.b16 %v253, %v252
      %v265 = vpack.c.b16 %v255, %v254
      %v266 = vpack.c.b16 %v257, %v256
      %v267 = vpack.c.b16 %v259, %v258
      %276 = vmatprep.subr.bf16.mxu0 0
      %277 = vmatpush1.bf16.msra.mxu0 %v260
      %278 = vmatprep.subr.bf16.mxu0 0
      %279 = vmatpush1.bf16.msra.mxu0 %v261
      %280 = vmatprep.subr.bf16.mxu0 0
      %281 = vmatpush1.bf16.msra.mxu0 %v262
      %282 = vmatprep.subr.bf16.mxu0 0
      %283 = vmatpush1.bf16.msra.mxu0 %v263
      %284 = vmatprep.subr.bf16.mxu0 0
      %285 = vmatpush1.bf16.msra.mxu0 %v264
      %286 = vmatprep.subr.bf16.mxu0 0
      %287 = vmatpush1.bf16.msra.mxu0 %v265
      %288 = vmatprep.subr.bf16.mxu0 0
      %289 = vmatpush1.bf16.msra.mxu0 %v266
      %290 = vmatprep.subr.bf16.mxu0 0
      %291 = vmatpush1.bf16.msra.mxu0 %v267
      %292 = vmatprep.subr.bf16.mxu0 0
      %293 = vmatpush1.bf16.msra.mxu0 0
      %294 = vmatprep.subr.bf16.mxu0 0
      %295 = vmatpush1.bf16.msra.mxu0 0
      %296 = vmatprep.subr.bf16.mxu0 0
      %297 = vmatpush1.bf16.msra.mxu0 0
      %298 = vmatprep.subr.bf16.mxu0 0
      %299 = vmatpush1.bf16.msra.mxu0 0
      %300 = vmatprep.subr.bf16.mxu0 0
      %301 = vmatpush1.bf16.msra.mxu0 0
      %302 = vmatprep.subr.bf16.mxu0 0
      %303 = vmatpush1.bf16.msra.mxu0 0
      %304 = vmatprep.subr.bf16.mxu0 0
      %305 = vmatpush1.bf16.msra.mxu0 0
      %306 = vmatprep.subr.bf16.mxu0 0
      %307 = vmatpush1.bf16.msra.mxu0 0
      %308 = vmatprep.mubr.bf16.mxu0 0
      %309 = vmatmul.mubr.bf16.gmra.mrb[0].mxu0 %v212
      %v310 = vpop.f32.mrb[0].mxu0
      %v311 = vadd.f32 0.0, %v310
      %v312 = vpop.f32.mrb[0].mxu0
      %v313 = vpop.f32.mrb[0].mxu0
      %v314 = vadd.f32 0.0, %v313
      %v315 = vpop.f32.mrb[0].mxu0
      %316 = vmatprep.mubr.bf16.mxu0 0
      %317 = vmatmul.mubr.bf16.gmra.mrb[0].mxu0 %v213
      %v318 = vpop.f32.mrb[0].mxu0
      %v319 = vadd.f32 0.0, %v318
      %v320 = vpop.f32.mrb[0].mxu0
      %v321 = vpop.f32.mrb[0].mxu0
      %v322 = vadd.f32 0.0, %v321
      %v323 = vpop.f32.mrb[0].mxu0
      %324 = vmatprep.mubr.bf16.mxu0 0
      %325 = vmatmul.mubr.bf16.gmra.mrb[0].mxu0 %v214
      %v326 = vpop.f32.mrb[0].mxu0
      %v327 = vadd.f32 0.0, %v326
      %v328 = vpop.f32.mrb[0].mxu0
      %v329 = vpop.f32.mrb[0].mxu0
      %v330 = vadd.f32 0.0, %v329
      %v331 = vpop.f32.mrb[0].mxu0
      %332 = vmatprep.mubr.bf16.mxu0 0
      %333 = vmatmul.mubr.bf16.gmra.mrb[0].mxu0 %v215
      %v334 = vpop.f32.mrb[0].mxu0
      %v335 = vadd.f32 0.0, %v334
      %v336 = vpop.f32.mrb[0].mxu0
      %v337 = vpop.f32.mrb[0].mxu0
      %v338 = vadd.f32 0.0, %v337
      %v339 = vpop.f32.mrb[0].mxu0
      %340 = vmatprep.mubr.bf16.mxu0 0
      %341 = vmatmul.mubr.bf16.gmra.mrb[0].mxu0 %v216
      %v342 = vpop.f32.mrb[0].mxu0
      %v343 = vadd.f32 0.0, %v342
      %v344 = vpop.f32.mrb[0].mxu0
      %v345 = vpop.f32.mrb[0].mxu0
      %v346 = vadd.f32 0.0, %v345
      %v347 = vpop.f32.mrb[0].mxu0
      %348 = vmatprep.mubr.bf16.mxu0 0
      %349 = vmatmul.mubr.bf16.gmra.mrb[0].mxu0 %v217
      %v350 = vpop.f32.mrb[0].mxu0
      %v351 = vadd.f32 0.0, %v350
      %v352 = vpop.f32.mrb[0].mxu0
      %v353 = vpop.f32.mrb[0].mxu0
      %v354 = vadd.f32 0.0, %v353
      %v355 = vpop.f32.mrb[0].mxu0
      %356 = vmatprep.mubr.bf16.mxu0 0
      %357 = vmatmul.mubr.bf16.gmra.mrb[0].mxu0 %v218
      %v358 = vpop.f32.mrb[0].mxu0
      %v359 = vadd.f32 0.0, %v358
      %v360 = vpop.f32.mrb[0].mxu0
      %v361 = vpop.f32.mrb[0].mxu0
      %v362 = vadd.f32 0.0, %v361
      %v363 = vpop.f32.mrb[0].mxu0
      %364 = vmatprep.mubr.bf16.mxu0 0
      %365 = vmatmul.mubr.bf16.gmra.mrb[0].mxu0 %v219
      %v366 = vpop.f32.mrb[0].mxu0
      %v367 = vadd.f32 0.0, %v366
      %v368 = vpop.f32.mrb[0].mxu0
      %v369 = vpop.f32.mrb[0].mxu0
      %v370 = vadd.f32 0.0, %v369
      %v371 = vpop.f32.mrb[0].mxu0
      %372 = vdwg.mxu0
      %v373 = vpack.c.bf16 %v314, %v311
      %v374 = vpack.c.bf16 %v322, %v319
      %v375 = vpack.c.bf16 %v330, %v327
      %v376 = vpack.c.bf16 %v338, %v335
      %v377 = vpack.c.bf16 %v346, %v343
      %v378 = vpack.c.bf16 %v354, %v351
      %v379 = vpack.c.bf16 %v362, %v359
      %v380 = vpack.c.bf16 %v370, %v367
      %v389 = vunpack.c.l.b16 %v373
      %v390 = vunpack.c.h.b16 %v373
      %v391 = vunpack.c.l.b16 %v374
      %v392 = vunpack.c.h.b16 %v374
      %v393 = vunpack.c.l.b16 %v375
      %v394 = vunpack.c.h.b16 %v375
      %v395 = vunpack.c.l.b16 %v376
      %v396 = vunpack.c.h.b16 %v376
      %v397 = vunpack.c.l.b16 %v377
      %v398 = vunpack.c.h.b16 %v377
      %v399 = vunpack.c.l.b16 %v378
      %v400 = vunpack.c.h.b16 %v378
      %v401 = vunpack.c.l.b16 %v379
      %v402 = vunpack.c.h.b16 %v379
      %v403 = vunpack.c.l.b16 %v380
      %v404 = vunpack.c.h.b16 %v380
      %v405 = vpack.c.b16 %v389, %v389
      %v406 = vpack.c.b16 %v390, %v390
      %v407 = vpack.c.b16 %v391, %v391
      %v408 = vpack.c.b16 %v392, %v392
      %v409 = vpack.c.b16 %v393, %v393
      %v410 = vpack.c.b16 %v394, %v394
      %v411 = vpack.c.b16 %v395, %v395
      %v412 = vpack.c.b16 %v396, %v396
      %v413 = vpack.c.b16 %v397, %v397
      %v414 = vpack.c.b16 %v398, %v398
      %v415 = vpack.c.b16 %v399, %v399
      %v416 = vpack.c.b16 %v400, %v400
      %v417 = vpack.c.b16 %v401, %v401
      %v418 = vpack.c.b16 %v402, %v402
      %v419 = vpack.c.b16 %v403, %v403
      %v420 = vpack.c.b16 %v404, %v404
      %437 = vst [vmem:[%s145] sm:$0xf] %v405
      %438 = vst [vmem:[%s145 + $0x4] sm:$0xf] %v406
      %439 = vst [vmem:[%s145 + $0x8] sm:$0xf] %v407
      %440 = vst [vmem:[%s145 + $0xc] sm:$0xf] %v408
      %441 = vst [vmem:[%s145 + $0x10] sm:$0xf] %v409
      %442 = vst [vmem:[%s145 + $0x14] sm:$0xf] %v410
      %443 = vst [vmem:[%s145 + $0x18] sm:$0xf] %v411
      %444 = vst [vmem:[%s145 + $0x1c] sm:$0xf] %v412
      %445 = vst [vmem:[%s145 + $0x20] sm:$0xf] %v413
      %446 = vst [vmem:[%s145 + $0x24] sm:$0xf] %v414
      %447 = vst [vmem:[%s145 + $0x28] sm:$0xf] %v415
      %448 = vst [vmem:[%s145 + $0x2c] sm:$0xf] %v416
      %449 = vst [vmem:[%s145 + $0x30] sm:$0xf] %v417
      %450 = vst [vmem:[%s145 + $0x34] sm:$0xf] %v418
      %451 = vst [vmem:[%s145 + $0x38] sm:$0xf] %v419
      %452 = vst [vmem:[%s145 + $0x3c] sm:$0xf] %v420
      %s453 = smul.u32 16, %s13
      %p454 = scmp.lt.s32.totalorder %s453, 31
      %s455 = scalar_select %p454, %s453, 31
      %s456 = smul.addr %s455, 4
      %s457 = scalar_lea.vmem %s2, %s456
      // Predicated region
      $region29: #{custom_gcn_forward.5} parent=27 // pred_check
        %p458 = pneg %p78
      $region30: #{custom_gcn_forward.5} parent=27 // pred_check_branch
        %460 = sbr.rel (%p458) target = $region32
      $region31: #{custom_gcn_forward.5} parent=27 // pred_region
        %s461 = smul.u32 16, %s13
      $region32: #{custom_gcn_forward.5} parent=27 // pred_fallthru
        _
    $region28: #{custom_gcn_forward.5} parent=5 // pred_fallthru
      _
    %p462 = scmp.le.s32.totalorder 2, %s8
    // Predicated region
    $region33: #{custom_gcn_forward.5} parent=5 // pred_check
      %p463 = pneg %p462
    $region34: #{custom_gcn_forward.5} parent=5 // pred_check_branch
      %465 = sbr.rel (%p463) target = $region36
    $region35: #{custom_gcn_forward.5} parent=5 // pred_region
      %s466 = ssub.s32 %s8, 2
      // Predicated region
      $region37: #{custom_gcn_forward.5} parent=35 // pred_check
        %p467 = pneg %p84
      $region38: #{custom_gcn_forward.5} parent=35 // pred_check_branch
        %469 = sbr.rel (%p467) target = $region40
      $region39: #{custom_gcn_forward.5} parent=35 // pred_region
        %s470 = smul.u32 16, %s14
        %p471 = scmp.lt.s32.totalorder %s470, 31
        %s472 = scalar_select %p471, %s470, 31
        %s473 = smul.addr %s472, 4
        %s474 = scalar_lea.vmem %s2, %s473
      $region40: #{custom_gcn_forward.5} parent=35 // pred_fallthru
        _
    $region36: #{custom_gcn_forward.5} parent=5 // pred_fallthru
      _
  $region6: #{custom_gcn_forward.5} parent=0 // loop_footer
    %s12 = sadd.s32 1, %s8
  $region7: #{custom_gcn_forward.5} parent=0 // loop_footer_branch
    %7 = sbr.rel target = $region3
  $region8: #{custom_gcn_forward.5} parent=0 // loop_exit
    _

// kernel: custom_gcn_forward.6
$region0: #{custom_gcn_forward.6}
  #allocation0 [shape = 'u32[]', space=smem, size = 0x4, offset = 0x4, fixed_abs, tag = 'smem constant byte address 0x4 - core index']
  #allocation1 [shape = 'u32[144,128]{1,0:T(1,128)}', space=vmem, size = 0x12000, scoped, tag = 'internal scratch']
  #allocation2 [shape = 'f32[128,128]{1,0:T(8,128)}', space=vmem, size = 0x10000, scoped, tag = 'scratch operand']
  %s0 = inlined_call_operand.vmem [shape: bf16[256,256], index: 0, kind: input, shape index: {}]
  %s1 = inlined_call_operand.vmem [shape: bf16[256,128], index: 1, kind: input, shape index: {}]
  %s2 = inlined_call_operand.vmem [shape: f32[1,128], index: 2, kind: input, shape index: {}]
  %s3 = inlined_call_operand.vmem [shape: bf16[256,128], index: 3, kind: output, shape index: {}]
  %s4 = sld [smem:[#allocation0]]
  $region94: #{custom_gcn_forward.6} parent=0
    _
  %s6 = ssub.s32 1, %s4
  %s7 = scalar_select 0, %s6, %s4
  $region1: #{custom_gcn_forward.6} parent=0
    #allocation3 [shape = 'u8[65536]{0}', space=vmem, size = 0x10000, scoped, tag = 'input window, operand 0']
    loop: start=0, step=1, limit=6
    $region2: #{custom_gcn_forward.6} parent=1 // loop_pre_header
      _
    $region3: #{custom_gcn_forward.6} parent=1 // loop_header
      %s9 = sphi 0, %s13
      %p10 = scmp.ge.s32.totalorder %s9, 6
      %s16 = sphi 0, %s28
      %s17 = sphi 0, %s24
      %s18 = sphi 0, %s16
      %s19 = sphi 0, %s17
      %s20 = sphi 0, %s18
      %s21 = sphi 0, %s19
      %s33 = sphi 0, %s35
      %s36 = sphi 0, %s33
      %s37 = sphi 0, %s36
      %s53 = sphi 0, %s37
      %s59 = sphi 0, %s61
      %s62 = sphi 0, %s59
      %s63 = sphi 0, %s62
      %s79 = sphi 0, %s63
      %s83 = sphi 0, %s83
      %s85 = sphi 0, %s83
      %s86 = sphi 0, %s85
      %s100 = sphi 0, %s86
      %s106 = sphi 0, %s108
      %s109 = sphi 0, %s106
      %s110 = sphi 0, %s109
      %s126 = sphi 0, %s110
    $region4: #{custom_gcn_forward.6} parent=1 // loop_header_branch
      %12 = sbr.rel (%p10) target = $region8
    $region5: #{custom_gcn_forward.6} parent=1 // loop_body
      %s14 = ssub.s32 %s9, 1
      %s15 = ssub.s32 %s9, 2
      %s22 = sadd.s32 1, %s17
      %p23 = scmp.ge.s32.totalorder %s22, 2
      %s24 = scalar_select %p23, 0, %s22
      %s25 = sadd.s32 1, %s16
      %s26 = scalar_select %p23, %s25, %s16
      %p27 = scmp.ge.s32.totalorder %s26, 2
      %s28 = scalar_select %p27, 0, %s26
      %s29 = ssub.s32 %s16, %s28
      %s30 = ssub.s32 %s17, %s24
      %s31 = sor.u32 %s29, %s30
      %p32 = scmp.eq.s32.totalorder %s31, 0
      %s34 = sadd.s32 %s33, 1
      %s35 = scalar_select %p32, %s33, %s34
      %p38 = pneg %p32
      %p39 = scmp.eq.s32.totalorder %s9, 3
      %p40 = por %p38, %p39
      %p41 = scmp.ne.s32.totalorder %s33, %s36
      %p42 = scmp.eq.s32.totalorder %s9, 0
      %p43 = por %p41, %p42
      %p44 = scmp.ne.s32.totalorder %s33, %s36
      %p45 = scmp.eq.s32.totalorder %s14, 3
      %p46 = por %p44, %p45
      %p47 = scmp.ne.s32.totalorder %s36, %s37
      %p48 = scmp.eq.s32.totalorder %s14, 0
      %p49 = por %p47, %p48
      %p50 = scmp.ne.s32.totalorder %s36, %s37
      %p51 = scmp.eq.s32.totalorder %s15, 3
      %p52 = por %p50, %p51
      %p54 = scmp.ne.s32.totalorder %s37, %s53
      %p55 = scmp.eq.s32.totalorder %s15, 0
      %p56 = por %p54, %p55
      %s57 = ssub.s32 %s17, %s24
      %p58 = scmp.eq.s32.totalorder %s57, 0
      %s60 = sadd.s32 %s59, 1
      %s61 = scalar_select %p58, %s59, %s60
      %p64 = pneg %p58
      %p65 = scmp.eq.s32.totalorder %s9, 3
      %p66 = por %p64, %p65
      %p67 = scmp.ne.s32.totalorder %s59, %s62
      %p68 = scmp.eq.s32.totalorder %s9, 0
      %p69 = por %p67, %p68
      %p70 = scmp.ne.s32.totalorder %s59, %s62
      %p71 = scmp.eq.s32.totalorder %s14, 3
      %p72 = por %p70, %p71
      %p73 = scmp.ne.s32.totalorder %s62, %s63
      %p74 = scmp.eq.s32.totalorder %s14, 0
      %p75 = por %p73, %p74
      %p76 = scmp.ne.s32.totalorder %s62, %s63
      %p77 = scmp.eq.s32.totalorder %s15, 3
      %p78 = por %p76, %p77
      %p80 = scmp.ne.s32.totalorder %s63, %s79
      %p81 = scmp.eq.s32.totalorder %s15, 0
      %p82 = por %p80, %p81
      %s84 = sadd.s32 %s83, 1
      %p87 = scmp.eq.s32.totalorder %s9, 3
      %p88 = scmp.ne.s32.totalorder %s83, %s85
      %p89 = scmp.eq.s32.totalorder %s9, 0
      %p90 = por %p88, %p89
      %p91 = scmp.ne.s32.totalorder %s83, %s85
      %p92 = scmp.eq.s32.totalorder %s14, 3
      %p93 = por %p91, %p92
      %p94 = scmp.ne.s32.totalorder %s85, %s86
      %p95 = scmp.eq.s32.totalorder %s14, 0
      %p96 = por %p94, %p95
      %p97 = scmp.ne.s32.totalorder %s85, %s86
      %p98 = scmp.eq.s32.totalorder %s15, 3
      %p99 = por %p97, %p98
      %p101 = scmp.ne.s32.totalorder %s86, %s100
      %p102 = scmp.eq.s32.totalorder %s15, 0
      %p103 = por %p101, %p102
      %s104 = ssub.s32 %s16, %s28
      %p105 = scmp.eq.s32.totalorder %s104, 0
      %s107 = sadd.s32 %s106, 1
      %s108 = scalar_select %p105, %s106, %s107
      %p111 = pneg %p105
      %p112 = scmp.eq.s32.totalorder %s9, 3
      %p113 = por %p111, %p112
      %p114 = scmp.ne.s32.totalorder %s106, %s109
      %p115 = scmp.eq.s32.totalorder %s9, 0
      %p116 = por %p114, %p115
      %p117 = scmp.ne.s32.totalorder %s106, %s109
      %p118 = scmp.eq.s32.totalorder %s14, 3
      %p119 = por %p117, %p118
      %p120 = scmp.ne.s32.totalorder %s109, %s110
      %p121 = scmp.eq.s32.totalorder %s14, 0
      %p122 = por %p120, %p121
      %p123 = scmp.ne.s32.totalorder %s109, %s110
      %p124 = scmp.eq.s32.totalorder %s15, 3
      %p125 = por %p123, %p124
      %p127 = scmp.ne.s32.totalorder %s110, %s126
      %p128 = scmp.eq.s32.totalorder %s15, 0
      %p129 = por %p127, %p128
      %p130 = scmp.le.s32.totalorder 1, %s9
      %p131 = scmp.lt.s32.totalorder %s9, 5
      %p132 = pnand %p130, %p131
      %p133 = pneg %p132
      // Predicated region
      $region9: #{custom_gcn_forward.6} parent=5 // pred_check
        _
      $region10: #{custom_gcn_forward.6} parent=5 // pred_check_branch
        %135 = sbr.rel (%p132) target = $region12
      $region11: #{custom_gcn_forward.6} parent=5 // pred_region
        %s136 = ssub.s32 %s9, 1
        // Predicated region
        $region13: #{custom_gcn_forward.6} parent=11 // pred_check
          %p137 = pneg %p96
        $region14: #{custom_gcn_forward.6} parent=11 // pred_check_branch
          %139 = sbr.rel (%p137) target = $region16
        $region15: #{custom_gcn_forward.6} parent=11 // pred_region
          _
        $region16: #{custom_gcn_forward.6} parent=11 // pred_fallthru
          _
      $region12: #{custom_gcn_forward.6} parent=5 // pred_fallthru
        _
      %p140 = scmp.lt.s32.totalorder %s9, 4
      // Predicated region
      $region17: #{custom_gcn_forward.6} parent=5 // pred_check
        %p141 = pneg %p140
      $region18: #{custom_gcn_forward.6} parent=5 // pred_check_branch
        %143 = sbr.rel (%p141) target = $region20
      $region19: #{custom_gcn_forward.6} parent=5 // pred_region
        // Predicated region
        $region21: #{custom_gcn_forward.6} parent=19 // pred_check
          %p144 = pneg %p43
        $region22: #{custom_gcn_forward.6} parent=19 // pred_check_branch
          %146 = sbr.rel (%p144) target = $region24
        $region23: #{custom_gcn_forward.6} parent=19 // pred_region
          %s147 = sand.u32 %s33, 1
          %s148 = sand.u32 %s33, 1
          %s149 = smul.addr %s148, 64
          %s150 = scalar_lea.vmem [#allocation3], %s149
          %s151 = smul.u32 16, %s16
          %s152 = smul.addr %s151, 2
          %s153 = sadd.s32 %s17, %s152
          %s154 = smul.addr %s153, 4
          %s155 = scalar_lea.vmem %s0, %s154
          // Predicated region
          $region25: #{custom_gcn_forward.6} parent=23 // pred_check
            _
          $region26: #{custom_gcn_forward.6} parent=23 // pred_check_branch
            %157 = sbr.rel (0) target = $region28
          $region27: #{custom_gcn_forward.6} parent=23 // pred_region
            // Predicated region
            $region29: #{custom_gcn_forward.6} parent=27 // pred_check
              _
            $region30: #{custom_gcn_forward.6} parent=27 // pred_check_branch
              %159 = sbr.rel target = $region32
            $region31: #{custom_gcn_forward.6} parent=27 // pred_region
              // Predicated region
              $region44: #{custom_gcn_forward.6} parent=31 // pred_check
                _
              $region45: #{custom_gcn_forward.6} parent=31 // pred_check_branch
                %204 = sbr.rel (0) target = $region47
              $region46: #{custom_gcn_forward.6} parent=31 // pred_region
                loop: start=0, step=1, limit=1
                $region48: #{custom_gcn_forward.6} parent=46 // loop_pre_header
                  _
                $region49: #{custom_gcn_forward.6} parent=46 // loop_header
                  %s206 = sphi 0, %s210
                  %p207 = scmp.ge.s32.totalorder %s206, 1
                  %s211 = sphi %s155, %s155
                  %s212 = sphi %s150, %s150
                $region50: #{custom_gcn_forward.6} parent=46 // loop_header_branch
                  %209 = sbr.rel (%p207) target = $region54
                $region51: #{custom_gcn_forward.6} parent=46 // loop_body
                  _
                $region52: #{custom_gcn_forward.6} parent=46 // loop_footer
                  %s210 = sadd.s32 1, %s206
                $region53: #{custom_gcn_forward.6} parent=46 // loop_footer_branch
                  %205 = sbr.rel target = $region49
                $region54: #{custom_gcn_forward.6} parent=46 // loop_exit
                  _
                loop: start=0, step=1, limit=1
                $region55: #{custom_gcn_forward.6} parent=46 // loop_pre_header
                  _
                $region56: #{custom_gcn_forward.6} parent=46 // loop_header
                  %s215 = sphi 0, %s219
                  %p216 = scmp.ge.s32.totalorder %s215, 1
                  %s220 = sphi %s155, %s155
                  %s221 = sphi %s150, %s150
                $region57: #{custom_gcn_forward.6} parent=46 // loop_header_branch
                  %218 = sbr.rel (%p216) target = $region61
                $region58: #{custom_gcn_forward.6} parent=46 // loop_body
                  %v222 = vld [vmem:[%s220] sm:$0xf]
                  %223 = vst [vmem:[%s221] sm:$0xf] %v222
                  %v224 = vld [vmem:[%s220 + $0x8] sm:$0xf]
                  %225 = vst [vmem:[%s221 + $0x4] sm:$0xf] %v224
                  %v226 = vld [vmem:[%s220 + $0x10] sm:$0xf]
                  %227 = vst [vmem:[%s221 + $0x8] sm:$0xf] %v226
                  %v228 = vld [vmem:[%s220 + $0x18] sm:$0xf]
                  %229 = vst [vmem:[%s221 + $0xc] sm:$0xf] %v228
                  %v230 = vld [vmem:[%s220 + $0x20] sm:$0xf]
                  %231 = vst [vmem:[%s221 + $0x10] sm:$0xf] %v230
                  %v232 = vld [vmem:[%s220 + $0x28] sm:$0xf]
                  %233 = vst [vmem:[%s221 + $0x14] sm:$0xf] %v232
                  %v234 = vld [vmem:[%s220 + $0x30] sm:$0xf]
                  %235 = vst [vmem:[%s221 + $0x18] sm:$0xf] %v234
                  %v236 = vld [vmem:[%s220 + $0x38] sm:$0xf]
                  %237 = vst [vmem:[%s221 + $0x1c] sm:$0xf] %v236
                  %v238 = vld [vmem:[%s220 + $0x40] sm:$0xf]
                  %239 = vst [vmem:[%s221 + $0x20] sm:$0xf] %v238
                  %v240 = vld [vmem:[%s220 + $0x48] sm:$0xf]
                  %241 = vst [vmem:[%s221 + $0x24] sm:$0xf] %v240
                  %v242 = vld [vmem:[%s220 + $0x50] sm:$0xf]
                  %243 = vst [vmem:[%s221 + $0x28] sm:$0xf] %v242
                  %v244 = vld [vmem:[%s220 + $0x58] sm:$0xf]
                  %245 = vst [vmem:[%s221 + $0x2c] sm:$0xf] %v244
                  %v246 = vld [vmem:[%s220 + $0x60] sm:$0xf]
                  %247 = vst [vmem:[%s221 + $0x30] sm:$0xf] %v246
                  %v248 = vld [vmem:[%s220 + $0x68] sm:$0xf]
                  %249 = vst [vmem:[%s221 + $0x34] sm:$0xf] %v248
                  %v250 = vld [vmem:[%s220 + $0x70] sm:$0xf]
                  %251 = vst [vmem:[%s221 + $0x38] sm:$0xf] %v250
                  %v252 = vld [vmem:[%s220 + $0x78] sm:$0xf]
                  %253 = vst [vmem:[%s221 + $0x3c] sm:$0xf] %v252
                $region59: #{custom_gcn_forward.6} parent=46 // loop_footer
                  %s219 = sadd.s32 1, %s215
                $region60: #{custom_gcn_forward.6} parent=46 // loop_footer_branch
                  %214 = sbr.rel target = $region56
                $region61: #{custom_gcn_forward.6} parent=46 // loop_exit
                  _
              $region47: #{custom_gcn_forward.6} parent=31 // pred_fallthru
                _
            $region32: #{custom_gcn_forward.6} parent=27 // pred_fallthru
              _
            // Predicated region
            $region33: #{custom_gcn_forward.6} parent=27 // pred_check
              _
            $region34: #{custom_gcn_forward.6} parent=27 // pred_check_branch
              %161 = sbr.rel (0) target = $region36
            $region35: #{custom_gcn_forward.6} parent=27 // pred_region
              loop: start=0, step=1, limit=1
              $region37: #{custom_gcn_forward.6} parent=35 // loop_pre_header
                _
              $region38: #{custom_gcn_forward.6} parent=35 // loop_header
                %s164 = sphi 0, %s168
                %p165 = scmp.ge.s32.totalorder %s164, 1
                %s169 = sphi %s155, %s155
                %s170 = sphi %s150, %s150
              $region39: #{custom_gcn_forward.6} parent=35 // loop_header_branch
                %167 = sbr.rel (%p165) target = $region43
              $region40: #{custom_gcn_forward.6} parent=35 // loop_body
                %v171 = vld [vmem:[%s169] sm:$0xf]
                %172 = vst [vmem:[%s170] sm:$0xf] %v171
                %v173 = vld [vmem:[%s169 + $0x8] sm:$0xf]
                %174 = vst [vmem:[%s170 + $0x4] sm:$0xf] %v173
                %v175 = vld [vmem:[%s169 + $0x10] sm:$0xf]
                %176 = vst [vmem:[%s170 + $0x8] sm:$0xf] %v175
                %v177 = vld [vmem:[%s169 + $0x18] sm:$0xf]
                %178 = vst [vmem:[%s170 + $0xc] sm:$0xf] %v177
                %v179 = vld [vmem:[%s169 + $0x20] sm:$0xf]
                %180 = vst [vmem:[%s170 + $0x10] sm:$0xf] %v179
                %v181 = vld [vmem:[%s169 + $0x28] sm:$0xf]
                %182 = vst [vmem:[%s170 + $0x14] sm:$0xf] %v181
                %v183 = vld [vmem:[%s169 + $0x30] sm:$0xf]
                %184 = vst [vmem:[%s170 + $0x18] sm:$0xf] %v183
                %v185 = vld [vmem:[%s169 + $0x38] sm:$0xf]
                %186 = vst [vmem:[%s170 + $0x1c] sm:$0xf] %v185
                %v187 = vld [vmem:[%s169 + $0x40] sm:$0xf]
                %188 = vst [vmem:[%s170 + $0x20] sm:$0xf] %v187
                %v189 = vld [vmem:[%s169 + $0x48] sm:$0xf]
                %190 = vst [vmem:[%s170 + $0x24] sm:$0xf] %v189
                %v191 = vld [vmem:[%s169 + $0x50] sm:$0xf]
                %192 = vst [vmem:[%s170 + $0x28] sm:$0xf] %v191
                %v193 = vld [vmem:[%s169 + $0x58] sm:$0xf]
                %194 = vst [vmem:[%s170 + $0x2c] sm:$0xf] %v193
                %v195 = vld [vmem:[%s169 + $0x60] sm:$0xf]
                %196 = vst [vmem:[%s170 + $0x30] sm:$0xf] %v195
                %v197 = vld [vmem:[%s169 + $0x68] sm:$0xf]
                %198 = vst [vmem:[%s170 + $0x34] sm:$0xf] %v197
                %v199 = vld [vmem:[%s169 + $0x70] sm:$0xf]
                %200 = vst [vmem:[%s170 + $0x38] sm:$0xf] %v199
                %v201 = vld [vmem:[%s169 + $0x78] sm:$0xf]
                %202 = vst [vmem:[%s170 + $0x3c] sm:$0xf] %v201
              $region41: #{custom_gcn_forward.6} parent=35 // loop_footer
                %s168 = sadd.s32 1, %s164
              $region42: #{custom_gcn_forward.6} parent=35 // loop_footer_branch
                %163 = sbr.rel target = $region38
              $region43: #{custom_gcn_forward.6} parent=35 // loop_exit
                _
            $region36: #{custom_gcn_forward.6} parent=27 // pred_fallthru
              _
          $region28: #{custom_gcn_forward.6} parent=23 // pred_fallthru
            _
          %254 = vnop
        $region24: #{custom_gcn_forward.6} parent=19 // pred_fallthru
          _
        // Predicated region
        $region62: #{custom_gcn_forward.6} parent=19 // pred_check
          %p255 = pneg %p69
        $region63: #{custom_gcn_forward.6} parent=19 // pred_check_branch
          %257 = sbr.rel (%p255) target = $region65
        $region64: #{custom_gcn_forward.6} parent=19 // pred_region
          %s258 = smul.u32 16, %s17
          %p259 = scmp.lt.s32.totalorder %s258, 31
          %s260 = scalar_select %p259, %s258, 31
          %s261 = smul.addr %s260, 4
          %s262 = scalar_lea.vmem %s1, %s261
          %s263 = smul.u32 16, %s17
        $region65: #{custom_gcn_forward.6} parent=19 // pred_fallthru
          _
      $region20: #{custom_gcn_forward.6} parent=5 // pred_fallthru
        _
      %p264 = scmp.le.s32.totalorder 1, %s9
      %p265 = scmp.lt.s32.totalorder %s9, 5
      %p266 = pnand %p264, %p265
      %p267 = pneg %p266
      // Predicated region
      $region66: #{custom_gcn_forward.6} parent=5 // pred_check
        _
      $region67: #{custom_gcn_forward.6} parent=5 // pred_check_branch
        %269 = sbr.rel (%p266) target = $region69
      $region68: #{custom_gcn_forward.6} parent=5 // pred_region
        %s270 = ssub.s32 %s9, 1
        %s271 = sand.u32 %s36, 1
        %s272 = sand.u32 %s36, 1
        %s273 = smul.addr %s272, 64
        %s274 = scalar_lea.vmem [#allocation3], %s273
        // Predicated region
        $region70: #{custom_gcn_forward.6} parent=68 // pred_check
          %p275 = pneg %p49
        $region71: #{custom_gcn_forward.6} parent=68 // pred_check_branch
          %277 = sbr.rel (%p275) target = $region73
        $region72: #{custom_gcn_forward.6} parent=68 // pred_region
          _
        $region73: #{custom_gcn_forward.6} parent=68 // pred_fallthru
          _
        %s278 = sand.u32 %s36, 1
        %s279 = sand.u32 %s36, 1
        %s280 = smul.addr %s279, 64
        %s281 = scalar_lea.vmem [#allocation3], %s280
        %p282 = pneg %p49
        %p283 = pneg %p46
        %s284 = smul.u32 16, %s19
        %p285 = scmp.lt.s32.totalorder %s284, 31
        %s286 = scalar_select %p285, %s284, 31
        %s287 = smul.addr %s286, 4
        %s288 = scalar_lea.vmem %s1, %s287
        %p289 = pneg %p75
        %p290 = pneg %p72
        %p291 = pneg %p96
        %p292 = pneg %p93
        %p293 = pneg %p122
        %p294 = pneg %p119
        %s295 = smul.u32 16, %s18
        %p296 = scmp.lt.s32.totalorder %s295, 31
        %s297 = scalar_select %p296, %s295, 31
        %s298 = smul.addr %s297, 4
        %s299 = scalar_lea.vmem %s3, %s298
        %s300 = smul.u32 16, %s18
        %s301 = smul.u32 16, %s19
        %p302 = scmp.lt.s32.totalorder %s301, 31
        %s303 = scalar_select %p302, %s301, 31
        %s304 = smul.addr %s303, 4
        %s305 = scalar_lea.vmem %s1, %s304
        %s306 = smul.u32 16, %s19
        %s307 = smul.u32 16, %s18
        %p308 = scmp.lt.s32.totalorder %s307, 31
        %s309 = scalar_select %p308, %s307, 31
        %s310 = smul.addr %s309, 4
        %s311 = scalar_lea.vmem %s3, %s310
        %s312 = smul.u32 16, %s18
        %p314 = scmp.eq.s32.totalorder %s19, 0
        // Predicated region
        $region74: #{custom_gcn_forward.6} parent=68 // pred_check
          %p315 = pneg %p314
        $region75: #{custom_gcn_forward.6} parent=68 // pred_check_branch
          %317 = sbr.rel (%p315) target = $region77
        $region76: #{custom_gcn_forward.6} parent=68 // pred_region
          %318 = vst [vmem:[#allocation2] sm:$0xff] 0.0
          %319 = vst [vmem:[#allocation2 + $0x8] sm:$0xff] 0.0
          %320 = vst [vmem:[#allocation2 + $0x10] sm:$0xff] 0.0
          %321 = vst [vmem:[#allocation2 + $0x18] sm:$0xff] 0.0
          %322 = vst [vmem:[#allocation2 + $0x20] sm:$0xff] 0.0
          %323 = vst [vmem:[#allocation2 + $0x28] sm:$0xff] 0.0
          %324 = vst [vmem:[#allocation2 + $0x30] sm:$0xff] 0.0
          %325 = vst [vmem:[#allocation2 + $0x38] sm:$0xff] 0.0
          %326 = vst [vmem:[#allocation2 + $0x40] sm:$0xff] 0.0
          %327 = vst [vmem:[#allocation2 + $0x48] sm:$0xff] 0.0
          %328 = vst [vmem:[#allocation2 + $0x50] sm:$0xff] 0.0
          %329 = vst [vmem:[#allocation2 + $0x58] sm:$0xff] 0.0
          %330 = vst [vmem:[#allocation2 + $0x60] sm:$0xff] 0.0
          %331 = vst [vmem:[#allocation2 + $0x68] sm:$0xff] 0.0
          %332 = vst [vmem:[#allocation2 + $0x70] sm:$0xff] 0.0
          %333 = vst [vmem:[#allocation2 + $0x78] sm:$0xff] 0.0
        $region77: #{custom_gcn_forward.6} parent=68 // pred_fallthru
          _
        %v334 = vld [vmem:[#allocation2] sm:$0xff]
        %v335 = vld [vmem:[#allocation2 + $0x8] sm:$0xff]
        %v336 = vld [vmem:[#allocation2 + $0x10] sm:$0xff]
        %v337 = vld [vmem:[#allocation2 + $0x18] sm:$0xff]
        %v338 = vld [vmem:[#allocation2 + $0x20] sm:$0xff]
        %v339 = vld [vmem:[#allocation2 + $0x28] sm:$0xff]
        %v340 = vld [vmem:[#allocation2 + $0x30] sm:$0xff]
        %v341 = vld [vmem:[#allocation2 + $0x38] sm:$0xff]
        %v342 = vld [vmem:[#allocation2 + $0x40] sm:$0xff]
        %v343 = vld [vmem:[#allocation2 + $0x48] sm:$0xff]
        %v344 = vld [vmem:[#allocation2 + $0x50] sm:$0xff]
        %v345 = vld [vmem:[#allocation2 + $0x58] sm:$0xff]
        %v346 = vld [vmem:[#allocation2 + $0x60] sm:$0xff]
        %v347 = vld [vmem:[#allocation2 + $0x68] sm:$0xff]
        %v348 = vld [vmem:[#allocation2 + $0x70] sm:$0xff]
        %v349 = vld [vmem:[#allocation2 + $0x78] sm:$0xff]
        %v350 = vld [vmem:[%s274] sm:$0xf]
        %v351 = vld [vmem:[%s274 + $0x4] sm:$0xf]
        %v352 = vld [vmem:[%s274 + $0x8] sm:$0xf]
        %v353 = vld [vmem:[%s274 + $0xc] sm:$0xf]
        %v354 = vld [vmem:[%s274 + $0x10] sm:$0xf]
        %v355 = vld [vmem:[%s274 + $0x14] sm:$0xf]
        %v356 = vld [vmem:[%s274 + $0x18] sm:$0xf]
        %v357 = vld [vmem:[%s274 + $0x1c] sm:$0xf]
        %v358 = vld [vmem:[%s274 + $0x20] sm:$0xf]
        %v359 = vld [vmem:[%s274 + $0x24] sm:$0xf]
        %v360 = vld [vmem:[%s274 + $0x28] sm:$0xf]
        %v361 = vld [vmem:[%s274 + $0x2c] sm:$0xf]
        %v362 = vld [vmem:[%s274 + $0x30] sm:$0xf]
        %v363 = vld [vmem:[%s274 + $0x34] sm:$0xf]
        %v364 = vld [vmem:[%s274 + $0x38] sm:$0xf]
        %v365 = vld [vmem:[%s274 + $0x3c] sm:$0xf]
        %v366 = vld [vmem:[%s305] sm:$0xf]
        %v367 = vld [vmem:[%s305 + $0x4] sm:$0xf]
        %v368 = vld [vmem:[%s305 + $0x8] sm:$0xf]
        %v369 = vld [vmem:[%s305 + $0xc] sm:$0xf]
        %v370 = vld [vmem:[%s305 + $0x10] sm:$0xf]
        %v371 = vld [vmem:[%s305 + $0x14] sm:$0xf]
        %v372 = vld [vmem:[%s305 + $0x18] sm:$0xf]
        %v373 = vld [vmem:[%s305 + $0x1c] sm:$0xf]
        %v374 = vld [vmem:[%s305 + $0x20] sm:$0xf]
        %v375 = vld [vmem:[%s305 + $0x24] sm:$0xf]
        %v376 = vld [vmem:[%s305 + $0x28] sm:$0xf]
        %v377 = vld [vmem:[%s305 + $0x2c] sm:$0xf]
        %v378 = vld [vmem:[%s305 + $0x30] sm:$0xf]
        %v379 = vld [vmem:[%s305 + $0x34] sm:$0xf]
        %v380 = vld [vmem:[%s305 + $0x38] sm:$0xf]
        %v381 = vld [vmem:[%s305 + $0x3c] sm:$0xf]
        %v398 = vunpack.c.l.b16 %v350
        %v399 = vunpack.c.l.b16 %v351
        %v400 = vunpack.c.l.b16 %v352
        %v401 = vunpack.c.l.b16 %v353
        %v402 = vunpack.c.l.b16 %v354
        %v403 = vunpack.c.l.b16 %v355
        %v404 = vunpack.c.l.b16 %v356
        %v405 = vunpack.c.l.b16 %v357
        %v406 = vunpack.c.l.b16 %v358
        %v407 = vunpack.c.l.b16 %v359
        %v408 = vunpack.c.l.b16 %v360
        %v409 = vunpack.c.l.b16 %v361
        %v410 = vunpack.c.l.b16 %v362
        %v411 = vunpack.c.l.b16 %v363
        %v412 = vunpack.c.l.b16 %v364
        %v413 = vunpack.c.l.b16 %v365
        %v414 = vpack.c.b16 %v399, %v398
        %v415 = vpack.c.b16 %v401, %v400
        %v416 = vpack.c.b16 %v403, %v402
        %v417 = vpack.c.b16 %v405, %v404
        %v418 = vpack.c.b16 %v407, %v406
        %v419 = vpack.c.b16 %v409, %v408
        %v420 = vpack.c.b16 %v411, %v410
        %v421 = vpack.c.b16 %v413, %v412
        %v446 = vunpack.c.l.b16 %v366
        %v447 = vunpack.c.l.b16 %v367
        %v448 = vunpack.c.l.b16 %v368
        %v449 = vunpack.c.l.b16 %v369
        %v450 = vunpack.c.l.b16 %v370
        %v451 = vunpack.c.l.b16 %v371
        %v452 = vunpack.c.l.b16 %v372
        %v453 = vunpack.c.l.b16 %v373
        %v454 = vunpack.c.l.b16 %v374
        %v455 = vunpack.c.l.b16 %v375
        %v456 = vunpack.c.l.b16 %v376
        %v457 = vunpack.c.l.b16 %v377
        %v458 = vunpack.c.l.b16 %v378
        %v459 = vunpack.c.l.b16 %v379
        %v460 = vunpack.c.l.b16 %v380
        %v461 = vunpack.c.l.b16 %v381
        %v462 = vpack.c.b16 %v447, %v446
        %v463 = vpack.c.b16 %v449, %v448
        %v464 = vpack.c.b16 %v451, %v450
        %v465 = vpack.c.b16 %v453, %v452
        %v466 = vpack.c.b16 %v455, %v454
        %v467 = vpack.c.b16 %v457, %v456
        %v468 = vpack.c.b16 %v459, %v458
        %v469 = vpack.c.b16 %v461, %v460
        %478 = vmatprep.subr.bf16.mxu0 0
        %479 = vmatpush1.bf16.msra.mxu0 %v462
        %480 = vmatprep.subr.bf16.mxu0 0
        %481 = vmatpush1.bf16.msra.mxu0 %v463
        %482 = vmatprep.subr.bf16.mxu0 0
        %483 = vmatpush1.bf16.msra.mxu0 %v464
        %484 = vmatprep.subr.bf16.mxu0 0
        %485 = vmatpush1.bf16.msra.mxu0 %v465
        %486 = vmatprep.subr.bf16.mxu0 0
        %487 = vmatpush1.bf16.msra.mxu0 %v466
        %488 = vmatprep.subr.bf16.mxu0 0
        %489 = vmatpush1.bf16.msra.mxu0 %v467
        %490 = vmatprep.subr.bf16.mxu0 0
        %491 = vmatpush1.bf16.msra.mxu0 %v468
        %492 = vmatprep.subr.bf16.mxu0 0
        %493 = vmatpush1.bf16.msra.mxu0 %v469
        %494 = vmatprep.subr.bf16.mxu0 0
        %495 = vmatpush1.bf16.msra.mxu0 0
        %496 = vmatprep.subr.bf16.mxu0 0
        %497 = vmatpush1.bf16.msra.mxu0 0
        %498 = vmatprep.subr.bf16.mxu0 0
        %499 = vmatpush1.bf16.msra.mxu0 0
        %500 = vmatprep.subr.bf16.mxu0 0
        %501 = vmatpush1.bf16.msra.mxu0 0
        %502 = vmatprep.subr.bf16.mxu0 0
        %503 = vmatpush1.bf16.msra.mxu0 0
        %504 = vmatprep.subr.bf16.mxu0 0
        %505 = vmatpush1.bf16.msra.mxu0 0
        %506 = vmatprep.subr.bf16.mxu0 0
        %507 = vmatpush1.bf16.msra.mxu0 0
        %508 = vmatprep.subr.bf16.mxu0 0
        %509 = vmatpush1.bf16.msra.mxu0 0
        %510 = vmatprep.mubr.bf16.mxu0 0
        %511 = vmatmul.mubr.bf16.gmra.mrb[0].mxu0 %v414
        %v512 = vpop.f32.mrb[0].mxu0
        %v513 = vadd.f32 0.0, %v512
        %v514 = vpop.f32.mrb[0].mxu0
        %v515 = vpop.f32.mrb[0].mxu0
        %v516 = vadd.f32 0.0, %v515
        %v517 = vpop.f32.mrb[0].mxu0
        %518 = vmatprep.mubr.bf16.mxu0 0
        %519 = vmatmul.mubr.bf16.gmra.mrb[0].mxu0 %v415
        %v520 = vpop.f32.mrb[0].mxu0
        %v521 = vadd.f32 0.0, %v520
        %v522 = vpop.f32.mrb[0].mxu0
        %v523 = vpop.f32.mrb[0].mxu0
        %v524 = vadd.f32 0.0, %v523
        %v525 = vpop.f32.mrb[0].mxu0
        %526 = vmatprep.mubr.bf16.mxu0 0
        %527 = vmatmul.mubr.bf16.gmra.mrb[0].mxu0 %v416
        %v528 = vpop.f32.mrb[0].mxu0
        %v529 = vadd.f32 0.0, %v528
        %v530 = vpop.f32.mrb[0].mxu0
        %v531 = vpop.f32.mrb[0].mxu0
        %v532 = vadd.f32 0.0, %v531
        %v533 = vpop.f32.mrb[0].mxu0
        %534 = vmatprep.mubr.bf16.mxu0 0
        %535 = vmatmul.mubr.bf16.gmra.mrb[0].mxu0 %v417
        %v536 = vpop.f32.mrb[0].mxu0
        %v537 = vadd.f32 0.0, %v536
        %v538 = vpop.f32.mrb[0].mxu0
        %v539 = vpop.f32.mrb[0].mxu0
        %v540 = vadd.f32 0.0, %v539
        %v541 = vpop.f32.mrb[0].mxu0
        %542 = vmatprep.mubr.bf16.mxu0 0
        %543 = vmatmul.mubr.bf16.gmra.mrb[0].mxu0 %v418
        %v544 = vpop.f32.mrb[0].mxu0
        %v545 = vadd.f32 0.0, %v544
        %v546 = vpop.f32.mrb[0].mxu0
        %v547 = vpop.f32.mrb[0].mxu0
        %v548 = vadd.f32 0.0, %v547
        %v549 = vpop.f32.mrb[0].mxu0
        %550 = vmatprep.mubr.bf16.mxu0 0
        %551 = vmatmul.mubr.bf16.gmra.mrb[0].mxu0 %v419
        %v552 = vpop.f32.mrb[0].mxu0
        %v553 = vadd.f32 0.0, %v552
        %v554 = vpop.f32.mrb[0].mxu0
        %v555 = vpop.f32.mrb[0].mxu0
        %v556 = vadd.f32 0.0, %v555
        %v557 = vpop.f32.mrb[0].mxu0
        %558 = vmatprep.mubr.bf16.mxu0 0
        %559 = vmatmul.mubr.bf16.gmra.mrb[0].mxu0 %v420
        %v560 = vpop.f32.mrb[0].mxu0
        %v561 = vadd.f32 0.0, %v560
        %v562 = vpop.f32.mrb[0].mxu0
        %v563 = vpop.f32.mrb[0].mxu0
        %v564 = vadd.f32 0.0, %v563
        %v565 = vpop.f32.mrb[0].mxu0
        %566 = vmatprep.mubr.bf16.mxu0 0
        %567 = vmatmul.mubr.bf16.gmra.mrb[0].mxu0 %v421
        %v568 = vpop.f32.mrb[0].mxu0
        %v569 = vadd.f32 0.0, %v568
        %v570 = vpop.f32.mrb[0].mxu0
        %v571 = vpop.f32.mrb[0].mxu0
        %v572 = vadd.f32 0.0, %v571
        %v573 = vpop.f32.mrb[0].mxu0
        %574 = vdwg.mxu0
        %v575 = vadd.f32 %v334, %v513
        %v576 = vadd.f32 %v335, %v516
        %v577 = vadd.f32 %v336, %v521
        %v578 = vadd.f32 %v337, %v524
        %v579 = vadd.f32 %v338, %v529
        %v580 = vadd.f32 %v339, %v532
        %v581 = vadd.f32 %v340, %v537
        %v582 = vadd.f32 %v341, %v540
        %v583 = vadd.f32 %v342, %v545
        %v584 = vadd.f32 %v343, %v548
        %v585 = vadd.f32 %v344, %v553
        %v586 = vadd.f32 %v345, %v556
        %v587 = vadd.f32 %v346, %v561
        %v588 = vadd.f32 %v347, %v564
        %v589 = vadd.f32 %v348, %v569
        %v590 = vadd.f32 %v349, %v572
        %591 = vst [vmem:[#allocation2] sm:$0xff] %v575
        %592 = vst [vmem:[#allocation2 + $0x8] sm:$0xff] %v576
        %593 = vst [vmem:[#allocation2 + $0x10] sm:$0xff] %v577
        %594 = vst [vmem:[#allocation2 + $0x18] sm:$0xff] %v578
        %595 = vst [vmem:[#allocation2 + $0x20] sm:$0xff] %v579
        %596 = vst [vmem:[#allocation2 + $0x28] sm:$0xff] %v580
        %597 = vst [vmem:[#allocation2 + $0x30] sm:$0xff] %v581
        %598 = vst [vmem:[#allocation2 + $0x38] sm:$0xff] %v582
        %599 = vst [vmem:[#allocation2 + $0x40] sm:$0xff] %v583
        %600 = vst [vmem:[#allocation2 + $0x48] sm:$0xff] %v584
        %601 = vst [vmem:[#allocation2 + $0x50] sm:$0xff] %v585
        %602 = vst [vmem:[#allocation2 + $0x58] sm:$0xff] %v586
        %603 = vst [vmem:[#allocation2 + $0x60] sm:$0xff] %v587
        %604 = vst [vmem:[#allocation2 + $0x68] sm:$0xff] %v588
        %605 = vst [vmem:[#allocation2 + $0x70] sm:$0xff] %v589
        %606 = vst [vmem:[#allocation2 + $0x78] sm:$0xff] %v590
        %p607 = scmp.eq.s32.totalorder %s19, 1
        // Predicated region
        $region78: #{custom_gcn_forward.6} parent=68 // pred_check
          %p608 = pneg %p607
        $region79: #{custom_gcn_forward.6} parent=68 // pred_check_branch
          %610 = sbr.rel (%p608) target = $region81
        $region80: #{custom_gcn_forward.6} parent=68 // pred_region
          %v611 = vld [vmem:[#allocation2] sm:$0xff]
          %v612 = vld [vmem:[#allocation2 + $0x8] sm:$0xff]
          %v613 = vld [vmem:[#allocation2 + $0x10] sm:$0xff]
          %v614 = vld [vmem:[#allocation2 + $0x18] sm:$0xff]
          %v615 = vld [vmem:[#allocation2 + $0x20] sm:$0xff]
          %v616 = vld [vmem:[#allocation2 + $0x28] sm:$0xff]
          %v617 = vld [vmem:[#allocation2 + $0x30] sm:$0xff]
          %v618 = vld [vmem:[#allocation2 + $0x38] sm:$0xff]
          %v619 = vld [vmem:[#allocation2 + $0x40] sm:$0xff]
          %v620 = vld [vmem:[#allocation2 + $0x48] sm:$0xff]
          %v621 = vld [vmem:[#allocation2 + $0x50] sm:$0xff]
          %v622 = vld [vmem:[#allocation2 + $0x58] sm:$0xff]
          %v623 = vld [vmem:[#allocation2 + $0x60] sm:$0xff]
          %v624 = vld [vmem:[#allocation2 + $0x68] sm:$0xff]
          %v625 = vld [vmem:[#allocation2 + $0x70] sm:$0xff]
          %v626 = vld [vmem:[#allocation2 + $0x78] sm:$0xff]
          %v627 = vld [vmem:[%s2] sm:$0x1]
          %v629 = vlaneseq
          %v630 = vshrl.u32 %v629, 7
          %v631 = vsub.s32 0, %v630
          %v632 = vrot.slane %v627, %v631
          %v634 = vadd.f32 %v611, %v632
          %v635 = vadd.f32 %v612, %v632
          %v636 = vadd.f32 %v613, %v632
          %v637 = vadd.f32 %v614, %v632
          %v638 = vadd.f32 %v615, %v632
          %v639 = vadd.f32 %v616, %v632
          %v640 = vadd.f32 %v617, %v632
          %v641 = vadd.f32 %v618, %v632
          %v642 = vadd.f32 %v619, %v632
          %v643 = vadd.f32 %v620, %v632
          %v644 = vadd.f32 %v621, %v632
          %v645 = vadd.f32 %v622, %v632
          %v646 = vadd.f32 %v623, %v632
          %v647 = vadd.f32 %v624, %v632
          %v648 = vadd.f32 %v625, %v632
          %v649 = vadd.f32 %v626, %v632
          %v650 = vmax.f32 %v634, 0.0
          %v651 = vmax.f32 %v635, 0.0
          %v652 = vmax.f32 %v636, 0.0
          %v653 = vmax.f32 %v637, 0.0
          %v654 = vmax.f32 %v638, 0.0
          %v655 = vmax.f32 %v639, 0.0
          %v656 = vmax.f32 %v640, 0.0
          %v657 = vmax.f32 %v641, 0.0
          %v658 = vmax.f32 %v642, 0.0
          %v659 = vmax.f32 %v643, 0.0
          %v660 = vmax.f32 %v644, 0.0
          %v661 = vmax.f32 %v645, 0.0
          %v662 = vmax.f32 %v646, 0.0
          %v663 = vmax.f32 %v647, 0.0
          %v664 = vmax.f32 %v648, 0.0
          %v665 = vmax.f32 %v649, 0.0
          %v666 = vpack.c.bf16 %v651, %v650
          %v667 = vpack.c.bf16 %v653, %v652
          %v668 = vpack.c.bf16 %v655, %v654
          %v669 = vpack.c.bf16 %v657, %v656
          %v670 = vpack.c.bf16 %v659, %v658
          %v671 = vpack.c.bf16 %v661, %v660
          %v672 = vpack.c.bf16 %v663, %v662
          %v673 = vpack.c.bf16 %v665, %v664
          %v682 = vunpack.c.l.b16 %v666
          %v683 = vunpack.c.h.b16 %v666
          %v684 = vunpack.c.l.b16 %v667
          %v685 = vunpack.c.h.b16 %v667
          %v686 = vunpack.c.l.b16 %v668
          %v687 = vunpack.c.h.b16 %v668
          %v688 = vunpack.c.l.b16 %v669
          %v689 = vunpack.c.h.b16 %v669
          %v690 = vunpack.c.l.b16 %v670
          %v691 = vunpack.c.h.b16 %v670
          %v692 = vunpack.c.l.b16 %v671
          %v693 = vunpack.c.h.b16 %v671
          %v694 = vunpack.c.l.b16 %v672
          %v695 = vunpack.c.h.b16 %v672
          %v696 = vunpack.c.l.b16 %v673
          %v697 = vunpack.c.h.b16 %v673
          %v698 = vpack.c.b16 %v682, %v682
          %v699 = vpack.c.b16 %v683, %v683
          %v700 = vpack.c.b16 %v684, %v684
          %v701 = vpack.c.b16 %v685, %v685
          %v702 = vpack.c.b16 %v686, %v686
          %v703 = vpack.c.b16 %v687, %v687
          %v704 = vpack.c.b16 %v688, %v688
          %v705 = vpack.c.b16 %v689, %v689
          %v706 = vpack.c.b16 %v690, %v690
          %v707 = vpack.c.b16 %v691, %v691
          %v708 = vpack.c.b16 %v692, %v692
          %v709 = vpack.c.b16 %v693, %v693
          %v710 = vpack.c.b16 %v694, %v694
          %v711 = vpack.c.b16 %v695, %v695
          %v712 = vpack.c.b16 %v696, %v696
          %v713 = vpack.c.b16 %v697, %v697
          %730 = vst [vmem:[%s311] sm:$0xf] %v698
          %731 = vst [vmem:[%s311 + $0x4] sm:$0xf] %v699
          %732 = vst [vmem:[%s311 + $0x8] sm:$0xf] %v700
          %733 = vst [vmem:[%s311 + $0xc] sm:$0xf] %v701
          %734 = vst [vmem:[%s311 + $0x10] sm:$0xf] %v702
          %735 = vst [vmem:[%s311 + $0x14] sm:$0xf] %v703
          %736 = vst [vmem:[%s311 + $0x18] sm:$0xf] %v704
          %737 = vst [vmem:[%s311 + $0x1c] sm:$0xf] %v705
          %738 = vst [vmem:[%s311 + $0x20] sm:$0xf] %v706
          %739 = vst [vmem:[%s311 + $0x24] sm:$0xf] %v707
          %740 = vst [vmem:[%s311 + $0x28] sm:$0xf] %v708
          %741 = vst [vmem:[%s311 + $0x2c] sm:$0xf] %v709
          %742 = vst [vmem:[%s311 + $0x30] sm:$0xf] %v710
          %743 = vst [vmem:[%s311 + $0x34] sm:$0xf] %v711
          %744 = vst [vmem:[%s311 + $0x38] sm:$0xf] %v712
          %745 = vst [vmem:[%s311 + $0x3c] sm:$0xf] %v713
        $region81: #{custom_gcn_forward.6} parent=68 // pred_fallthru
          _
        %s746 = smul.u32 16, %s18
        %p747 = scmp.lt.s32.totalorder %s746, 31
        %s748 = scalar_select %p747, %s746, 31
        %s749 = smul.addr %s748, 4
        %s750 = scalar_lea.vmem %s3, %s749
        // Predicated region
        $region82: #{custom_gcn_forward.6} parent=68 // pred_check
          %p751 = pneg %p119
        $region83: #{custom_gcn_forward.6} parent=68 // pred_check_branch
          %753 = sbr.rel (%p751) target = $region85
        $region84: #{custom_gcn_forward.6} parent=68 // pred_region
          %s754 = smul.u32 16, %s18
        $region85: #{custom_gcn_forward.6} parent=68 // pred_fallthru
          _
      $region69: #{custom_gcn_forward.6} parent=5 // pred_fallthru
        _
      %p755 = scmp.le.s32.totalorder 2, %s9
      // Predicated region
      $region86: #{custom_gcn_forward.6} parent=5 // pred_check
        %p756 = pneg %p755
      $region87: #{custom_gcn_forward.6} parent=5 // pred_check_branch
        %758 = sbr.rel (%p756) target = $region89
      $region88: #{custom_gcn_forward.6} parent=5 // pred_region
        %s759 = ssub.s32 %s9, 2
        // Predicated region
        $region90: #{custom_gcn_forward.6} parent=88 // pred_check
          %p760 = pneg %p125
        $region91: #{custom_gcn_forward.6} parent=88 // pred_check_branch
          %762 = sbr.rel (%p760) target = $region93
        $region92: #{custom_gcn_forward.6} parent=88 // pred_region
          %s763 = smul.u32 16, %s20
          %p764 = scmp.lt.s32.totalorder %s763, 31
          %s765 = scalar_select %p764, %s763, 31
          %s766 = smul.addr %s765, 4
          %s767 = scalar_lea.vmem %s3, %s766
        $region93: #{custom_gcn_forward.6} parent=88 // pred_fallthru
          _
      $region89: #{custom_gcn_forward.6} parent=5 // pred_fallthru
        _
    $region6: #{custom_gcn_forward.6} parent=1 // loop_footer
      %s13 = sadd.s32 1, %s9
    $region7: #{custom_gcn_forward.6} parent=1 // loop_footer_branch
      %8 = sbr.rel target = $region3
    $region8: #{custom_gcn_forward.6} parent=1 // loop_exit
      _

// kernel: custom_gcn_forward.8
$region0: #{custom_gcn_forward.8}
  #allocation0 [shape = 'u32[]', space=smem, size = 0x4, offset = 0x4, fixed_abs, tag = 'smem constant byte address 0x4 - core index']
  #allocation1 [shape = 'u32[144,128]{1,0:T(1,128)}', space=vmem, size = 0x12000, scoped, tag = 'internal scratch']
  #allocation2 [shape = 'f32[128,128]{1,0:T(8,128)}', space=vmem, size = 0x10000, scoped, tag = 'scratch operand']
  %s0 = inlined_call_operand.vmem [shape: bf16[256,256], index: 0, kind: input, shape index: {}]
  %s1 = inlined_call_operand.vmem [shape: bf16[256,128], index: 1, kind: input, shape index: {}]
  %s2 = inlined_call_operand.vmem [shape: f32[1,128], index: 2, kind: input, shape index: {}]
  %s3 = inlined_call_operand.vmem [shape: bf16[256,128], index: 3, kind: output, shape index: {}]
  %s4 = sld [smem:[#allocation0]]
  $region94: #{custom_gcn_forward.8} parent=0
    _
  %s6 = ssub.s32 1, %s4
  %s7 = scalar_select 0, %s6, %s4
  $region1: #{custom_gcn_forward.8} parent=0
    #allocation3 [shape = 'u8[65536]{0}', space=vmem, size = 0x10000, scoped, tag = 'input window, operand 0']
    loop: start=0, step=1, limit=6
    $region2: #{custom_gcn_forward.8} parent=1 // loop_pre_header
      _
    $region3: #{custom_gcn_forward.8} parent=1 // loop_header
      %s9 = sphi 0, %s13
      %p10 = scmp.ge.s32.totalorder %s9, 6
      %s16 = sphi 0, %s28
      %s17 = sphi 0, %s24
      %s18 = sphi 0, %s16
      %s19 = sphi 0, %s17
      %s20 = sphi 0, %s18
      %s21 = sphi 0, %s19
      %s33 = sphi 0, %s35
      %s36 = sphi 0, %s33
      %s37 = sphi 0, %s36
      %s53 = sphi 0, %s37
      %s59 = sphi 0, %s61
      %s62 = sphi 0, %s59
      %s63 = sphi 0, %s62
      %s79 = sphi 0, %s63
      %s83 = sphi 0, %s83
      %s85 = sphi 0, %s83
      %s86 = sphi 0, %s85
      %s100 = sphi 0, %s86
      %s106 = sphi 0, %s108
      %s109 = sphi 0, %s106
      %s110 = sphi 0, %s109
      %s126 = sphi 0, %s110
    $region4: #{custom_gcn_forward.8} parent=1 // loop_header_branch
      %12 = sbr.rel (%p10) target = $region8
    $region5: #{custom_gcn_forward.8} parent=1 // loop_body
      %s14 = ssub.s32 %s9, 1
      %s15 = ssub.s32 %s9, 2
      %s22 = sadd.s32 1, %s17
      %p23 = scmp.ge.s32.totalorder %s22, 2
      %s24 = scalar_select %p23, 0, %s22
      %s25 = sadd.s32 1, %s16
      %s26 = scalar_select %p23, %s25, %s16
      %p27 = scmp.ge.s32.totalorder %s26, 2
      %s28 = scalar_select %p27, 0, %s26
      %s29 = ssub.s32 %s16, %s28
      %s30 = ssub.s32 %s17, %s24
      %s31 = sor.u32 %s29, %s30
      %p32 = scmp.eq.s32.totalorder %s31, 0
      %s34 = sadd.s32 %s33, 1
      %s35 = scalar_select %p32, %s33, %s34
      %p38 = pneg %p32
      %p39 = scmp.eq.s32.totalorder %s9, 3
      %p40 = por %p38, %p39
      %p41 = scmp.ne.s32.totalorder %s33, %s36
      %p42 = scmp.eq.s32.totalorder %s9, 0
      %p43 = por %p41, %p42
      %p44 = scmp.ne.s32.totalorder %s33, %s36
      %p45 = scmp.eq.s32.totalorder %s14, 3
      %p46 = por %p44, %p45
      %p47 = scmp.ne.s32.totalorder %s36, %s37
      %p48 = scmp.eq.s32.totalorder %s14, 0
      %p49 = por %p47, %p48
      %p50 = scmp.ne.s32.totalorder %s36, %s37
      %p51 = scmp.eq.s32.totalorder %s15, 3
      %p52 = por %p50, %p51
      %p54 = scmp.ne.s32.totalorder %s37, %s53
      %p55 = scmp.eq.s32.totalorder %s15, 0
      %p56 = por %p54, %p55
      %s57 = ssub.s32 %s17, %s24
      %p58 = scmp.eq.s32.totalorder %s57, 0
      %s60 = sadd.s32 %s59, 1
      %s61 = scalar_select %p58, %s59, %s60
      %p64 = pneg %p58
      %p65 = scmp.eq.s32.totalorder %s9, 3
      %p66 = por %p64, %p65
      %p67 = scmp.ne.s32.totalorder %s59, %s62
      %p68 = scmp.eq.s32.totalorder %s9, 0
      %p69 = por %p67, %p68
      %p70 = scmp.ne.s32.totalorder %s59, %s62
      %p71 = scmp.eq.s32.totalorder %s14, 3
      %p72 = por %p70, %p71
      %p73 = scmp.ne.s32.totalorder %s62, %s63
      %p74 = scmp.eq.s32.totalorder %s14, 0
      %p75 = por %p73, %p74
      %p76 = scmp.ne.s32.totalorder %s62, %s63
      %p77 = scmp.eq.s32.totalorder %s15, 3
      %p78 = por %p76, %p77
      %p80 = scmp.ne.s32.totalorder %s63, %s79
      %p81 = scmp.eq.s32.totalorder %s15, 0
      %p82 = por %p80, %p81
      %s84 = sadd.s32 %s83, 1
      %p87 = scmp.eq.s32.totalorder %s9, 3
      %p88 = scmp.ne.s32.totalorder %s83, %s85
      %p89 = scmp.eq.s32.totalorder %s9, 0
      %p90 = por %p88, %p89
      %p91 = scmp.ne.s32.totalorder %s83, %s85
      %p92 = scmp.eq.s32.totalorder %s14, 3
      %p93 = por %p91, %p92
      %p94 = scmp.ne.s32.totalorder %s85, %s86
      %p95 = scmp.eq.s32.totalorder %s14, 0
      %p96 = por %p94, %p95
      %p97 = scmp.ne.s32.totalorder %s85, %s86
      %p98 = scmp.eq.s32.totalorder %s15, 3
      %p99 = por %p97, %p98
      %p101 = scmp.ne.s32.totalorder %s86, %s100
      %p102 = scmp.eq.s32.totalorder %s15, 0
      %p103 = por %p101, %p102
      %s104 = ssub.s32 %s16, %s28
      %p105 = scmp.eq.s32.totalorder %s104, 0
      %s107 = sadd.s32 %s106, 1
      %s108 = scalar_select %p105, %s106, %s107
      %p111 = pneg %p105
      %p112 = scmp.eq.s32.totalorder %s9, 3
      %p113 = por %p111, %p112
      %p114 = scmp.ne.s32.totalorder %s106, %s109
      %p115 = scmp.eq.s32.totalorder %s9, 0
      %p116 = por %p114, %p115
      %p117 = scmp.ne.s32.totalorder %s106, %s109
      %p118 = scmp.eq.s32.totalorder %s14, 3
      %p119 = por %p117, %p118
      %p120 = scmp.ne.s32.totalorder %s109, %s110
      %p121 = scmp.eq.s32.totalorder %s14, 0
      %p122 = por %p120, %p121
      %p123 = scmp.ne.s32.totalorder %s109, %s110
      %p124 = scmp.eq.s32.totalorder %s15, 3
      %p125 = por %p123, %p124
      %p127 = scmp.ne.s32.totalorder %s110, %s126
      %p128 = scmp.eq.s32.totalorder %s15, 0
      %p129 = por %p127, %p128
      %p130 = scmp.le.s32.totalorder 1, %s9
      %p131 = scmp.lt.s32.totalorder %s9, 5
      %p132 = pnand %p130, %p131
      %p133 = pneg %p132
      // Predicated region
      $region9: #{custom_gcn_forward.8} parent=5 // pred_check
        _
      $region10: #{custom_gcn_forward.8} parent=5 // pred_check_branch
        %135 = sbr.rel (%p132) target = $region12
      $region11: #{custom_gcn_forward.8} parent=5 // pred_region
        %s136 = ssub.s32 %s9, 1
        // Predicated region
        $region13: #{custom_gcn_forward.8} parent=11 // pred_check
          %p137 = pneg %p96
        $region14: #{custom_gcn_forward.8} parent=11 // pred_check_branch
          %139 = sbr.rel (%p137) target = $region16
        $region15: #{custom_gcn_forward.8} parent=11 // pred_region
          _
        $region16: #{custom_gcn_forward.8} parent=11 // pred_fallthru
          _
      $region12: #{custom_gcn_forward.8} parent=5 // pred_fallthru
        _
      %p140 = scmp.lt.s32.totalorder %s9, 4
      // Predicated region
      $region17: #{custom_gcn_forward.8} parent=5 // pred_check
        %p141 = pneg %p140
      $region18: #{custom_gcn_forward.8} parent=5 // pred_check_branch
        %143 = sbr.rel (%p141) target = $region20
      $region19: #{custom_gcn_forward.8} parent=5 // pred_region
        // Predicated region
        $region21: #{custom_gcn_forward.8} parent=19 // pred_check
          %p144 = pneg %p43
        $region22: #{custom_gcn_forward.8} parent=19 // pred_check_branch
          %146 = sbr.rel (%p144) target = $region24
        $region23: #{custom_gcn_forward.8} parent=19 // pred_region
          %s147 = sand.u32 %s33, 1
          %s148 = sand.u32 %s33, 1
          %s149 = smul.addr %s148, 64
          %s150 = scalar_lea.vmem [#allocation3], %s149
          %s151 = smul.u32 16, %s16
          %s152 = smul.addr %s151, 2
          %s153 = sadd.s32 %s17, %s152
          %s154 = smul.addr %s153, 4
          %s155 = scalar_lea.vmem %s0, %s154
          // Predicated region
          $region25: #{custom_gcn_forward.8} parent=23 // pred_check
            _
          $region26: #{custom_gcn_forward.8} parent=23 // pred_check_branch
            %157 = sbr.rel (0) target = $region28
          $region27: #{custom_gcn_forward.8} parent=23 // pred_region
            // Predicated region
            $region29: #{custom_gcn_forward.8} parent=27 // pred_check
              _
            $region30: #{custom_gcn_forward.8} parent=27 // pred_check_branch
              %159 = sbr.rel target = $region32
            $region31: #{custom_gcn_forward.8} parent=27 // pred_region
              // Predicated region
              $region44: #{custom_gcn_forward.8} parent=31 // pred_check
                _
              $region45: #{custom_gcn_forward.8} parent=31 // pred_check_branch
                %204 = sbr.rel (0) target = $region47
              $region46: #{custom_gcn_forward.8} parent=31 // pred_region
                loop: start=0, step=1, limit=1
                $region48: #{custom_gcn_forward.8} parent=46 // loop_pre_header
                  _
                $region49: #{custom_gcn_forward.8} parent=46 // loop_header
                  %s206 = sphi 0, %s210
                  %p207 = scmp.ge.s32.totalorder %s206, 1
                  %s211 = sphi %s155, %s155
                  %s212 = sphi %s150, %s150
                $region50: #{custom_gcn_forward.8} parent=46 // loop_header_branch
                  %209 = sbr.rel (%p207) target = $region54
                $region51: #{custom_gcn_forward.8} parent=46 // loop_body
                  _
                $region52: #{custom_gcn_forward.8} parent=46 // loop_footer
                  %s210 = sadd.s32 1, %s206
                $region53: #{custom_gcn_forward.8} parent=46 // loop_footer_branch
                  %205 = sbr.rel target = $region49
                $region54: #{custom_gcn_forward.8} parent=46 // loop_exit
                  _
                loop: start=0, step=1, limit=1
                $region55: #{custom_gcn_forward.8} parent=46 // loop_pre_header
                  _
                $region56: #{custom_gcn_forward.8} parent=46 // loop_header
                  %s215 = sphi 0, %s219
                  %p216 = scmp.ge.s32.totalorder %s215, 1
                  %s220 = sphi %s155, %s155
                  %s221 = sphi %s150, %s150
                $region57: #{custom_gcn_forward.8} parent=46 // loop_header_branch
                  %218 = sbr.rel (%p216) target = $region61
                $region58: #{custom_gcn_forward.8} parent=46 // loop_body
                  %v222 = vld [vmem:[%s220] sm:$0xf]
                  %223 = vst [vmem:[%s221] sm:$0xf] %v222
                  %v224 = vld [vmem:[%s220 + $0x8] sm:$0xf]
                  %225 = vst [vmem:[%s221 + $0x4] sm:$0xf] %v224
                  %v226 = vld [vmem:[%s220 + $0x10] sm:$0xf]
                  %227 = vst [vmem:[%s221 + $0x8] sm:$0xf] %v226
                  %v228 = vld [vmem:[%s220 + $0x18] sm:$0xf]
                  %229 = vst [vmem:[%s221 + $0xc] sm:$0xf] %v228
                  %v230 = vld [vmem:[%s220 + $0x20] sm:$0xf]
                  %231 = vst [vmem:[%s221 + $0x10] sm:$0xf] %v230
                  %v232 = vld [vmem:[%s220 + $0x28] sm:$0xf]
                  %233 = vst [vmem:[%s221 + $0x14] sm:$0xf] %v232
                  %v234 = vld [vmem:[%s220 + $0x30] sm:$0xf]
                  %235 = vst [vmem:[%s221 + $0x18] sm:$0xf] %v234
                  %v236 = vld [vmem:[%s220 + $0x38] sm:$0xf]
                  %237 = vst [vmem:[%s221 + $0x1c] sm:$0xf] %v236
                  %v238 = vld [vmem:[%s220 + $0x40] sm:$0xf]
                  %239 = vst [vmem:[%s221 + $0x20] sm:$0xf] %v238
                  %v240 = vld [vmem:[%s220 + $0x48] sm:$0xf]
                  %241 = vst [vmem:[%s221 + $0x24] sm:$0xf] %v240
                  %v242 = vld [vmem:[%s220 + $0x50] sm:$0xf]
                  %243 = vst [vmem:[%s221 + $0x28] sm:$0xf] %v242
                  %v244 = vld [vmem:[%s220 + $0x58] sm:$0xf]
                  %245 = vst [vmem:[%s221 + $0x2c] sm:$0xf] %v244
                  %v246 = vld [vmem:[%s220 + $0x60] sm:$0xf]
                  %247 = vst [vmem:[%s221 + $0x30] sm:$0xf] %v246
                  %v248 = vld [vmem:[%s220 + $0x68] sm:$0xf]
                  %249 = vst [vmem:[%s221 + $0x34] sm:$0xf] %v248
                  %v250 = vld [vmem:[%s220 + $0x70] sm:$0xf]
                  %251 = vst [vmem:[%s221 + $0x38] sm:$0xf] %v250
                  %v252 = vld [vmem:[%s220 + $0x78] sm:$0xf]
                  %253 = vst [vmem:[%s221 + $0x3c] sm:$0xf] %v252
                $region59: #{custom_gcn_forward.8} parent=46 // loop_footer
                  %s219 = sadd.s32 1, %s215
                $region60: #{custom_gcn_forward.8} parent=46 // loop_footer_branch
                  %214 = sbr.rel target = $region56
                $region61: #{custom_gcn_forward.8} parent=46 // loop_exit
                  _
              $region47: #{custom_gcn_forward.8} parent=31 // pred_fallthru
                _
            $region32: #{custom_gcn_forward.8} parent=27 // pred_fallthru
              _
            // Predicated region
            $region33: #{custom_gcn_forward.8} parent=27 // pred_check
              _
            $region34: #{custom_gcn_forward.8} parent=27 // pred_check_branch
              %161 = sbr.rel (0) target = $region36
            $region35: #{custom_gcn_forward.8} parent=27 // pred_region
              loop: start=0, step=1, limit=1
              $region37: #{custom_gcn_forward.8} parent=35 // loop_pre_header
                _
              $region38: #{custom_gcn_forward.8} parent=35 // loop_header
                %s164 = sphi 0, %s168
                %p165 = scmp.ge.s32.totalorder %s164, 1
                %s169 = sphi %s155, %s155
                %s170 = sphi %s150, %s150
              $region39: #{custom_gcn_forward.8} parent=35 // loop_header_branch
                %167 = sbr.rel (%p165) target = $region43
              $region40: #{custom_gcn_forward.8} parent=35 // loop_body
                %v171 = vld [vmem:[%s169] sm:$0xf]
                %172 = vst [vmem:[%s170] sm:$0xf] %v171
                %v173 = vld [vmem:[%s169 + $0x8] sm:$0xf]
                %174 = vst [vmem:[%s170 + $0x4] sm:$0xf] %v173
                %v175 = vld [vmem:[%s169 + $0x10] sm:$0xf]
                %176 = vst [vmem:[%s170 + $0x8] sm:$0xf] %v175
                %v177 = vld [vmem:[%s169 + $0x18] sm:$0xf]
                %178 = vst [vmem:[%s170 + $0xc] sm:$0xf] %v177
                %v179 = vld [vmem:[%s169 + $0x20] sm:$0xf]
                %180 = vst [vmem:[%s170 + $0x10] sm:$0xf] %v179
                %v181 = vld [vmem:[%s169 + $0x28] sm:$0xf]
                %182 = vst [vmem:[%s170 + $0x14] sm:$0xf] %v181
                %v183 = vld [vmem:[%s169 + $0x30] sm:$0xf]
                %184 = vst [vmem:[%s170 + $0x18] sm:$0xf] %v183
                %v185 = vld [vmem:[%s169 + $0x38] sm:$0xf]
                %186 = vst [vmem:[%s170 + $0x1c] sm:$0xf] %v185
                %v187 = vld [vmem:[%s169 + $0x40] sm:$0xf]
                %188 = vst [vmem:[%s170 + $0x20] sm:$0xf] %v187
                %v189 = vld [vmem:[%s169 + $0x48] sm:$0xf]
                %190 = vst [vmem:[%s170 + $0x24] sm:$0xf] %v189
                %v191 = vld [vmem:[%s169 + $0x50] sm:$0xf]
                %192 = vst [vmem:[%s170 + $0x28] sm:$0xf] %v191
                %v193 = vld [vmem:[%s169 + $0x58] sm:$0xf]
                %194 = vst [vmem:[%s170 + $0x2c] sm:$0xf] %v193
                %v195 = vld [vmem:[%s169 + $0x60] sm:$0xf]
                %196 = vst [vmem:[%s170 + $0x30] sm:$0xf] %v195
                %v197 = vld [vmem:[%s169 + $0x68] sm:$0xf]
                %198 = vst [vmem:[%s170 + $0x34] sm:$0xf] %v197
                %v199 = vld [vmem:[%s169 + $0x70] sm:$0xf]
                %200 = vst [vmem:[%s170 + $0x38] sm:$0xf] %v199
                %v201 = vld [vmem:[%s169 + $0x78] sm:$0xf]
                %202 = vst [vmem:[%s170 + $0x3c] sm:$0xf] %v201
              $region41: #{custom_gcn_forward.8} parent=35 // loop_footer
                %s168 = sadd.s32 1, %s164
              $region42: #{custom_gcn_forward.8} parent=35 // loop_footer_branch
                %163 = sbr.rel target = $region38
              $region43: #{custom_gcn_forward.8} parent=35 // loop_exit
                _
            $region36: #{custom_gcn_forward.8} parent=27 // pred_fallthru
              _
          $region28: #{custom_gcn_forward.8} parent=23 // pred_fallthru
            _
          %254 = vnop
        $region24: #{custom_gcn_forward.8} parent=19 // pred_fallthru
          _
        // Predicated region
        $region62: #{custom_gcn_forward.8} parent=19 // pred_check
          %p255 = pneg %p69
        $region63: #{custom_gcn_forward.8} parent=19 // pred_check_branch
          %257 = sbr.rel (%p255) target = $region65
        $region64: #{custom_gcn_forward.8} parent=19 // pred_region
          %s258 = smul.u32 16, %s17
          %p259 = scmp.lt.s32.totalorder %s258, 31
          %s260 = scalar_select %p259, %s258, 31
          %s261 = smul.addr %s260, 4
          %s262 = scalar_lea.vmem %s1, %s261
          %s263 = smul.u32 16, %s17
        $region65: #{custom_gcn_forward.8} parent=19 // pred_fallthru
          _
      $region20: #{custom_gcn_forward.8} parent=5 // pred_fallthru
        _
      %p264 = scmp.le.s32.totalorder 1, %s9
      %p265 = scmp.lt.s32.totalorder %s9, 5
      %p266 = pnand %p264, %p265
      %p267 = pneg %p266
      // Predicated region
      $region66: #{custom_gcn_forward.8} parent=5 // pred_check
        _
      $region67: #{custom_gcn_forward.8} parent=5 // pred_check_branch
        %269 = sbr.rel (%p266) target = $region69
      $region68: #{custom_gcn_forward.8} parent=5 // pred_region
        %s270 = ssub.s32 %s9, 1
        %s271 = sand.u32 %s36, 1
        %s272 = sand.u32 %s36, 1
        %s273 = smul.addr %s272, 64
        %s274 = scalar_lea.vmem [#allocation3], %s273
        // Predicated region
        $region70: #{custom_gcn_forward.8} parent=68 // pred_check
          %p275 = pneg %p49
        $region71: #{custom_gcn_forward.8} parent=68 // pred_check_branch
          %277 = sbr.rel (%p275) target = $region73
        $region72: #{custom_gcn_forward.8} parent=68 // pred_region
          _
        $region73: #{custom_gcn_forward.8} parent=68 // pred_fallthru
          _
        %s278 = sand.u32 %s36, 1
        %s279 = sand.u32 %s36, 1
        %s280 = smul.addr %s279, 64
        %s281 = scalar_lea.vmem [#allocation3], %s280
        %p282 = pneg %p49
        %p283 = pneg %p46
        %s284 = smul.u32 16, %s19
        %p285 = scmp.lt.s32.totalorder %s284, 31
        %s286 = scalar_select %p285, %s284, 31
        %s287 = smul.addr %s286, 4
        %s288 = scalar_lea.vmem %s1, %s287
        %p289 = pneg %p75
        %p290 = pneg %p72
        %p291 = pneg %p96
        %p292 = pneg %p93
        %p293 = pneg %p122
        %p294 = pneg %p119
        %s295 = smul.u32 16, %s18
        %p296 = scmp.lt.s32.totalorder %s295, 31
        %s297 = scalar_select %p296, %s295, 31
        %s298 = smul.addr %s297, 4
        %s299 = scalar_lea.vmem %s3, %s298
        %s300 = smul.u32 16, %s18
        %s301 = smul.u32 16, %s19
        %p302 = scmp.lt.s32.totalorder %s301, 31
        %s303 = scalar_select %p302, %s301, 31
        %s304 = smul.addr %s303, 4
        %s305 = scalar_lea.vmem %s1, %s304
        %s306 = smul.u32 16, %s19
        %s307 = smul.u32 16, %s18
        %p308 = scmp.lt.s32.totalorder %s307, 31
        %s309 = scalar_select %p308, %s307, 31
        %s310 = smul.addr %s309, 4
        %s311 = scalar_lea.vmem %s3, %s310
        %s312 = smul.u32 16, %s18
        %p314 = scmp.eq.s32.totalorder %s19, 0
        // Predicated region
        $region74: #{custom_gcn_forward.8} parent=68 // pred_check
          %p315 = pneg %p314
        $region75: #{custom_gcn_forward.8} parent=68 // pred_check_branch
          %317 = sbr.rel (%p315) target = $region77
        $region76: #{custom_gcn_forward.8} parent=68 // pred_region
          %318 = vst [vmem:[#allocation2] sm:$0xff] 0.0
          %319 = vst [vmem:[#allocation2 + $0x8] sm:$0xff] 0.0
          %320 = vst [vmem:[#allocation2 + $0x10] sm:$0xff] 0.0
          %321 = vst [vmem:[#allocation2 + $0x18] sm:$0xff] 0.0
          %322 = vst [vmem:[#allocation2 + $0x20] sm:$0xff] 0.0
          %323 = vst [vmem:[#allocation2 + $0x28] sm:$0xff] 0.0
          %324 = vst [vmem:[#allocation2 + $0x30] sm:$0xff] 0.0
          %325 = vst [vmem:[#allocation2 + $0x38] sm:$0xff] 0.0
          %326 = vst [vmem:[#allocation2 + $0x40] sm:$0xff] 0.0
          %327 = vst [vmem:[#allocation2 + $0x48] sm:$0xff] 0.0
          %328 = vst [vmem:[#allocation2 + $0x50] sm:$0xff] 0.0
          %329 = vst [vmem:[#allocation2 + $0x58] sm:$0xff] 0.0
          %330 = vst [vmem:[#allocation2 + $0x60] sm:$0xff] 0.0
          %331 = vst [vmem:[#allocation2 + $0x68] sm:$0xff] 0.0
          %332 = vst [vmem:[#allocation2 + $0x70] sm:$0xff] 0.0
          %333 = vst [vmem:[#allocation2 + $0x78] sm:$0xff] 0.0
        $region77: #{custom_gcn_forward.8} parent=68 // pred_fallthru
          _
        %v334 = vld [vmem:[#allocation2] sm:$0xff]
        %v335 = vld [vmem:[#allocation2 + $0x8] sm:$0xff]
        %v336 = vld [vmem:[#allocation2 + $0x10] sm:$0xff]
        %v337 = vld [vmem:[#allocation2 + $0x18] sm:$0xff]
        %v338 = vld [vmem:[#allocation2 + $0x20] sm:$0xff]
        %v339 = vld [vmem:[#allocation2 + $0x28] sm:$0xff]
        %v340 = vld [vmem:[#allocation2 + $0x30] sm:$0xff]
        %v341 = vld [vmem:[#allocation2 + $0x38] sm:$0xff]
        %v342 = vld [vmem:[#allocation2 + $0x40] sm:$0xff]
        %v343 = vld [vmem:[#allocation2 + $0x48] sm:$0xff]
        %v344 = vld [vmem:[#allocation2 + $0x50] sm:$0xff]
        %v345 = vld [vmem:[#allocation2 + $0x58] sm:$0xff]
        %v346 = vld [vmem:[#allocation2 + $0x60] sm:$0xff]
        %v347 = vld [vmem:[#allocation2 + $0x68] sm:$0xff]
        %v348 = vld [vmem:[#allocation2 + $0x70] sm:$0xff]
        %v349 = vld [vmem:[#allocation2 + $0x78] sm:$0xff]
        %v350 = vld [vmem:[%s274] sm:$0xf]
        %v351 = vld [vmem:[%s274 + $0x4] sm:$0xf]
        %v352 = vld [vmem:[%s274 + $0x8] sm:$0xf]
        %v353 = vld [vmem:[%s274 + $0xc] sm:$0xf]
        %v354 = vld [vmem:[%s274 + $0x10] sm:$0xf]
        %v355 = vld [vmem:[%s274 + $0x14] sm:$0xf]
        %v356 = vld [vmem:[%s274 + $0x18] sm:$0xf]
        %v357 = vld [vmem:[%s274 + $0x1c] sm:$0xf]
        %v358 = vld [vmem:[%s274 + $0x20] sm:$0xf]
        %v359 = vld [vmem:[%s274 + $0x24] sm:$0xf]
        %v360 = vld [vmem:[%s274 + $0x28] sm:$0xf]
        %v361 = vld [vmem:[%s274 + $0x2c] sm:$0xf]
        %v362 = vld [vmem:[%s274 + $0x30] sm:$0xf]
        %v363 = vld [vmem:[%s274 + $0x34] sm:$0xf]
        %v364 = vld [vmem:[%s274 + $0x38] sm:$0xf]
        %v365 = vld [vmem:[%s274 + $0x3c] sm:$0xf]
        %v366 = vld [vmem:[%s305] sm:$0xf]
        %v367 = vld [vmem:[%s305 + $0x4] sm:$0xf]
        %v368 = vld [vmem:[%s305 + $0x8] sm:$0xf]
        %v369 = vld [vmem:[%s305 + $0xc] sm:$0xf]
        %v370 = vld [vmem:[%s305 + $0x10] sm:$0xf]
        %v371 = vld [vmem:[%s305 + $0x14] sm:$0xf]
        %v372 = vld [vmem:[%s305 + $0x18] sm:$0xf]
        %v373 = vld [vmem:[%s305 + $0x1c] sm:$0xf]
        %v374 = vld [vmem:[%s305 + $0x20] sm:$0xf]
        %v375 = vld [vmem:[%s305 + $0x24] sm:$0xf]
        %v376 = vld [vmem:[%s305 + $0x28] sm:$0xf]
        %v377 = vld [vmem:[%s305 + $0x2c] sm:$0xf]
        %v378 = vld [vmem:[%s305 + $0x30] sm:$0xf]
        %v379 = vld [vmem:[%s305 + $0x34] sm:$0xf]
        %v380 = vld [vmem:[%s305 + $0x38] sm:$0xf]
        %v381 = vld [vmem:[%s305 + $0x3c] sm:$0xf]
        %v398 = vunpack.c.l.b16 %v350
        %v399 = vunpack.c.l.b16 %v351
        %v400 = vunpack.c.l.b16 %v352
        %v401 = vunpack.c.l.b16 %v353
        %v402 = vunpack.c.l.b16 %v354
        %v403 = vunpack.c.l.b16 %v355
        %v404 = vunpack.c.l.b16 %v356
        %v405 = vunpack.c.l.b16 %v357
        %v406 = vunpack.c.l.b16 %v358
        %v407 = vunpack.c.l.b16 %v359
        %v408 = vunpack.c.l.b16 %v360
        %v409 = vunpack.c.l.b16 %v361
        %v410 = vunpack.c.l.b16 %v362
        %v411 = vunpack.c.l.b16 %v363
        %v412 = vunpack.c.l.b16 %v364
        %v413 = vunpack.c.l.b16 %v365
        %v414 = vpack.c.b16 %v399, %v398
        %v415 = vpack.c.b16 %v401, %v400
        %v416 = vpack.c.b16 %v403, %v402
        %v417 = vpack.c.b16 %v405, %v404
        %v418 = vpack.c.b16 %v407, %v406
        %v419 = vpack.c.b16 %v409, %v408
        %v420 = vpack.c.b16 %v411, %v410
        %v421 = vpack.c.b16 %v413, %v412
        %v446 = vunpack.c.l.b16 %v366
        %v447 = vunpack.c.l.b16 %v367
        %v448 = vunpack.c.l.b16 %v368
        %v449 = vunpack.c.l.b16 %v369
        %v450 = vunpack.c.l.b16 %v370
        %v451 = vunpack.c.l.b16 %v371
        %v452 = vunpack.c.l.b16 %v372
        %v453 = vunpack.c.l.b16 %v373
        %v454 = vunpack.c.l.b16 %v374
        %v455 = vunpack.c.l.b16 %v375
        %v456 = vunpack.c.l.b16 %v376
        %v457 = vunpack.c.l.b16 %v377
        %v458 = vunpack.c.l.b16 %v378
        %v459 = vunpack.c.l.b16 %v379
        %v460 = vunpack.c.l.b16 %v380
        %v461 = vunpack.c.l.b16 %v381
        %v462 = vpack.c.b16 %v447, %v446
        %v463 = vpack.c.b16 %v449, %v448
        %v464 = vpack.c.b16 %v451, %v450
        %v465 = vpack.c.b16 %v453, %v452
        %v466 = vpack.c.b16 %v455, %v454
        %v467 = vpack.c.b16 %v457, %v456
        %v468 = vpack.c.b16 %v459, %v458
        %v469 = vpack.c.b16 %v461, %v460
        %478 = vmatprep.subr.bf16.mxu0 0
        %479 = vmatpush1.bf16.msra.mxu0 %v462
        %480 = vmatprep.subr.bf16.mxu0 0
        %481 = vmatpush1.bf16.msra.mxu0 %v463
        %482 = vmatprep.subr.bf16.mxu0 0
        %483 = vmatpush1.bf16.msra.mxu0 %v464
        %484 = vmatprep.subr.bf16.mxu0 0
        %485 = vmatpush1.bf16.msra.mxu0 %v465
        %486 = vmatprep.subr.bf16.mxu0 0
        %487 = vmatpush1.bf16.msra.mxu0 %v466
        %488 = vmatprep.subr.bf16.mxu0 0
        %489 = vmatpush1.bf16.msra.mxu0 %v467
        %490 = vmatprep.subr.bf16.mxu0 0
        %491 = vmatpush1.bf16.msra.mxu0 %v468
        %492 = vmatprep.subr.bf16.mxu0 0
        %493 = vmatpush1.bf16.msra.mxu0 %v469
        %494 = vmatprep.subr.bf16.mxu0 0
        %495 = vmatpush1.bf16.msra.mxu0 0
        %496 = vmatprep.subr.bf16.mxu0 0
        %497 = vmatpush1.bf16.msra.mxu0 0
        %498 = vmatprep.subr.bf16.mxu0 0
        %499 = vmatpush1.bf16.msra.mxu0 0
        %500 = vmatprep.subr.bf16.mxu0 0
        %501 = vmatpush1.bf16.msra.mxu0 0
        %502 = vmatprep.subr.bf16.mxu0 0
        %503 = vmatpush1.bf16.msra.mxu0 0
        %504 = vmatprep.subr.bf16.mxu0 0
        %505 = vmatpush1.bf16.msra.mxu0 0
        %506 = vmatprep.subr.bf16.mxu0 0
        %507 = vmatpush1.bf16.msra.mxu0 0
        %508 = vmatprep.subr.bf16.mxu0 0
        %509 = vmatpush1.bf16.msra.mxu0 0
        %510 = vmatprep.mubr.bf16.mxu0 0
        %511 = vmatmul.mubr.bf16.gmra.mrb[0].mxu0 %v414
        %v512 = vpop.f32.mrb[0].mxu0
        %v513 = vadd.f32 0.0, %v512
        %v514 = vpop.f32.mrb[0].mxu0
        %v515 = vpop.f32.mrb[0].mxu0
        %v516 = vadd.f32 0.0, %v515
        %v517 = vpop.f32.mrb[0].mxu0
        %518 = vmatprep.mubr.bf16.mxu0 0
        %519 = vmatmul.mubr.bf16.gmra.mrb[0].mxu0 %v415
        %v520 = vpop.f32.mrb[0].mxu0
        %v521 = vadd.f32 0.0, %v520
        %v522 = vpop.f32.mrb[0].mxu0
        %v523 = vpop.f32.mrb[0].mxu0
        %v524 = vadd.f32 0.0, %v523
        %v525 = vpop.f32.mrb[0].mxu0
        %526 = vmatprep.mubr.bf16.mxu0 0
        %527 = vmatmul.mubr.bf16.gmra.mrb[0].mxu0 %v416
        %v528 = vpop.f32.mrb[0].mxu0
        %v529 = vadd.f32 0.0, %v528
        %v530 = vpop.f32.mrb[0].mxu0
        %v531 = vpop.f32.mrb[0].mxu0
        %v532 = vadd.f32 0.0, %v531
        %v533 = vpop.f32.mrb[0].mxu0
        %534 = vmatprep.mubr.bf16.mxu0 0
        %535 = vmatmul.mubr.bf16.gmra.mrb[0].mxu0 %v417
        %v536 = vpop.f32.mrb[0].mxu0
        %v537 = vadd.f32 0.0, %v536
        %v538 = vpop.f32.mrb[0].mxu0
        %v539 = vpop.f32.mrb[0].mxu0
        %v540 = vadd.f32 0.0, %v539
        %v541 = vpop.f32.mrb[0].mxu0
        %542 = vmatprep.mubr.bf16.mxu0 0
        %543 = vmatmul.mubr.bf16.gmra.mrb[0].mxu0 %v418
        %v544 = vpop.f32.mrb[0].mxu0
        %v545 = vadd.f32 0.0, %v544
        %v546 = vpop.f32.mrb[0].mxu0
        %v547 = vpop.f32.mrb[0].mxu0
        %v548 = vadd.f32 0.0, %v547
        %v549 = vpop.f32.mrb[0].mxu0
        %550 = vmatprep.mubr.bf16.mxu0 0
        %551 = vmatmul.mubr.bf16.gmra.mrb[0].mxu0 %v419
        %v552 = vpop.f32.mrb[0].mxu0
        %v553 = vadd.f32 0.0, %v552
        %v554 = vpop.f32.mrb[0].mxu0
        %v555 = vpop.f32.mrb[0].mxu0
        %v556 = vadd.f32 0.0, %v555
        %v557 = vpop.f32.mrb[0].mxu0
        %558 = vmatprep.mubr.bf16.mxu0 0
        %559 = vmatmul.mubr.bf16.gmra.mrb[0].mxu0 %v420
        %v560 = vpop.f32.mrb[0].mxu0
        %v561 = vadd.f32 0.0, %v560
        %v562 = vpop.f32.mrb[0].mxu0
        %v563 = vpop.f32.mrb[0].mxu0
        %v564 = vadd.f32 0.0, %v563
        %v565 = vpop.f32.mrb[0].mxu0
        %566 = vmatprep.mubr.bf16.mxu0 0
        %567 = vmatmul.mubr.bf16.gmra.mrb[0].mxu0 %v421
        %v568 = vpop.f32.mrb[0].mxu0
        %v569 = vadd.f32 0.0, %v568
        %v570 = vpop.f32.mrb[0].mxu0
        %v571 = vpop.f32.mrb[0].mxu0
        %v572 = vadd.f32 0.0, %v571
        %v573 = vpop.f32.mrb[0].mxu0
        %574 = vdwg.mxu0
        %v575 = vadd.f32 %v334, %v513
        %v576 = vadd.f32 %v335, %v516
        %v577 = vadd.f32 %v336, %v521
        %v578 = vadd.f32 %v337, %v524
        %v579 = vadd.f32 %v338, %v529
        %v580 = vadd.f32 %v339, %v532
        %v581 = vadd.f32 %v340, %v537
        %v582 = vadd.f32 %v341, %v540
        %v583 = vadd.f32 %v342, %v545
        %v584 = vadd.f32 %v343, %v548
        %v585 = vadd.f32 %v344, %v553
        %v586 = vadd.f32 %v345, %v556
        %v587 = vadd.f32 %v346, %v561
        %v588 = vadd.f32 %v347, %v564
        %v589 = vadd.f32 %v348, %v569
        %v590 = vadd.f32 %v349, %v572
        %591 = vst [vmem:[#allocation2] sm:$0xff] %v575
        %592 = vst [vmem:[#allocation2 + $0x8] sm:$0xff] %v576
        %593 = vst [vmem:[#allocation2 + $0x10] sm:$0xff] %v577
        %594 = vst [vmem:[#allocation2 + $0x18] sm:$0xff] %v578
        %595 = vst [vmem:[#allocation2 + $0x20] sm:$0xff] %v579
        %596 = vst [vmem:[#allocation2 + $0x28] sm:$0xff] %v580
        %597 = vst [vmem:[#allocation2 + $0x30] sm:$0xff] %v581
        %598 = vst [vmem:[#allocation2 + $0x38] sm:$0xff] %v582
        %599 = vst [vmem:[#allocation2 + $0x40] sm:$0xff] %v583
        %600 = vst [vmem:[#allocation2 + $0x48] sm:$0xff] %v584
        %601 = vst [vmem:[#allocation2 + $0x50] sm:$0xff] %v585
        %602 = vst [vmem:[#allocation2 + $0x58] sm:$0xff] %v586
        %603 = vst [vmem:[#allocation2 + $0x60] sm:$0xff] %v587
        %604 = vst [vmem:[#allocation2 + $0x68] sm:$0xff] %v588
        %605 = vst [vmem:[#allocation2 + $0x70] sm:$0xff] %v589
        %606 = vst [vmem:[#allocation2 + $0x78] sm:$0xff] %v590
        %p607 = scmp.eq.s32.totalorder %s19, 1
        // Predicated region
        $region78: #{custom_gcn_forward.8} parent=68 // pred_check
          %p608 = pneg %p607
        $region79: #{custom_gcn_forward.8} parent=68 // pred_check_branch
          %610 = sbr.rel (%p608) target = $region81
        $region80: #{custom_gcn_forward.8} parent=68 // pred_region
          %v611 = vld [vmem:[#allocation2] sm:$0xff]
          %v612 = vld [vmem:[#allocation2 + $0x8] sm:$0xff]
          %v613 = vld [vmem:[#allocation2 + $0x10] sm:$0xff]
          %v614 = vld [vmem:[#allocation2 + $0x18] sm:$0xff]
          %v615 = vld [vmem:[#allocation2 + $0x20] sm:$0xff]
          %v616 = vld [vmem:[#allocation2 + $0x28] sm:$0xff]
          %v617 = vld [vmem:[#allocation2 + $0x30] sm:$0xff]
          %v618 = vld [vmem:[#allocation2 + $0x38] sm:$0xff]
          %v619 = vld [vmem:[#allocation2 + $0x40] sm:$0xff]
          %v620 = vld [vmem:[#allocation2 + $0x48] sm:$0xff]
          %v621 = vld [vmem:[#allocation2 + $0x50] sm:$0xff]
          %v622 = vld [vmem:[#allocation2 + $0x58] sm:$0xff]
          %v623 = vld [vmem:[#allocation2 + $0x60] sm:$0xff]
          %v624 = vld [vmem:[#allocation2 + $0x68] sm:$0xff]
          %v625 = vld [vmem:[#allocation2 + $0x70] sm:$0xff]
          %v626 = vld [vmem:[#allocation2 + $0x78] sm:$0xff]
          %v627 = vld [vmem:[%s2] sm:$0x1]
          %v629 = vlaneseq
          %v630 = vshrl.u32 %v629, 7
          %v631 = vsub.s32 0, %v630
          %v632 = vrot.slane %v627, %v631
          %v634 = vadd.f32 %v611, %v632
          %v635 = vadd.f32 %v612, %v632
          %v636 = vadd.f32 %v613, %v632
          %v637 = vadd.f32 %v614, %v632
          %v638 = vadd.f32 %v615, %v632
          %v639 = vadd.f32 %v616, %v632
          %v640 = vadd.f32 %v617, %v632
          %v641 = vadd.f32 %v618, %v632
          %v642 = vadd.f32 %v619, %v632
          %v643 = vadd.f32 %v620, %v632
          %v644 = vadd.f32 %v621, %v632
          %v645 = vadd.f32 %v622, %v632
          %v646 = vadd.f32 %v623, %v632
          %v647 = vadd.f32 %v624, %v632
          %v648 = vadd.f32 %v625, %v632
          %v649 = vadd.f32 %v626, %v632
          %v650 = vpack.c.bf16 %v635, %v634
          %v651 = vpack.c.bf16 %v637, %v636
          %v652 = vpack.c.bf16 %v639, %v638
          %v653 = vpack.c.bf16 %v641, %v640
          %v654 = vpack.c.bf16 %v643, %v642
          %v655 = vpack.c.bf16 %v645, %v644
          %v656 = vpack.c.bf16 %v647, %v646
          %v657 = vpack.c.bf16 %v649, %v648
          %v666 = vunpack.c.l.b16 %v650
          %v667 = vunpack.c.h.b16 %v650
          %v668 = vunpack.c.l.b16 %v651
          %v669 = vunpack.c.h.b16 %v651
          %v670 = vunpack.c.l.b16 %v652
          %v671 = vunpack.c.h.b16 %v652
          %v672 = vunpack.c.l.b16 %v653
          %v673 = vunpack.c.h.b16 %v653
          %v674 = vunpack.c.l.b16 %v654
          %v675 = vunpack.c.h.b16 %v654
          %v676 = vunpack.c.l.b16 %v655
          %v677 = vunpack.c.h.b16 %v655
          %v678 = vunpack.c.l.b16 %v656
          %v679 = vunpack.c.h.b16 %v656
          %v680 = vunpack.c.l.b16 %v657
          %v681 = vunpack.c.h.b16 %v657
          %v682 = vpack.c.b16 %v666, %v666
          %v683 = vpack.c.b16 %v667, %v667
          %v684 = vpack.c.b16 %v668, %v668
          %v685 = vpack.c.b16 %v669, %v669
          %v686 = vpack.c.b16 %v670, %v670
          %v687 = vpack.c.b16 %v671, %v671
          %v688 = vpack.c.b16 %v672, %v672
          %v689 = vpack.c.b16 %v673, %v673
          %v690 = vpack.c.b16 %v674, %v674
          %v691 = vpack.c.b16 %v675, %v675
          %v692 = vpack.c.b16 %v676, %v676
          %v693 = vpack.c.b16 %v677, %v677
          %v694 = vpack.c.b16 %v678, %v678
          %v695 = vpack.c.b16 %v679, %v679
          %v696 = vpack.c.b16 %v680, %v680
          %v697 = vpack.c.b16 %v681, %v681
          %714 = vst [vmem:[%s311] sm:$0xf] %v682
          %715 = vst [vmem:[%s311 + $0x4] sm:$0xf] %v683
          %716 = vst [vmem:[%s311 + $0x8] sm:$0xf] %v684
          %717 = vst [vmem:[%s311 + $0xc] sm:$0xf] %v685
          %718 = vst [vmem:[%s311 + $0x10] sm:$0xf] %v686
          %719 = vst [vmem:[%s311 + $0x14] sm:$0xf] %v687
          %720 = vst [vmem:[%s311 + $0x18] sm:$0xf] %v688
          %721 = vst [vmem:[%s311 + $0x1c] sm:$0xf] %v689
          %722 = vst [vmem:[%s311 + $0x20] sm:$0xf] %v690
          %723 = vst [vmem:[%s311 + $0x24] sm:$0xf] %v691
          %724 = vst [vmem:[%s311 + $0x28] sm:$0xf] %v692
          %725 = vst [vmem:[%s311 + $0x2c] sm:$0xf] %v693
          %726 = vst [vmem:[%s311 + $0x30] sm:$0xf] %v694
          %727 = vst [vmem:[%s311 + $0x34] sm:$0xf] %v695
          %728 = vst [vmem:[%s311 + $0x38] sm:$0xf] %v696
          %729 = vst [vmem:[%s311 + $0x3c] sm:$0xf] %v697
        $region81: #{custom_gcn_forward.8} parent=68 // pred_fallthru
          _
        %s730 = smul.u32 16, %s18
        %p731 = scmp.lt.s32.totalorder %s730, 31
        %s732 = scalar_select %p731, %s730, 31
        %s733 = smul.addr %s732, 4
        %s734 = scalar_lea.vmem %s3, %s733
        // Predicated region
        $region82: #{custom_gcn_forward.8} parent=68 // pred_check
          %p735 = pneg %p119
        $region83: #{custom_gcn_forward.8} parent=68 // pred_check_branch
          %737 = sbr.rel (%p735) target = $region85
        $region84: #{custom_gcn_forward.8} parent=68 // pred_region
          %s738 = smul.u32 16, %s18
        $region85: #{custom_gcn_forward.8} parent=68 // pred_fallthru
          _
      $region69: #{custom_gcn_forward.8} parent=5 // pred_fallthru
        _
      %p739 = scmp.le.s32.totalorder 2, %s9
      // Predicated region
      $region86: #{custom_gcn_forward.8} parent=5 // pred_check
        %p740 = pneg %p739
      $region87: #{custom_gcn_forward.8} parent=5 // pred_check_branch
        %742 = sbr.rel (%p740) target = $region89
      $region88: #{custom_gcn_forward.8} parent=5 // pred_region
        %s743 = ssub.s32 %s9, 2
        // Predicated region
        $region90: #{custom_gcn_forward.8} parent=88 // pred_check
          %p744 = pneg %p125
        $region91: #{custom_gcn_forward.8} parent=88 // pred_check_branch
          %746 = sbr.rel (%p744) target = $region93
        $region92: #{custom_gcn_forward.8} parent=88 // pred_region
          %s747 = smul.u32 16, %s20
          %p748 = scmp.lt.s32.totalorder %s747, 31
          %s749 = scalar_select %p748, %s747, 31
          %s750 = smul.addr %s749, 4
          %s751 = scalar_lea.vmem %s3, %s750
        $region93: #{custom_gcn_forward.8} parent=88 // pred_fallthru
          _
      $region89: #{custom_gcn_forward.8} parent=5 // pred_fallthru
        _
    $region6: #{custom_gcn_forward.8} parent=1 // loop_footer
      %s13 = sadd.s32 1, %s9
    $region7: #{custom_gcn_forward.8} parent=1 // loop_footer_branch
      %8 = sbr.rel target = $region3
    $region8: #{custom_gcn_forward.8} parent=1 // loop_exit
      _

// kernel: custom_gcn_forward.9
$region0: #{custom_gcn_forward.9}
  #allocation0 [shape = 'u32[]', space=smem, size = 0x4, offset = 0x4, fixed_abs, tag = 'smem constant byte address 0x4 - core index']
  #allocation1 [shape = 'u32[144,128]{1,0:T(1,128)}', space=vmem, size = 0x12000, scoped, tag = 'internal scratch']
  %s0 = inlined_call_operand.vmem [shape: bf16[512,256], index: 0, kind: input, shape index: {}]
  %s1 = inlined_call_operand.vmem [shape: bf16[256,128], index: 1, kind: input, shape index: {}]
  %s2 = inlined_call_operand.vmem [shape: bf16[512,128], index: 2, kind: input, shape index: {}]
  %s3 = inlined_call_operand.vmem [shape: bf16[128,128], index: 3, kind: input, shape index: {}]
  %s4 = inlined_call_operand.vmem [shape: f32[1,128], index: 4, kind: input, shape index: {}]
  %s5 = inlined_call_operand.vmem [shape: bf16[128,128], index: 5, kind: input, shape index: {}]
  %s6 = inlined_call_operand.vmem [shape: bf16[128,128], index: 6, kind: input, shape index: {}]
  %s7 = inlined_call_operand.vmem [shape: f32[1,128], index: 7, kind: input, shape index: {}]
  %s8 = inlined_call_operand.vmem [shape: f32[512,128], index: 8, kind: output, shape index: {}]
  %s9 = sld [smem:[#allocation0]]
  $region65: #{custom_gcn_forward.9} parent=0
    _
  %s11 = ssub.s32 1, %s9
  %s12 = scalar_select 0, %s11, %s9
  loop: start=0, step=1, limit=6
  $region2: #{custom_gcn_forward.9} parent=0 // loop_pre_header
    _
  $region3: #{custom_gcn_forward.9} parent=0 // loop_header
    %s14 = sphi 0, %s18
    %p15 = scmp.ge.s32.totalorder %s14, 6
    %s24 = sphi 0, %s26
    %s27 = sphi 0, %s24
    %s28 = sphi 0, %s27
    %s44 = sphi 0, %s28
    %s48 = sphi 0, %s48
    %s50 = sphi 0, %s48
    %s51 = sphi 0, %s50
    %s65 = sphi 0, %s51
    %s71 = sphi 0, %s73
    %s74 = sphi 0, %s71
    %s75 = sphi 0, %s74
    %s91 = sphi 0, %s75
    %s95 = sphi 0, %s95
    %s97 = sphi 0, %s95
    %s98 = sphi 0, %s97
    %s112 = sphi 0, %s98
    %s116 = sphi 0, %s116
    %s118 = sphi 0, %s116
    %s119 = sphi 0, %s118
    %s133 = sphi 0, %s119
    %s137 = sphi 0, %s137
    %s139 = sphi 0, %s137
    %s140 = sphi 0, %s139
    %s154 = sphi 0, %s140
    %s158 = sphi 0, %s158
    %s160 = sphi 0, %s158
    %s161 = sphi 0, %s160
    %s175 = sphi 0, %s161
    %s179 = sphi 0, %s179
    %s181 = sphi 0, %s179
    %s182 = sphi 0, %s181
    %s196 = sphi 0, %s182
    %s202 = sphi 0, %s204
    %s205 = sphi 0, %s202
    %s206 = sphi 0, %s205
    %s222 = sphi 0, %s206
  $region4: #{custom_gcn_forward.9} parent=0 // loop_header_branch
    %17 = sbr.rel (%p15) target = $region8
  $region5: #{custom_gcn_forward.9} parent=0 // loop_body
    %s19 = ssub.s32 %s14, 1
    %s20 = ssub.s32 %s14, 2
    %s21 = sadd.s32 %s14, 1
    %s22 = ssub.s32 %s14, %s21
    %p23 = scmp.eq.s32.totalorder %s22, 0
    %s25 = sadd.s32 %s24, 1
    %s26 = scalar_select %p23, %s24, %s25
    %p29 = pneg %p23
    %p30 = scmp.eq.s32.totalorder %s14, 3
    %p31 = por %p29, %p30
    %p32 = scmp.ne.s32.totalorder %s24, %s27
    %p33 = scmp.eq.s32.totalorder %s14, 0
    %p34 = por %p32, %p33
    %p35 = scmp.ne.s32.totalorder %s24, %s27
    %p36 = scmp.eq.s32.totalorder %s19, 3
    %p37 = por %p35, %p36
    %p38 = scmp.ne.s32.totalorder %s27, %s28
    %p39 = scmp.eq.s32.totalorder %s19, 0
    %p40 = por %p38, %p39
    %p41 = scmp.ne.s32.totalorder %s27, %s28
    %p42 = scmp.eq.s32.totalorder %s20, 3
    %p43 = por %p41, %p42
    %p45 = scmp.ne.s32.totalorder %s28, %s44
    %p46 = scmp.eq.s32.totalorder %s20, 0
    %p47 = por %p45, %p46
    %s49 = sadd.s32 %s48, 1
    %p52 = scmp.eq.s32.totalorder %s14, 3
    %p53 = scmp.ne.s32.totalorder %s48, %s50
    %p54 = scmp.eq.s32.totalorder %s14, 0
    %p55 = por %p53, %p54
    %p56 = scmp.ne.s32.totalorder %s48, %s50
    %p57 = scmp.eq.s32.totalorder %s19, 3
    %p58 = por %p56, %p57
    %p59 = scmp.ne.s32.totalorder %s50, %s51
    %p60 = scmp.eq.s32.totalorder %s19, 0
    %p61 = por %p59, %p60
    %p62 = scmp.ne.s32.totalorder %s50, %s51
    %p63 = scmp.eq.s32.totalorder %s20, 3
    %p64 = por %p62, %p63
    %p66 = scmp.ne.s32.totalorder %s51, %s65
    %p67 = scmp.eq.s32.totalorder %s20, 0
    %p68 = por %p66, %p67
    %s69 = ssub.s32 %s14, %s21
    %p70 = scmp.eq.s32.totalorder %s69, 0
    %s72 = sadd.s32 %s71, 1
    %s73 = scalar_select %p70, %s71, %s72
    %p76 = pneg %p70
    %p77 = scmp.eq.s32.totalorder %s14, 3
    %p78 = por %p76, %p77
    %p79 = scmp.ne.s32.totalorder %s71, %s74
    %p80 = scmp.eq.s32.totalorder %s14, 0
    %p81 = por %p79, %p80
    %p82 = scmp.ne.s32.totalorder %s71, %s74
    %p83 = scmp.eq.s32.totalorder %s19, 3
    %p84 = por %p82, %p83
    %p85 = scmp.ne.s32.totalorder %s74, %s75
    %p86 = scmp.eq.s32.totalorder %s19, 0
    %p87 = por %p85, %p86
    %p88 = scmp.ne.s32.totalorder %s74, %s75
    %p89 = scmp.eq.s32.totalorder %s20, 3
    %p90 = por %p88, %p89
    %p92 = scmp.ne.s32.totalorder %s75, %s91
    %p93 = scmp.eq.s32.totalorder %s20, 0
    %p94 = por %p92, %p93
    %s96 = sadd.s32 %s95, 1
    %p99 = scmp.eq.s32.totalorder %s14, 3
    %p100 = scmp.ne.s32.totalorder %s95, %s97
    %p101 = scmp.eq.s32.totalorder %s14, 0
    %p102 = por %p100, %p101
    %p103 = scmp.ne.s32.totalorder %s95, %s97
    %p104 = scmp.eq.s32.totalorder %s19, 3
    %p105 = por %p103, %p104
    %p106 = scmp.ne.s32.totalorder %s97, %s98
    %p107 = scmp.eq.s32.totalorder %s19, 0
    %p108 = por %p106, %p107
    %p109 = scmp.ne.s32.totalorder %s97, %s98
    %p110 = scmp.eq.s32.totalorder %s20, 3
    %p111 = por %p109, %p110
    %p113 = scmp.ne.s32.totalorder %s98, %s112
    %p114 = scmp.eq.s32.totalorder %s20, 0
    %p115 = por %p113, %p114
    %s117 = sadd.s32 %s116, 1
    %p120 = scmp.eq.s32.totalorder %s14, 3
    %p121 = scmp.ne.s32.totalorder %s116, %s118
    %p122 = scmp.eq.s32.totalorder %s14, 0
    %p123 = por %p121, %p122
    %p124 = scmp.ne.s32.totalorder %s116, %s118
    %p125 = scmp.eq.s32.totalorder %s19, 3
    %p126 = por %p124, %p125
    %p127 = scmp.ne.s32.totalorder %s118, %s119
    %p128 = scmp.eq.s32.totalorder %s19, 0
    %p129 = por %p127, %p128
    %p130 = scmp.ne.s32.totalorder %s118, %s119
    %p131 = scmp.eq.s32.totalorder %s20, 3
    %p132 = por %p130, %p131
    %p134 = scmp.ne.s32.totalorder %s119, %s133
    %p135 = scmp.eq.s32.totalorder %s20, 0
    %p136 = por %p134, %p135
    %s138 = sadd.s32 %s137, 1
    %p141 = scmp.eq.s32.totalorder %s14, 3
    %p142 = scmp.ne.s32.totalorder %s137, %s139
    %p143 = scmp.eq.s32.totalorder %s14, 0
    %p144 = por %p142, %p143
    %p145 = scmp.ne.s32.totalorder %s137, %s139
    %p146 = scmp.eq.s32.totalorder %s19, 3
    %p147 = por %p145, %p146
    %p148 = scmp.ne.s32.totalorder %s139, %s140
    %p149 = scmp.eq.s32.totalorder %s19, 0
    %p150 = por %p148, %p149
    %p151 = scmp.ne.s32.totalorder %s139, %s140
    %p152 = scmp.eq.s32.totalorder %s20, 3
    %p153 = por %p151, %p152
    %p155 = scmp.ne.s32.totalorder %s140, %s154
    %p156 = scmp.eq.s32.totalorder %s20, 0
    %p157 = por %p155, %p156
    %s159 = sadd.s32 %s158, 1
    %p162 = scmp.eq.s32.totalorder %s14, 3
    %p163 = scmp.ne.s32.totalorder %s158, %s160
    %p164 = scmp.eq.s32.totalorder %s14, 0
    %p165 = por %p163, %p164
    %p166 = scmp.ne.s32.totalorder %s158, %s160
    %p167 = scmp.eq.s32.totalorder %s19, 3
    %p168 = por %p166, %p167
    %p169 = scmp.ne.s32.totalorder %s160, %s161
    %p170 = scmp.eq.s32.totalorder %s19, 0
    %p171 = por %p169, %p170
    %p172 = scmp.ne.s32.totalorder %s160, %s161
    %p173 = scmp.eq.s32.totalorder %s20, 3
    %p174 = por %p172, %p173
    %p176 = scmp.ne.s32.totalorder %s161, %s175
    %p177 = scmp.eq.s32.totalorder %s20, 0
    %p178 = por %p176, %p177
    %s180 = sadd.s32 %s179, 1
    %p183 = scmp.eq.s32.totalorder %s14, 3
    %p184 = scmp.ne.s32.totalorder %s179, %s181
    %p185 = scmp.eq.s32.totalorder %s14, 0
    %p186 = por %p184, %p185
    %p187 = scmp.ne.s32.totalorder %s179, %s181
    %p188 = scmp.eq.s32.totalorder %s19, 3
    %p189 = por %p187, %p188
    %p190 = scmp.ne.s32.totalorder %s181, %s182
    %p191 = scmp.eq.s32.totalorder %s19, 0
    %p192 = por %p190, %p191
    %p193 = scmp.ne.s32.totalorder %s181, %s182
    %p194 = scmp.eq.s32.totalorder %s20, 3
    %p195 = por %p193, %p194
    %p197 = scmp.ne.s32.totalorder %s182, %s196
    %p198 = scmp.eq.s32.totalorder %s20, 0
    %p199 = por %p197, %p198
    %s200 = ssub.s32 %s14, %s21
    %p201 = scmp.eq.s32.totalorder %s200, 0
    %s203 = sadd.s32 %s202, 1
    %s204 = scalar_select %p201, %s202, %s203
    %p207 = pneg %p201
    %p208 = scmp.eq.s32.totalorder %s14, 3
    %p209 = por %p207, %p208
    %p210 = scmp.ne.s32.totalorder %s202, %s205
    %p211 = scmp.eq.s32.totalorder %s14, 0
    %p212 = por %p210, %p211
    %p213 = scmp.ne.s32.totalorder %s202, %s205
    %p214 = scmp.eq.s32.totalorder %s19, 3
    %p215 = por %p213, %p214
    %p216 = scmp.ne.s32.totalorder %s205, %s206
    %p217 = scmp.eq.s32.totalorder %s19, 0
    %p218 = por %p216, %p217
    %p219 = scmp.ne.s32.totalorder %s205, %s206
    %p220 = scmp.eq.s32.totalorder %s20, 3
    %p221 = por %p219, %p220
    %p223 = scmp.ne.s32.totalorder %s206, %s222
    %p224 = scmp.eq.s32.totalorder %s20, 0
    %p225 = por %p223, %p224
    %p226 = scmp.le.s32.totalorder 1, %s14
    %p227 = scmp.lt.s32.totalorder %s14, 5
    %p228 = pnand %p226, %p227
    %p229 = pneg %p228
    // Predicated region
    $region9: #{custom_gcn_forward.9} parent=5 // pred_check
      _
    $region10: #{custom_gcn_forward.9} parent=5 // pred_check_branch
      %231 = sbr.rel (%p228) target = $region12
    $region11: #{custom_gcn_forward.9} parent=5 // pred_region
      %s232 = ssub.s32 %s14, 1
      // Predicated region
      $region13: #{custom_gcn_forward.9} parent=11 // pred_check
        %p233 = pneg %p61
      $region14: #{custom_gcn_forward.9} parent=11 // pred_check_branch
        %235 = sbr.rel (%p233) target = $region16
      $region15: #{custom_gcn_forward.9} parent=11 // pred_region
        _
      $region16: #{custom_gcn_forward.9} parent=11 // pred_fallthru
        _
      // Predicated region
      $region17: #{custom_gcn_forward.9} parent=11 // pred_check
        %p236 = pneg %p108
      $region18: #{custom_gcn_forward.9} parent=11 // pred_check_branch
        %238 = sbr.rel (%p236) target = $region20
      $region19: #{custom_gcn_forward.9} parent=11 // pred_region
        _
      $region20: #{custom_gcn_forward.9} parent=11 // pred_fallthru
        _
      // Predicated region
      $region21: #{custom_gcn_forward.9} parent=11 // pred_check
        %p239 = pneg %p129
      $region22: #{custom_gcn_forward.9} parent=11 // pred_check_branch
        %241 = sbr.rel (%p239) target = $region24
      $region23: #{custom_gcn_forward.9} parent=11 // pred_region
        _
      $region24: #{custom_gcn_forward.9} parent=11 // pred_fallthru
        _
      // Predicated region
      $region25: #{custom_gcn_forward.9} parent=11 // pred_check
        %p242 = pneg %p150
      $region26: #{custom_gcn_forward.9} parent=11 // pred_check_branch
        %244 = sbr.rel (%p242) target = $region28
      $region27: #{custom_gcn_forward.9} parent=11 // pred_region
        _
      $region28: #{custom_gcn_forward.9} parent=11 // pred_fallthru
        _
      // Predicated region
      $region29: #{custom_gcn_forward.9} parent=11 // pred_check
        %p245 = pneg %p171
      $region30: #{custom_gcn_forward.9} parent=11 // pred_check_branch
        %247 = sbr.rel (%p245) target = $region32
      $region31: #{custom_gcn_forward.9} parent=11 // pred_region
        _
      $region32: #{custom_gcn_forward.9} parent=11 // pred_fallthru
        _
      // Predicated region
      $region33: #{custom_gcn_forward.9} parent=11 // pred_check
        %p248 = pneg %p192
      $region34: #{custom_gcn_forward.9} parent=11 // pred_check_branch
        %250 = sbr.rel (%p248) target = $region36
      $region35: #{custom_gcn_forward.9} parent=11 // pred_region
        _
      $region36: #{custom_gcn_forward.9} parent=11 // pred_fallthru
        _
    $region12: #{custom_gcn_forward.9} parent=5 // pred_fallthru
      _
    %p251 = scmp.lt.s32.totalorder %s14, 4
    // Predicated region
    $region37: #{custom_gcn_forward.9} parent=5 // pred_check
      %p252 = pneg %p251
    $region38: #{custom_gcn_forward.9} parent=5 // pred_check_branch
      %254 = sbr.rel (%p252) target = $region40
    $region39: #{custom_gcn_forward.9} parent=5 // pred_region
      // Predicated region
      $region41: #{custom_gcn_forward.9} parent=39 // pred_check
        %p255 = pneg %p34
      $region42: #{custom_gcn_forward.9} parent=39 // pred_check_branch
        %257 = sbr.rel (%p255) target = $region44
      $region43: #{custom_gcn_forward.9} parent=39 // pred_region
        %s258 = smul.u32 16, %s14
        %p259 = scmp.lt.s32.totalorder %s258, 63
        %s260 = scalar_select %p259, %s258, 63
        %s261 = smul.addr %s260, 2
        %s262 = smul.addr %s261, 4
        %s263 = scalar_lea.vmem %s0, %s262
        %s264 = smul.u32 16, %s14
      $region44: #{custom_gcn_forward.9} parent=39 // pred_fallthru
        _
      // Predicated region
      $region45: #{custom_gcn_forward.9} parent=39 // pred_check
        %p265 = pneg %p81
      $region46: #{custom_gcn_forward.9} parent=39 // pred_check_branch
        %267 = sbr.rel (%p265) target = $region48
      $region47: #{custom_gcn_forward.9} parent=39 // pred_region
        %s268 = smul.u32 16, %s14
        %p269 = scmp.lt.s32.totalorder %s268, 63
        %s270 = scalar_select %p269, %s268, 63
        %s271 = smul.addr %s270, 4
        %s272 = scalar_lea.vmem %s2, %s271
        %s273 = smul.u32 16, %s14
      $region48: #{custom_gcn_forward.9} parent=39 // pred_fallthru
        _
    $region40: #{custom_gcn_forward.9} parent=5 // pred_fallthru
      _
    %p274 = scmp.le.s32.totalorder 1, %s14
    %p275 = scmp.lt.s32.totalorder %s14, 5
    %p276 = pnand %p274, %p275
    %p277 = pneg %p276
    // Predicated region
    $region49: #{custom_gcn_forward.9} parent=5 // pred_check
      _
    $region50: #{custom_gcn_forward.9} parent=5 // pred_check_branch
      %279 = sbr.rel (%p276) target = $region52
    $region51: #{custom_gcn_forward.9} parent=5 // pred_region
      %s280 = ssub.s32 %s14, 1
      %s281 = smul.u32 16, %s19
      %p282 = scmp.lt.s32.totalorder %s281, 63
      %s283 = scalar_select %p282, %s281, 63
      %s284 = smul.addr %s283, 2
      %s285 = smul.addr %s284, 4
      %s286 = scalar_lea.vmem %s0, %s285
      %p287 = pneg %p40
      %p288 = pneg %p37
      %p289 = pneg %p61
      %p290 = pneg %p58
      %s291 = smul.u32 16, %s19
      %p292 = scmp.lt.s32.totalorder %s291, 63
      %s293 = scalar_select %p292, %s291, 63
      %s294 = smul.addr %s293, 4
      %s295 = scalar_lea.vmem %s2, %s294
      %p296 = pneg %p87
      %p297 = pneg %p84
      %p298 = pneg %p108
      %p299 = pneg %p105
      %p300 = pneg %p129
      %p301 = pneg %p126
      %p302 = pneg %p150
      %p303 = pneg %p147
      %p304 = pneg %p171
      %p305 = pneg %p168
      %p306 = pneg %p192
      %p307 = pneg %p189
      %p308 = pneg %p218
      %p309 = pneg %p215
      %s310 = smul.u32 16, %s19
      %p311 = scmp.lt.s32.totalorder %s310, 63
      %s312 = scalar_select %p311, %s310, 63
      %s313 = smul.addr %s312, 8
      %s314 = scalar_lea.vmem %s8, %s313
      %s315 = smul.u32 16, %s19
      %p316 = scmp.lt.s32.totalorder %s315, 63
      %s317 = scalar_select %p316, %s315, 63
      %s318 = smul.addr %s317, 2
      %s319 = smul.addr %s318, 4
      %s320 = scalar_lea.vmem %s0, %s319
      %s321 = smul.u32 16, %s19
      %s322 = smul.u32 16, %s19
      %p323 = scmp.lt.s32.totalorder %s322, 63
      %s324 = scalar_select %p323, %s322, 63
      %s325 = smul.addr %s324, 4
      %s326 = scalar_lea.vmem %s2, %s325
      %s327 = smul.u32 16, %s19
      %s328 = smul.u32 16, %s19
      %p329 = scmp.lt.s32.totalorder %s328, 63
      %s330 = scalar_select %p329, %s328, 63
      %s331 = smul.addr %s330, 8
      %s332 = scalar_lea.vmem %s8, %s331
      %s333 = smul.u32 16, %s19
      %v335 = vld [vmem:[%s320] sm:$0xff]
      %v336 = vld [vmem:[%s320 + $0x8] sm:$0xff]
      %v337 = vld [vmem:[%s320 + $0x10] sm:$0xff]
      %v338 = vld [vmem:[%s320 + $0x18] sm:$0xff]
      %v339 = vld [vmem:[%s320 + $0x20] sm:$0xff]
      %v340 = vld [vmem:[%s320 + $0x28] sm:$0xff]
      %v341 = vld [vmem:[%s320 + $0x30] sm:$0xff]
      %v342 = vld [vmem:[%s320 + $0x38] sm:$0xff]
      %v343 = vld [vmem:[%s320 + $0x40] sm:$0xff]
      %v344 = vld [vmem:[%s320 + $0x48] sm:$0xff]
      %v345 = vld [vmem:[%s320 + $0x50] sm:$0xff]
      %v346 = vld [vmem:[%s320 + $0x58] sm:$0xff]
      %v347 = vld [vmem:[%s320 + $0x60] sm:$0xff]
      %v348 = vld [vmem:[%s320 + $0x68] sm:$0xff]
      %v349 = vld [vmem:[%s320 + $0x70] sm:$0xff]
      %v350 = vld [vmem:[%s320 + $0x78] sm:$0xff]
      %v351 = vld [vmem:[%s1] sm:$0xf]
      %v352 = vld [vmem:[%s1 + $0x4] sm:$0xf]
      %v353 = vld [vmem:[%s1 + $0x8] sm:$0xf]
      %v354 = vld [vmem:[%s1 + $0xc] sm:$0xf]
      %v355 = vld [vmem:[%s1 + $0x10] sm:$0xf]
      %v356 = vld [vmem:[%s1 + $0x14] sm:$0xf]
      %v357 = vld [vmem:[%s1 + $0x18] sm:$0xf]
      %v358 = vld [vmem:[%s1 + $0x1c] sm:$0xf]
      %v359 = vld [vmem:[%s1 + $0x20] sm:$0xf]
      %v360 = vld [vmem:[%s1 + $0x24] sm:$0xf]
      %v361 = vld [vmem:[%s1 + $0x28] sm:$0xf]
      %v362 = vld [vmem:[%s1 + $0x2c] sm:$0xf]
      %v363 = vld [vmem:[%s1 + $0x30] sm:$0xf]
      %v364 = vld [vmem:[%s1 + $0x34] sm:$0xf]
      %v365 = vld [vmem:[%s1 + $0x38] sm:$0xf]
      %v366 = vld [vmem:[%s1 + $0x3c] sm:$0xf]
      %v367 = vld [vmem:[%s1 + $0x40] sm:$0xf]
      %v368 = vld [vmem:[%s1 + $0x44] sm:$0xf]
      %v369 = vld [vmem:[%s1 + $0x48] sm:$0xf]
      %v370 = vld [vmem:[%s1 + $0x4c] sm:$0xf]
      %v371 = vld [vmem:[%s1 + $0x50] sm:$0xf]
      %v372 = vld [vmem:[%s1 + $0x54] sm:$0xf]
      %v373 = vld [vmem:[%s1 + $0x58] sm:$0xf]
      %v374 = vld [vmem:[%s1 + $0x5c] sm:$0xf]
      %v375 = vld [vmem:[%s1 + $0x60] sm:$0xf]
      %v376 = vld [vmem:[%s1 + $0x64] sm:$0xf]
      %v377 = vld [vmem:[%s1 + $0x68] sm:$0xf]
      %v378 = vld [vmem:[%s1 + $0x6c] sm:$0xf]
      %v379 = vld [vmem:[%s1 + $0x70] sm:$0xf]
      %v380 = vld [vmem:[%s1 + $0x74] sm:$0xf]
      %v381 = vld [vmem:[%s1 + $0x78] sm:$0xf]
      %v382 = vld [vmem:[%s1 + $0x7c] sm:$0xf]
      %v399 = vunpack.c.l.b16 %v335
      %v400 = vunpack.c.h.b16 %v335
      %v401 = vunpack.c.l.b16 %v336
      %v402 = vunpack.c.h.b16 %v336
      %v403 = vunpack.c.l.b16 %v337
      %v404 = vunpack.c.h.b16 %v337
      %v405 = vunpack.c.l.b16 %v338
      %v406 = vunpack.c.h.b16 %v338
      %v407 = vunpack.c.l.b16 %v339
      %v408 = vunpack.c.h.b16 %v339
      %v409 = vunpack.c.l.b16 %v340
      %v410 = vunpack.c.h.b16 %v340
      %v411 = vunpack.c.l.b16 %v341
      %v412 = vunpack.c.h.b16 %v341
      %v413 = vunpack.c.l.b16 %v342
      %v414 = vunpack.c.h.b16 %v342
      %v415 = vunpack.c.l.b16 %v343
      %v416 = vunpack.c.h.b16 %v343
      %v417 = vunpack.c.l.b16 %v344
      %v418 = vunpack.c.h.b16 %v344
      %v419 = vunpack.c.l.b16 %v345
      %v420 = vunpack.c.h.b16 %v345
      %v421 = vunpack.c.l.b16 %v346
      %v422 = vunpack.c.h.b16 %v346
      %v423 = vunpack.c.l.b16 %v347
      %v424 = vunpack.c.h.b16 %v347
      %v425 = vunpack.c.l.b16 %v348
      %v426 = vunpack.c.h.b16 %v348
      %v427 = vunpack.c.l.b16 %v349
      %v428 = vunpack.c.h.b16 %v349
      %v429 = vunpack.c.l.b16 %v350
      %v430 = vunpack.c.h.b16 %v350
      %v431 = vpack.c.b16 %v401, %v399
      %v432 = vpack.c.b16 %v402, %v400
      %v433 = vpack.c.b16 %v405, %v403
      %v434 = vpack.c.b16 %v406, %v404
      %v435 = vpack.c.b16 %v409, %v407
      %v436 = vpack.c.b16 %v410, %v408
      %v437 = vpack.c.b16 %v413, %v411
      %v438 = vpack.c.b16 %v414, %v412
      %v439 = vpack.c.b16 %v417, %v415
      %v440 = vpack.c.b16 %v418, %v416
      %v441 = vpack.c.b16 %v421, %v419
      %v442 = vpack.c.b16 %v422, %v420
      %v443 = vpack.c.b16 %v425, %v423
      %v444 = vpack.c.b16 %v426, %v424
      %v445 = vpack.c.b16 %v429, %v427
      %v446 = vpack.c.b16 %v430, %v428
      %v495 = vunpack.c.l.b16 %v351
      %v496 = vunpack.c.l.b16 %v352
      %v497 = vunpack.c.l.b16 %v353
      %v498 = vunpack.c.l.b16 %v354
      %v499 = vunpack.c.l.b16 %v355
      %v500 = vunpack.c.l.b16 %v356
      %v501 = vunpack.c.l.b16 %v357
      %v502 = vunpack.c.l.b16 %v358
      %v503 = vunpack.c.l.b16 %v359
      %v504 = vunpack.c.l.b16 %v360
      %v505 = vunpack.c.l.b16 %v361
      %v506 = vunpack.c.l.b16 %v362
      %v507 = vunpack.c.l.b16 %v363
      %v508 = vunpack.c.l.b16 %v364
      %v509 = vunpack.c.l.b16 %v365
      %v510 = vunpack.c.l.b16 %v366
      %v511 = vunpack.c.l.b16 %v367
      %v512 = vunpack.c.l.b16 %v368
      %v513 = vunpack.c.l.b16 %v369
      %v514 = vunpack.c.l.b16 %v370
      %v515 = vunpack.c.l.b16 %v371
      %v516 = vunpack.c.l.b16 %v372
      %v517 = vunpack.c.l.b16 %v373
      %v518 = vunpack.c.l.b16 %v374
      %v519 = vunpack.c.l.b16 %v375
      %v520 = vunpack.c.l.b16 %v376
      %v521 = vunpack.c.l.b16 %v377
      %v522 = vunpack.c.l.b16 %v378
      %v523 = vunpack.c.l.b16 %v379
      %v524 = vunpack.c.l.b16 %v380
      %v525 = vunpack.c.l.b16 %v381
      %v526 = vunpack.c.l.b16 %v382
      %v527 = vpack.c.b16 %v496, %v495
      %v528 = vpack.c.b16 %v498, %v497
      %v529 = vpack.c.b16 %v500, %v499
      %v530 = vpack.c.b16 %v502, %v501
      %v531 = vpack.c.b16 %v504, %v503
      %v532 = vpack.c.b16 %v506, %v505
      %v533 = vpack.c.b16 %v508, %v507
      %v534 = vpack.c.b16 %v510, %v509
      %v535 = vpack.c.b16 %v512, %v511
      %v536 = vpack.c.b16 %v514, %v513
      %v537 = vpack.c.b16 %v516, %v515
      %v538 = vpack.c.b16 %v518, %v517
      %v539 = vpack.c.b16 %v520, %v519
      %v540 = vpack.c.b16 %v522, %v521
      %v541 = vpack.c.b16 %v524, %v523
      %v542 = vpack.c.b16 %v526, %v525
      %559 = vmatprep.subr.bf16.mxu0 0
      %560 = vmatpush1.bf16.msra.mxu0 %v527
      %561 = vmatprep.subr.bf16.mxu0 0
      %562 = vmatpush1.bf16.msra.mxu0 %v528
      %563 = vmatprep.subr.bf16.mxu0 0
      %564 = vmatpush1.bf16.msra.mxu0 %v529
      %565 = vmatprep.subr.bf16.mxu0 0
      %566 = vmatpush1.bf16.msra.mxu0 %v530
      %567 = vmatprep.subr.bf16.mxu0 0
      %568 = vmatpush1.bf16.msra.mxu0 %v531
      %569 = vmatprep.subr.bf16.mxu0 0
      %570 = vmatpush1.bf16.msra.mxu0 %v532
      %571 = vmatprep.subr.bf16.mxu0 0
      %572 = vmatpush1.bf16.msra.mxu0 %v533
      %573 = vmatprep.subr.bf16.mxu0 0
      %574 = vmatpush1.bf16.msra.mxu0 %v534
      %575 = vmatprep.subr.bf16.mxu0 0
      %576 = vmatpush1.bf16.msra.mxu0 %v535
      %577 = vmatprep.subr.bf16.mxu0 0
      %578 = vmatpush1.bf16.msra.mxu0 %v536
      %579 = vmatprep.subr.bf16.mxu0 0
      %580 = vmatpush1.bf16.msra.mxu0 %v537
      %581 = vmatprep.subr.bf16.mxu0 0
      %582 = vmatpush1.bf16.msra.mxu0 %v538
      %583 = vmatprep.subr.bf16.mxu0 0
      %584 = vmatpush1.bf16.msra.mxu0 %v539
      %585 = vmatprep.subr.bf16.mxu0 0
      %586 = vmatpush1.bf16.msra.mxu0 %v540
      %587 = vmatprep.subr.bf16.mxu0 0
      %588 = vmatpush1.bf16.msra.mxu0 %v541
      %589 = vmatprep.subr.bf16.mxu0 0
      %590 = vmatpush1.bf16.msra.mxu0 %v542
      %591 = vmatprep.mubr.bf16.mxu0 %v432
      %592 = vmatmul.mubr.bf16.gmra.mrb[0].mxu0 %v431
      %v593 = vpop.f32.mrb[0].mxu0
      %v594 = vadd.f32 0.0, %v593
      %v595 = vpop.f32.mrb[0].mxu0
      %v596 = vpop.f32.mrb[0].mxu0
      %v597 = vadd.f32 0.0, %v596
      %v598 = vpop.f32.mrb[0].mxu0
      %599 = vmatprep.mubr.bf16.mxu0 %v434
      %600 = vmatmul.mubr.bf16.gmra.mrb[0].mxu0 %v433
      %v601 = vpop.f32.mrb[0].mxu0
      %v602 = vadd.f32 0.0, %v601
      %v603 = vpop.f32.mrb[0].mxu0
      %v604 = vpop.f32.mrb[0].mxu0
      %v605 = vadd.f32 0.0, %v604
      %v606 = vpop.f32.mrb[0].mxu0
      %607 = vmatprep.mubr.bf16.mxu0 %v436
      %608 = vmatmul.mubr.bf16.gmra.mrb[0].mxu0 %v435
      %v609 = vpop.f32.mrb[0].mxu0
      %v610 = vadd.f32 0.0, %v609
      %v611 = vpop.f32.mrb[0].mxu0
      %v612 = vpop.f32.mrb[0].mxu0
      %v613 = vadd.f32 0.0, %v612
      %v614 = vpop.f32.mrb[0].mxu0
      %615 = vmatprep.mubr.bf16.mxu0 %v438
      %616 = vmatmul.mubr.bf16.gmra.mrb[0].mxu0 %v437
      %v617 = vpop.f32.mrb[0].mxu0
      %v618 = vadd.f32 0.0, %v617
      %v619 = vpop.f32.mrb[0].mxu0
      %v620 = vpop.f32.mrb[0].mxu0
      %v621 = vadd.f32 0.0, %v620
      %v622 = vpop.f32.mrb[0].mxu0
      %623 = vmatprep.mubr.bf16.mxu0 %v440
      %624 = vmatmul.mubr.bf16.gmra.mrb[0].mxu0 %v439
      %v625 = vpop.f32.mrb[0].mxu0
      %v626 = vadd.f32 0.0, %v625
      %v627 = vpop.f32.mrb[0].mxu0
      %v628 = vpop.f32.mrb[0].mxu0
      %v629 = vadd.f32 0.0, %v628
      %v630 = vpop.f32.mrb[0].mxu0
      %631 = vmatprep.mubr.bf16.mxu0 %v442
      %632 = vmatmul.mubr.bf16.gmra.mrb[0].mxu0 %v441
      %v633 = vpop.f32.mrb[0].mxu0
      %v634 = vadd.f32 0.0, %v633
      %v635 = vpop.f32.mrb[0].mxu0
      %v636 = vpop.f32.mrb[0].mxu0
      %v637 = vadd.f32 0.0, %v636
      %v638 = vpop.f32.mrb[0].mxu0
      %639 = vmatprep.mubr.bf16.mxu0 %v444
      %640 = vmatmul.mubr.bf16.gmra.mrb[0].mxu0 %v443
      %v641 = vpop.f32.mrb[0].mxu0
      %v642 = vadd.f32 0.0, %v641
      %v643 = vpop.f32.mrb[0].mxu0
      %v644 = vpop.f32.mrb[0].mxu0
      %v645 = vadd.f32 0.0, %v644
      %v646 = vpop.f32.mrb[0].mxu0
      %647 = vmatprep.mubr.bf16.mxu0 %v446
      %648 = vmatmul.mubr.bf16.gmra.mrb[0].mxu0 %v445
      %v649 = vpop.f32.mrb[0].mxu0
      %v650 = vadd.f32 0.0, %v649
      %v651 = vpop.f32.mrb[0].mxu0
      %v652 = vpop.f32.mrb[0].mxu0
      %v653 = vadd.f32 0.0, %v652
      %v654 = vpop.f32.mrb[0].mxu0
      %655 = vdwg.mxu0
      %v656 = vpack.c.bf16 %v597, %v594
      %v657 = vpack.c.bf16 %v605, %v602
      %v658 = vpack.c.bf16 %v613, %v610
      %v659 = vpack.c.bf16 %v621, %v618
      %v660 = vpack.c.bf16 %v629, %v626
      %v661 = vpack.c.bf16 %v637, %v634
      %v662 = vpack.c.bf16 %v645, %v642
      %v663 = vpack.c.bf16 %v653, %v650
      %v664 = vld [vmem:[%s5] sm:$0xf]
      %v665 = vld [vmem:[%s5 + $0x4] sm:$0xf]
      %v666 = vld [vmem:[%s5 + $0x8] sm:$0xf]
      %v667 = vld [vmem:[%s5 + $0xc] sm:$0xf]
      %v668 = vld [vmem:[%s5 + $0x10] sm:$0xf]
      %v669 = vld [vmem:[%s5 + $0x14] sm:$0xf]
      %v670 = vld [vmem:[%s5 + $0x18] sm:$0xf]
      %v671 = vld [vmem:[%s5 + $0x1c] sm:$0xf]
      %v672 = vld [vmem:[%s5 + $0x20] sm:$0xf]
      %v673 = vld [vmem:[%s5 + $0x24] sm:$0xf]
      %v674 = vld [vmem:[%s5 + $0x28] sm:$0xf]
      %v675 = vld [vmem:[%s5 + $0x2c] sm:$0xf]
      %v676 = vld [vmem:[%s5 + $0x30] sm:$0xf]
      %v677 = vld [vmem:[%s5 + $0x34] sm:$0xf]
      %v678 = vld [vmem:[%s5 + $0x38] sm:$0xf]
      %v679 = vld [vmem:[%s5 + $0x3c] sm:$0xf]
      %v680 = vld [vmem:[%s326] sm:$0xf]
      %v681 = vld [vmem:[%s326 + $0x4] sm:$0xf]
      %v682 = vld [vmem:[%s326 + $0x8] sm:$0xf]
      %v683 = vld [vmem:[%s326 + $0xc] sm:$0xf]
      %v684 = vld [vmem:[%s326 + $0x10] sm:$0xf]
      %v685 = vld [vmem:[%s326 + $0x14] sm:$0xf]
      %v686 = vld [vmem:[%s326 + $0x18] sm:$0xf]
      %v687 = vld [vmem:[%s326 + $0x1c] sm:$0xf]
      %v688 = vld [vmem:[%s326 + $0x20] sm:$0xf]
      %v689 = vld [vmem:[%s326 + $0x24] sm:$0xf]
      %v690 = vld [vmem:[%s326 + $0x28] sm:$0xf]
      %v691 = vld [vmem:[%s326 + $0x2c] sm:$0xf]
      %v692 = vld [vmem:[%s326 + $0x30] sm:$0xf]
      %v693 = vld [vmem:[%s326 + $0x34] sm:$0xf]
      %v694 = vld [vmem:[%s326 + $0x38] sm:$0xf]
      %v695 = vld [vmem:[%s326 + $0x3c] sm:$0xf]
      %v696 = vld [vmem:[%s3] sm:$0xf]
      %v697 = vld [vmem:[%s3 + $0x4] sm:$0xf]
      %v698 = vld [vmem:[%s3 + $0x8] sm:$0xf]
      %v699 = vld [vmem:[%s3 + $0xc] sm:$0xf]
      %v700 = vld [vmem:[%s3 + $0x10] sm:$0xf]
      %v701 = vld [vmem:[%s3 + $0x14] sm:$0xf]
      %v702 = vld [vmem:[%s3 + $0x18] sm:$0xf]
      %v703 = vld [vmem:[%s3 + $0x1c] sm:$0xf]
      %v704 = vld [vmem:[%s3 + $0x20] sm:$0xf]
      %v705 = vld [vmem:[%s3 + $0x24] sm:$0xf]
      %v706 = vld [vmem:[%s3 + $0x28] sm:$0xf]
      %v707 = vld [vmem:[%s3 + $0x2c] sm:$0xf]
      %v708 = vld [vmem:[%s3 + $0x30] sm:$0xf]
      %v709 = vld [vmem:[%s3 + $0x34] sm:$0xf]
      %v710 = vld [vmem:[%s3 + $0x38] sm:$0xf]
      %v711 = vld [vmem:[%s3 + $0x3c] sm:$0xf]
      %v712 = vld [vmem:[%s4] sm:$0x1]
      %v714 = vlaneseq
      %v715 = vshrl.u32 %v714, 7
      %v716 = vsub.s32 0, %v715
      %v717 = vrot.slane %v712, %v716
      %v735 = vunpack.c.l.b16 %v680
      %v736 = vunpack.c.l.b16 %v681
      %v737 = vunpack.c.l.b16 %v682
      %v738 = vunpack.c.l.b16 %v683
      %v739 = vunpack.c.l.b16 %v684
      %v740 = vunpack.c.l.b16 %v685
      %v741 = vunpack.c.l.b16 %v686
      %v742 = vunpack.c.l.b16 %v687
      %v743 = vunpack.c.l.b16 %v688
      %v744 = vunpack.c.l.b16 %v689
      %v745 = vunpack.c.l.b16 %v690
      %v746 = vunpack.c.l.b16 %v691
      %v747 = vunpack.c.l.b16 %v692
      %v748 = vunpack.c.l.b16 %v693
      %v749 = vunpack.c.l.b16 %v694
      %v750 = vunpack.c.l.b16 %v695
      %v751 = vpack.c.b16 %v736, %v735
      %v752 = vpack.c.b16 %v738, %v737
      %v753 = vpack.c.b16 %v740, %v739
      %v754 = vpack.c.b16 %v742, %v741
      %v755 = vpack.c.b16 %v744, %v743
      %v756 = vpack.c.b16 %v746, %v745
      %v757 = vpack.c.b16 %v748, %v747
      %v758 = vpack.c.b16 %v750, %v749
      %v783 = vunpack.c.l.b16 %v696
      %v784 = vunpack.c.l.b16 %v697
      %v785 = vunpack.c.l.b16 %v698
      %v786 = vunpack.c.l.b16 %v699
      %v787 = vunpack.c.l.b16 %v700
      %v788 = vunpack.c.l.b16 %v701
      %v789 = vunpack.c.l.b16 %v702
      %v790 = vunpack.c.l.b16 %v703
      %v791 = vunpack.c.l.b16 %v704
      %v792 = vunpack.c.l.b16 %v705
      %v793 = vunpack.c.l.b16 %v706
      %v794 = vunpack.c.l.b16 %v707
      %v795 = vunpack.c.l.b16 %v708
      %v796 = vunpack.c.l.b16 %v709
      %v797 = vunpack.c.l.b16 %v710
      %v798 = vunpack.c.l.b16 %v711
      %v799 = vpack.c.b16 %v784, %v783
      %v800 = vpack.c.b16 %v786, %v785
      %v801 = vpack.c.b16 %v788, %v787
      %v802 = vpack.c.b16 %v790, %v789
      %v803 = vpack.c.b16 %v792, %v791
      %v804 = vpack.c.b16 %v794, %v793
      %v805 = vpack.c.b16 %v796, %v795
      %v806 = vpack.c.b16 %v798, %v797
      %815 = vmatprep.subr.bf16.mxu0 0
      %816 = vmatpush1.bf16.msra.mxu0 %v799
      %817 = vmatprep.subr.bf16.mxu0 0
      %818 = vmatpush1.bf16.msra.mxu0 %v800
      %819 = vmatprep.subr.bf16.mxu0 0
      %820 = vmatpush1.bf16.msra.mxu0 %v801
      %821 = vmatprep.subr.bf16.mxu0 0
      %822 = vmatpush1.bf16.msra.mxu0 %v802
      %823 = vmatprep.subr.bf16.mxu0 0
      %824 = vmatpush1.bf16.msra.mxu0 %v803
      %825 = vmatprep.subr.bf16.mxu0 0
      %826 = vmatpush1.bf16.msra.mxu0 %v804
      %827 = vmatprep.subr.bf16.mxu0 0
      %828 = vmatpush1.bf16.msra.mxu0 %v805
      %829 = vmatprep.subr.bf16.mxu0 0
      %830 = vmatpush1.bf16.msra.mxu0 %v806
      %831 = vmatprep.subr.bf16.mxu0 0
      %832 = vmatpush1.bf16.msra.mxu0 0
      %833 = vmatprep.subr.bf16.mxu0 0
      %834 = vmatpush1.bf16.msra.mxu0 0
      %835 = vmatprep.subr.bf16.mxu0 0
      %836 = vmatpush1.bf16.msra.mxu0 0
      %837 = vmatprep.subr.bf16.mxu0 0
      %838 = vmatpush1.bf16.msra.mxu0 0
      %839 = vmatprep.subr.bf16.mxu0 0
      %840 = vmatpush1.bf16.msra.mxu0 0
      %841 = vmatprep.subr.bf16.mxu0 0
      %842 = vmatpush1.bf16.msra.mxu0 0
      %843 = vmatprep.subr.bf16.mxu0 0
      %844 = vmatpush1.bf16.msra.mxu0 0
      %845 = vmatprep.subr.bf16.mxu0 0
      %846 = vmatpush1.bf16.msra.mxu0 0
      %847 = vmatprep.mubr.bf16.mxu0 0
      %848 = vmatmul.mubr.bf16.gmra.mrb[0].mxu0 %v751
      %v849 = vpop.f32.mrb[0].mxu0
      %v850 = vadd.f32 %v717, %v849
      %v851 = vpop.f32.mrb[0].mxu0
      %v852 = vpop.f32.mrb[0].mxu0
      %v853 = vadd.f32 %v717, %v852
      %v854 = vpop.f32.mrb[0].mxu0
      %855 = vmatprep.mubr.bf16.mxu0 0
      %856 = vmatmul.mubr.bf16.gmra.mrb[0].mxu0 %v752
      %v857 = vpop.f32.mrb[0].mxu0
      %v858 = vadd.f32 %v717, %v857
      %v859 = vpop.f32.mrb[0].mxu0
      %v860 = vpop.f32.mrb[0].mxu0
      %v861 = vadd.f32 %v717, %v860
      %v862 = vpop.f32.mrb[0].mxu0
      %863 = vmatprep.mubr.bf16.mxu0 0
      %864 = vmatmul.mubr.bf16.gmra.mrb[0].mxu0 %v753
      %v865 = vpop.f32.mrb[0].mxu0
      %v866 = vadd.f32 %v717, %v865
      %v867 = vpop.f32.mrb[0].mxu0
      %v868 = vpop.f32.mrb[0].mxu0
      %v869 = vadd.f32 %v717, %v868
      %v870 = vpop.f32.mrb[0].mxu0
      %871 = vmatprep.mubr.bf16.mxu0 0
      %872 = vmatmul.mubr.bf16.gmra.mrb[0].mxu0 %v754
      %v873 = vpop.f32.mrb[0].mxu0
      %v874 = vadd.f32 %v717, %v873
      %v875 = vpop.f32.mrb[0].mxu0
      %v876 = vpop.f32.mrb[0].mxu0
      %v877 = vadd.f32 %v717, %v876
      %v878 = vpop.f32.mrb[0].mxu0
      %879 = vmatprep.mubr.bf16.mxu0 0
      %880 = vmatmul.mubr.bf16.gmra.mrb[0].mxu0 %v755
      %v881 = vpop.f32.mrb[0].mxu0
      %v882 = vadd.f32 %v717, %v881
      %v883 = vpop.f32.mrb[0].mxu0
      %v884 = vpop.f32.mrb[0].mxu0
      %v885 = vadd.f32 %v717, %v884
      %v886 = vpop.f32.mrb[0].mxu0
      %887 = vmatprep.mubr.bf16.mxu0 0
      %888 = vmatmul.mubr.bf16.gmra.mrb[0].mxu0 %v756
      %v889 = vpop.f32.mrb[0].mxu0
      %v890 = vadd.f32 %v717, %v889
      %v891 = vpop.f32.mrb[0].mxu0
      %v892 = vpop.f32.mrb[0].mxu0
      %v893 = vadd.f32 %v717, %v892
      %v894 = vpop.f32.mrb[0].mxu0
      %895 = vmatprep.mubr.bf16.mxu0 0
      %896 = vmatmul.mubr.bf16.gmra.mrb[0].mxu0 %v757
      %v897 = vpop.f32.mrb[0].mxu0
      %v898 = vadd.f32 %v717, %v897
      %v899 = vpop.f32.mrb[0].mxu0
      %v900 = vpop.f32.mrb[0].mxu0
      %v901 = vadd.f32 %v717, %v900
      %v902 = vpop.f32.mrb[0].mxu0
      %903 = vmatprep.mubr.bf16.mxu0 0
      %904 = vmatmul.mubr.bf16.gmra.mrb[0].mxu0 %v758
      %v905 = vpop.f32.mrb[0].mxu0
      %v906 = vadd.f32 %v717, %v905
      %v907 = vpop.f32.mrb[0].mxu0
      %v908 = vpop.f32.mrb[0].mxu0
      %v909 = vadd.f32 %v717, %v908
      %v910 = vpop.f32.mrb[0].mxu0
      %911 = vdwg.mxu0
      %v912 = vpack.c.bf16 %v853, %v850
      %v913 = vpack.c.bf16 %v861, %v858
      %v914 = vpack.c.bf16 %v869, %v866
      %v915 = vpack.c.bf16 %v877, %v874
      %v916 = vpack.c.bf16 %v885, %v882
      %v917 = vpack.c.bf16 %v893, %v890
      %v918 = vpack.c.bf16 %v901, %v898
      %v919 = vpack.c.bf16 %v909, %v906
      %v920 = vld [vmem:[%s6] sm:$0xf]
      %v921 = vld [vmem:[%s6 + $0x4] sm:$0xf]
      %v922 = vld [vmem:[%s6 + $0x8] sm:$0xf]
      %v923 = vld [vmem:[%s6 + $0xc] sm:$0xf]
      %v924 = vld [vmem:[%s6 + $0x10] sm:$0xf]
      %v925 = vld [vmem:[%s6 + $0x14] sm:$0xf]
      %v926 = vld [vmem:[%s6 + $0x18] sm:$0xf]
      %v927 = vld [vmem:[%s6 + $0x1c] sm:$0xf]
      %v928 = vld [vmem:[%s6 + $0x20] sm:$0xf]
      %v929 = vld [vmem:[%s6 + $0x24] sm:$0xf]
      %v930 = vld [vmem:[%s6 + $0x28] sm:$0xf]
      %v931 = vld [vmem:[%s6 + $0x2c] sm:$0xf]
      %v932 = vld [vmem:[%s6 + $0x30] sm:$0xf]
      %v933 = vld [vmem:[%s6 + $0x34] sm:$0xf]
      %v934 = vld [vmem:[%s6 + $0x38] sm:$0xf]
      %v935 = vld [vmem:[%s6 + $0x3c] sm:$0xf]
      %v952 = vunpack.c.l.b16 %v920
      %v953 = vunpack.c.l.b16 %v921
      %v954 = vunpack.c.l.b16 %v922
      %v955 = vunpack.c.l.b16 %v923
      %v956 = vunpack.c.l.b16 %v924
      %v957 = vunpack.c.l.b16 %v925
      %v958 = vunpack.c.l.b16 %v926
      %v959 = vunpack.c.l.b16 %v927
      %v960 = vunpack.c.l.b16 %v928
      %v961 = vunpack.c.l.b16 %v929
      %v962 = vunpack.c.l.b16 %v930
      %v963 = vunpack.c.l.b16 %v931
      %v964 = vunpack.c.l.b16 %v932
      %v965 = vunpack.c.l.b16 %v933
      %v966 = vunpack.c.l.b16 %v934
      %v967 = vunpack.c.l.b16 %v935
      %v968 = vpack.c.b16 %v953, %v952
      %v969 = vpack.c.b16 %v955, %v954
      %v970 = vpack.c.b16 %v957, %v956
      %v971 = vpack.c.b16 %v959, %v958
      %v972 = vpack.c.b16 %v961, %v960
      %v973 = vpack.c.b16 %v963, %v962
      %v974 = vpack.c.b16 %v965, %v964
      %v975 = vpack.c.b16 %v967, %v966
      %984 = vmatprep.subr.bf16.mxu0 0
      %985 = vmatpush1.bf16.msra.mxu0 %v968
      %986 = vmatprep.subr.bf16.mxu0 0
      %987 = vmatpush1.bf16.msra.mxu0 %v969
      %988 = vmatprep.subr.bf16.mxu0 0
      %989 = vmatpush1.bf16.msra.mxu0 %v970
      %990 = vmatprep.subr.bf16.mxu0 0
      %991 = vmatpush1.bf16.msra.mxu0 %v971
      %992 = vmatprep.subr.bf16.mxu0 0
      %993 = vmatpush1.bf16.msra.mxu0 %v972
      %994 = vmatprep.subr.bf16.mxu0 0
      %995 = vmatpush1.bf16.msra.mxu0 %v973
      %996 = vmatprep.subr.bf16.mxu0 0
      %997 = vmatpush1.bf16.msra.mxu0 %v974
      %998 = vmatprep.subr.bf16.mxu0 0
      %999 = vmatpush1.bf16.msra.mxu0 %v975
      %1000 = vmatprep.subr.bf16.mxu0 0
      %1001 = vmatpush1.bf16.msra.mxu0 0
      %1002 = vmatprep.subr.bf16.mxu0 0
      %1003 = vmatpush1.bf16.msra.mxu0 0
      %1004 = vmatprep.subr.bf16.mxu0 0
      %1005 = vmatpush1.bf16.msra.mxu0 0
      %1006 = vmatprep.subr.bf16.mxu0 0
      %1007 = vmatpush1.bf16.msra.mxu0 0
      %1008 = vmatprep.subr.bf16.mxu0 0
      %1009 = vmatpush1.bf16.msra.mxu0 0
      %1010 = vmatprep.subr.bf16.mxu0 0
      %1011 = vmatpush1.bf16.msra.mxu0 0
      %1012 = vmatprep.subr.bf16.mxu0 0
      %1013 = vmatpush1.bf16.msra.mxu0 0
      %1014 = vmatprep.subr.bf16.mxu0 0
      %1015 = vmatpush1.bf16.msra.mxu0 0
      %1016 = vmatprep.mubr.bf16.mxu0 0
      %1017 = vmatmul.mubr.bf16.gmra.mrb[0].mxu0 %v912
      %v1018 = vpop.f32.mrb[0].mxu0
      %v1019 = vadd.f32 0.0, %v1018
      %v1020 = vpop.f32.mrb[0].mxu0
      %v1021 = vpop.f32.mrb[0].mxu0
      %v1022 = vadd.f32 0.0, %v1021
      %v1023 = vpop.f32.mrb[0].mxu0
      %1024 = vmatprep.mubr.bf16.mxu0 0
      %1025 = vmatmul.mubr.bf16.gmra.mrb[0].mxu0 %v913
      %v1026 = vpop.f32.mrb[0].mxu0
      %v1027 = vadd.f32 0.0, %v1026
      %v1028 = vpop.f32.mrb[0].mxu0
      %v1029 = vpop.f32.mrb[0].mxu0
      %v1030 = vadd.f32 0.0, %v1029
      %v1031 = vpop.f32.mrb[0].mxu0
      %1032 = vmatprep.mubr.bf16.mxu0 0
      %1033 = vmatmul.mubr.bf16.gmra.mrb[0].mxu0 %v914
      %v1034 = vpop.f32.mrb[0].mxu0
      %v1035 = vadd.f32 0.0, %v1034
      %v1036 = vpop.f32.mrb[0].mxu0
      %v1037 = vpop.f32.mrb[0].mxu0
      %v1038 = vadd.f32 0.0, %v1037
      %v1039 = vpop.f32.mrb[0].mxu0
      %1040 = vmatprep.mubr.bf16.mxu0 0
      %1041 = vmatmul.mubr.bf16.gmra.mrb[0].mxu0 %v915
      %v1042 = vpop.f32.mrb[0].mxu0
      %v1043 = vadd.f32 0.0, %v1042
      %v1044 = vpop.f32.mrb[0].mxu0
      %v1045 = vpop.f32.mrb[0].mxu0
      %v1046 = vadd.f32 0.0, %v1045
      %v1047 = vpop.f32.mrb[0].mxu0
      %1048 = vmatprep.mubr.bf16.mxu0 0
      %1049 = vmatmul.mubr.bf16.gmra.mrb[0].mxu0 %v916
      %v1050 = vpop.f32.mrb[0].mxu0
      %v1051 = vadd.f32 0.0, %v1050
      %v1052 = vpop.f32.mrb[0].mxu0
      %v1053 = vpop.f32.mrb[0].mxu0
      %v1054 = vadd.f32 0.0, %v1053
      %v1055 = vpop.f32.mrb[0].mxu0
      %1056 = vmatprep.mubr.bf16.mxu0 0
      %1057 = vmatmul.mubr.bf16.gmra.mrb[0].mxu0 %v917
      %v1058 = vpop.f32.mrb[0].mxu0
      %v1059 = vadd.f32 0.0, %v1058
      %v1060 = vpop.f32.mrb[0].mxu0
      %v1061 = vpop.f32.mrb[0].mxu0
      %v1062 = vadd.f32 0.0, %v1061
      %v1063 = vpop.f32.mrb[0].mxu0
      %1064 = vmatprep.mubr.bf16.mxu0 0
      %1065 = vmatmul.mubr.bf16.gmra.mrb[0].mxu0 %v918
      %v1066 = vpop.f32.mrb[0].mxu0
      %v1067 = vadd.f32 0.0, %v1066
      %v1068 = vpop.f32.mrb[0].mxu0
      %v1069 = vpop.f32.mrb[0].mxu0
      %v1070 = vadd.f32 0.0, %v1069
      %v1071 = vpop.f32.mrb[0].mxu0
      %1072 = vmatprep.mubr.bf16.mxu0 0
      %1073 = vmatmul.mubr.bf16.gmra.mrb[0].mxu0 %v919
      %v1074 = vpop.f32.mrb[0].mxu0
      %v1075 = vadd.f32 0.0, %v1074
      %v1076 = vpop.f32.mrb[0].mxu0
      %v1077 = vpop.f32.mrb[0].mxu0
      %v1078 = vadd.f32 0.0, %v1077
      %v1079 = vpop.f32.mrb[0].mxu0
      %1080 = vdwg.mxu0
      %v1097 = vunpack.c.l.b16 %v664
      %v1098 = vunpack.c.l.b16 %v665
      %v1099 = vunpack.c.l.b16 %v666
      %v1100 = vunpack.c.l.b16 %v667
      %v1101 = vunpack.c.l.b16 %v668
      %v1102 = vunpack.c.l.b16 %v669
      %v1103 = vunpack.c.l.b16 %v670
      %v1104 = vunpack.c.l.b16 %v671
      %v1105 = vunpack.c.l.b16 %v672
      %v1106 = vunpack.c.l.b16 %v673
      %v1107 = vunpack.c.l.b16 %v674
      %v1108 = vunpack.c.l.b16 %v675
      %v1109 = vunpack.c.l.b16 %v676
      %v1110 = vunpack.c.l.b16 %v677
      %v1111 = vunpack.c.l.b16 %v678
      %v1112 = vunpack.c.l.b16 %v679
      %v1113 = vpack.c.b16 %v1098, %v1097
      %v1114 = vpack.c.b16 %v1100, %v1099
      %v1115 = vpack.c.b16 %v1102, %v1101
      %v1116 = vpack.c.b16 %v1104, %v1103
      %v1117 = vpack.c.b16 %v1106, %v1105
      %v1118 = vpack.c.b16 %v1108, %v1107
      %v1119 = vpack.c.b16 %v1110, %v1109
      %v1120 = vpack.c.b16 %v1112, %v1111
      %1129 = vmatprep.subr.bf16.mxu0 0
      %1130 = vmatpush1.bf16.msra.mxu0 %v1113
      %1131 = vmatprep.subr.bf16.mxu0 0
      %1132 = vmatpush1.bf16.msra.mxu0 %v1114
      %1133 = vmatprep.subr.bf16.mxu0 0
      %1134 = vmatpush1.bf16.msra.mxu0 %v1115
      %1135 = vmatprep.subr.bf16.mxu0 0
      %1136 = vmatpush1.bf16.msra.mxu0 %v1116
      %1137 = vmatprep.subr.bf16.mxu0 0
      %1138 = vmatpush1.bf16.msra.mxu0 %v1117
      %1139 = vmatprep.subr.bf16.mxu0 0
      %1140 = vmatpush1.bf16.msra.mxu0 %v1118
      %1141 = vmatprep.subr.bf16.mxu0 0
      %1142 = vmatpush1.bf16.msra.mxu0 %v1119
      %1143 = vmatprep.subr.bf16.mxu0 0
      %1144 = vmatpush1.bf16.msra.mxu0 %v1120
      %1145 = vmatprep.subr.bf16.mxu0 0
      %1146 = vmatpush1.bf16.msra.mxu0 0
      %1147 = vmatprep.subr.bf16.mxu0 0
      %1148 = vmatpush1.bf16.msra.mxu0 0
      %1149 = vmatprep.subr.bf16.mxu0 0
      %1150 = vmatpush1.bf16.msra.mxu0 0
      %1151 = vmatprep.subr.bf16.mxu0 0
      %1152 = vmatpush1.bf16.msra.mxu0 0
      %1153 = vmatprep.subr.bf16.mxu0 0
      %1154 = vmatpush1.bf16.msra.mxu0 0
      %1155 = vmatprep.subr.bf16.mxu0 0
      %1156 = vmatpush1.bf16.msra.mxu0 0
      %1157 = vmatprep.subr.bf16.mxu0 0
      %1158 = vmatpush1.bf16.msra.mxu0 0
      %1159 = vmatprep.subr.bf16.mxu0 0
      %1160 = vmatpush1.bf16.msra.mxu0 0
      %1161 = vmatprep.mubr.bf16.mxu0 0
      %1162 = vmatmul.mubr.bf16.gmra.mrb[0].mxu0 %v656
      %v1163 = vpop.f32.mrb[0].mxu0
      %v1164 = vadd.f32 %v1019, %v1163
      %v1165 = vpop.f32.mrb[0].mxu0
      %v1166 = vpop.f32.mrb[0].mxu0
      %v1167 = vadd.f32 %v1022, %v1166
      %v1168 = vpop.f32.mrb[0].mxu0
      %1169 = vmatprep.mubr.bf16.mxu0 0
      %1170 = vmatmul.mubr.bf16.gmra.mrb[0].mxu0 %v657
      %v1171 = vpop.f32.mrb[0].mxu0
      %v1172 = vadd.f32 %v1027, %v1171
      %v1173 = vpop.f32.mrb[0].mxu0
      %v1174 = vpop.f32.mrb[0].mxu0
      %v1175 = vadd.f32 %v1030, %v1174
      %v1176 = vpop.f32.mrb[0].mxu0
      %1177 = vmatprep.mubr.bf16.mxu0 0
      %1178 = vmatmul.mubr.bf16.gmra.mrb[0].mxu0 %v658
      %v1179 = vpop.f32.mrb[0].mxu0
      %v1180 = vadd.f32 %v1035, %v1179
      %v1181 = vpop.f32.mrb[0].mxu0
      %v1182 = vpop.f32.mrb[0].mxu0
      %v1183 = vadd.f32 %v1038, %v1182
      %v1184 = vpop.f32.mrb[0].mxu0
      %1185 = vmatprep.mubr.bf16.mxu0 0
      %1186 = vmatmul.mubr.bf16.gmra.mrb[0].mxu0 %v659
      %v1187 = vpop.f32.mrb[0].mxu0
      %v1188 = vadd.f32 %v1043, %v1187
      %v1189 = vpop.f32.mrb[0].mxu0
      %v1190 = vpop.f32.mrb[0].mxu0
      %v1191 = vadd.f32 %v1046, %v1190
      %v1192 = vpop.f32.mrb[0].mxu0
      %1193 = vmatprep.mubr.bf16.mxu0 0
      %1194 = vmatmul.mubr.bf16.gmra.mrb[0].mxu0 %v660
      %v1195 = vpop.f32.mrb[0].mxu0
      %v1196 = vadd.f32 %v1051, %v1195
      %v1197 = vpop.f32.mrb[0].mxu0
      %v1198 = vpop.f32.mrb[0].mxu0
      %v1199 = vadd.f32 %v1054, %v1198
      %v1200 = vpop.f32.mrb[0].mxu0
      %1201 = vmatprep.mubr.bf16.mxu0 0
      %1202 = vmatmul.mubr.bf16.gmra.mrb[0].mxu0 %v661
      %v1203 = vpop.f32.mrb[0].mxu0
      %v1204 = vadd.f32 %v1059, %v1203
      %v1205 = vpop.f32.mrb[0].mxu0
      %v1206 = vpop.f32.mrb[0].mxu0
      %v1207 = vadd.f32 %v1062, %v1206
      %v1208 = vpop.f32.mrb[0].mxu0
      %1209 = vmatprep.mubr.bf16.mxu0 0
      %1210 = vmatmul.mubr.bf16.gmra.mrb[0].mxu0 %v662
      %v1211 = vpop.f32.mrb[0].mxu0
      %v1212 = vadd.f32 %v1067, %v1211
      %v1213 = vpop.f32.mrb[0].mxu0
      %v1214 = vpop.f32.mrb[0].mxu0
      %v1215 = vadd.f32 %v1070, %v1214
      %v1216 = vpop.f32.mrb[0].mxu0
      %1217 = vmatprep.mubr.bf16.mxu0 0
      %1218 = vmatmul.mubr.bf16.gmra.mrb[0].mxu0 %v663
      %v1219 = vpop.f32.mrb[0].mxu0
      %v1220 = vadd.f32 %v1075, %v1219
      %v1221 = vpop.f32.mrb[0].mxu0
      %v1222 = vpop.f32.mrb[0].mxu0
      %v1223 = vadd.f32 %v1078, %v1222
      %v1224 = vpop.f32.mrb[0].mxu0
      %1225 = vdwg.mxu0
      %v1226 = vld [vmem:[%s7] sm:$0x1]
      %v1228 = vlaneseq
      %v1229 = vshrl.u32 %v1228, 7
      %v1230 = vsub.s32 0, %v1229
      %v1231 = vrot.slane %v1226, %v1230
      %v1233 = vadd.f32 %v1164, %v1231
      %v1234 = vadd.f32 %v1167, %v1231
      %v1235 = vadd.f32 %v1172, %v1231
      %v1236 = vadd.f32 %v1175, %v1231
      %v1237 = vadd.f32 %v1180, %v1231
      %v1238 = vadd.f32 %v1183, %v1231
      %v1239 = vadd.f32 %v1188, %v1231
      %v1240 = vadd.f32 %v1191, %v1231
      %v1241 = vadd.f32 %v1196, %v1231
      %v1242 = vadd.f32 %v1199, %v1231
      %v1243 = vadd.f32 %v1204, %v1231
      %v1244 = vadd.f32 %v1207, %v1231
      %v1245 = vadd.f32 %v1212, %v1231
      %v1246 = vadd.f32 %v1215, %v1231
      %v1247 = vadd.f32 %v1220, %v1231
      %v1248 = vadd.f32 %v1223, %v1231
      %1249 = vst [vmem:[%s332] sm:$0xff] %v1233
      %1250 = vst [vmem:[%s332 + $0x8] sm:$0xff] %v1234
      %1251 = vst [vmem:[%s332 + $0x10] sm:$0xff] %v1235
      %1252 = vst [vmem:[%s332 + $0x18] sm:$0xff] %v1236
      %1253 = vst [vmem:[%s332 + $0x20] sm:$0xff] %v1237
      %1254 = vst [vmem:[%s332 + $0x28] sm:$0xff] %v1238
      %1255 = vst [vmem:[%s332 + $0x30] sm:$0xff] %v1239
      %1256 = vst [vmem:[%s332 + $0x38] sm:$0xff] %v1240
      %1257 = vst [vmem:[%s332 + $0x40] sm:$0xff] %v1241
      %1258 = vst [vmem:[%s332 + $0x48] sm:$0xff] %v1242
      %1259 = vst [vmem:[%s332 + $0x50] sm:$0xff] %v1243
      %1260 = vst [vmem:[%s332 + $0x58] sm:$0xff] %v1244
      %1261 = vst [vmem:[%s332 + $0x60] sm:$0xff] %v1245
      %1262 = vst [vmem:[%s332 + $0x68] sm:$0xff] %v1246
      %1263 = vst [vmem:[%s332 + $0x70] sm:$0xff] %v1247
      %1264 = vst [vmem:[%s332 + $0x78] sm:$0xff] %v1248
      %s1265 = smul.u32 16, %s19
      %p1266 = scmp.lt.s32.totalorder %s1265, 63
      %s1267 = scalar_select %p1266, %s1265, 63
      %s1268 = smul.addr %s1267, 8
      %s1269 = scalar_lea.vmem %s8, %s1268
      // Predicated region
      $region53: #{custom_gcn_forward.9} parent=51 // pred_check
        %p1270 = pneg %p215
      $region54: #{custom_gcn_forward.9} parent=51 // pred_check_branch
        %1272 = sbr.rel (%p1270) target = $region56
      $region55: #{custom_gcn_forward.9} parent=51 // pred_region
        %s1273 = smul.u32 16, %s19
      $region56: #{custom_gcn_forward.9} parent=51 // pred_fallthru
        _
    $region52: #{custom_gcn_forward.9} parent=5 // pred_fallthru
      _
    %p1274 = scmp.le.s32.totalorder 2, %s14
    // Predicated region
    $region57: #{custom_gcn_forward.9} parent=5 // pred_check
      %p1275 = pneg %p1274
    $region58: #{custom_gcn_forward.9} parent=5 // pred_check_branch
      %1277 = sbr.rel (%p1275) target = $region60
    $region59: #{custom_gcn_forward.9} parent=5 // pred_region
      %s1278 = ssub.s32 %s14, 2
      // Predicated region
      $region61: #{custom_gcn_forward.9} parent=59 // pred_check
        %p1279 = pneg %p221
      $region62: #{custom_gcn_forward.9} parent=59 // pred_check_branch
        %1281 = sbr.rel (%p1279) target = $region64
      $region63: #{custom_gcn_forward.9} parent=59 // pred_region
        %s1282 = smul.u32 16, %s20
        %p1283 = scmp.lt.s32.totalorder %s1282, 63
        %s1284 = scalar_select %p1283, %s1282, 63
        %s1285 = smul.addr %s1284, 8
        %s1286 = scalar_lea.vmem %s8, %s1285
      $region64: #{custom_gcn_forward.9} parent=59 // pred_fallthru
        _
    $region60: #{custom_gcn_forward.9} parent=5 // pred_fallthru
      _
  $region6: #{custom_gcn_forward.9} parent=0 // loop_footer
    %s18 = sadd.s32 1, %s14
  $region7: #{custom_gcn_forward.9} parent=0 // loop_footer_branch
    %13 = sbr.rel target = $region3
  $region8: #{custom_gcn_forward.9} parent=0 // loop_exit
    _

</llo_original>
